<compile_context>
chip_gen: v7x
topology: tpu7x:2x2x1
jax: 0.10.0
libtpu: 0.0.40
codegen_flags: <defaults>
</compile_context>

<pallas_src>
import functools

import jax
import jax.numpy as jnp
from jax.experimental import pallas as pl
from jax.experimental.pallas import tpu as pltpu


# ------------------------------ static geometry ------------------------------ #
KH = KW = 7                 # conv kernel
STRIDE = 2
C_IN = 1
C_OUT = 4                   # conv output channels
OUT_H, OUT_W = 57, 61       # hard-coded by Linear(4*57*61, out_features)
K = KH * KW                 # 49 patch elements
S = OUT_H * OUT_W           # 3477 conv output positions per channel


def _round_up(x, m):
    return (x + m - 1) // m * m


K_PAD = _round_up(K + 1, 64)   # 64  (+1 row of ones folds the conv bias into the matmul)
S_PAD = _round_up(S, 128)      # 3584 (lane-aligned)
C_PAD = 8                      # conv channels padded to one sublane tile


# ------------------------------- Pallas kernel ------------------------------- #
def _convnet_kernel(pT_ref, w1_ref, w2_ref, b2_ref, q_ref, act_ref, *, batch):
    """conv-as-matmul + ReLU staging + batched per-channel FC, fully VMEM resident.

    pT_ref : (batch, K_PAD, S_PAD)  bf16  im2col patches (row K holds ones -> conv bias)
    w1_ref : (C_PAD, K_PAD)         bf16  conv weights (+ bias column at index K)
    w2_ref : (C_OUT*OUT_SUB, S_PAD) bf16  FC weights, outputs on sublanes (row c*OUT_SUB+o)
    b2_ref : (1, OUT_SUB)           f32   FC bias
    q_ref  : (B_pad, OUT_SUB)       f32   logits (pad rows/cols sliced away by the caller)
    act_ref: (C_OUT*B_pad, S_PAD)   f32   scratch: ReLU'd conv rows, row index = c*B_pad + b
    """
    b_pad, out_sub = q_ref.shape
    w1 = w1_ref[...]                                   # hoisted, loaded once

    # ---- conv phase: one MXU matmul per batch item, rows staged into VMEM scratch ----
    for b in range(batch):                             # static unroll, batch is tiny
        # (C_PAD, K_PAD) @ (K_PAD, S_PAD) -> (C_PAD, S_PAD), f32 accumulate on the MXU
        g = jnp.dot(w1, pT_ref[b], preferred_element_type=jnp.float32)
        g = jnp.maximum(g, 0.0)                        # ReLU (conv bias already folded in)
        for c in range(C_OUT):
            # stage channel c of batch b so the FC can batch over the whole B_pad M-dim
            act_ref[pl.ds(c * b_pad + b, 1), :] = g[c:c + 1, :]
        # rows b >= batch of each channel block stay uninitialized; they only feed the
        # padded output rows that the caller slices away.

    # ---- FC phase: ONE (B_pad, S_PAD) . (OUT_SUB, S_PAD)^T dot per conv channel ----
    acc = None
    for c in range(C_OUT):                             # flatten order (c, oh, ow) == torch
        a = act_ref[pl.ds(c * b_pad, b_pad), :].astype(jnp.bfloat16)   # (B_pad, S_PAD)
        w = w2_ref[pl.ds(c * out_sub, out_sub), :]                     # (OUT_SUB, S_PAD)
        part = jax.lax.dot_general(a, w, (((1,), (1,)), ((), ())),     # contract lanes
                                   preferred_element_type=jnp.float32)  # (B_pad, OUT_SUB)
        acc = part if acc is None else acc + part
    q_ref[...] = acc + b2_ref[...]                     # bias loaded once, single store


# ------------------------------ jitted forward ------------------------------- #
def _im2col_T(x):
    """(B, 1, H, W) f32 -> (B, K_PAD, S_PAD) bf16 patches, kernel-position major,
    with a row of ones at index K so the conv bias folds into the matmul."""
    B = x.shape[0]
    xs = x[:, 0, :, :]
    cols = []
    for kh in range(KH):
        for kw in range(KW):
            sl = xs[:, kh:kh + STRIDE * (OUT_H - 1) + 1:STRIDE,
                       kw:kw + STRIDE * (OUT_W - 1) + 1:STRIDE]   # (B, 57, 61)
            cols.append(sl.reshape(B, S))
    p = jnp.stack(cols, axis=1)                                   # (B, 49, 3477)
    ones = jnp.ones((B, 1, S), p.dtype)
    p = jnp.concatenate([p, ones], axis=1)                        # (B, 50, 3477)
    p = jnp.pad(p, ((0, 0), (0, K_PAD - K - 1), (0, S_PAD - S)))  # (B, 64, 3584)
    return p.astype(jnp.bfloat16)


@functools.partial(jax.jit, static_argnums=(2,))
def modelnet_forward(packed, x, out_features):
    """Full ModelNet forward: conv -> relu -> flatten -> linear, one Pallas call."""
    w1, w2, b2 = packed
    B = x.shape[0]
    pT = _im2col_T(x.astype(jnp.float32))
    b_pad = _round_up(max(B, 1), 8)
    out_sub = b2.shape[1]
    q_pad = pl.pallas_call(
        functools.partial(_convnet_kernel, batch=B),
        out_shape=jax.ShapeDtypeStruct((b_pad, out_sub), jnp.float32),
        in_specs=[pl.BlockSpec(memory_space=pltpu.MemorySpace.VMEM)] * 4,
        out_specs=pl.BlockSpec(memory_space=pltpu.MemorySpace.VMEM),
        scratch_shapes=[pltpu.VMEM((C_OUT * b_pad, S_PAD), jnp.float32)],
    )(pT, w1, w2, b2)
    return q_pad[:B, :out_features]


# --------------------------- params: init + packing -------------------------- #
def init_modelnet_params(key, out_features=7):
    """Torch-default-style uniform init (bounds = 1/sqrt(fan_in))."""
    k1, k2, k3, k4 = jax.random.split(key, 4)
    b_conv = 1.0 / (C_IN * KH * KW) ** 0.5
    conv_w = jax.random.uniform(k1, (C_OUT, C_IN, KH, KW), jnp.float32, -b_conv, b_conv)
    conv_b = jax.random.uniform(k2, (C_OUT,), jnp.float32, -b_conv, b_conv)
    fan_in = C_OUT * S
    b_fc = 1.0 / fan_in ** 0.5
    fc_w = jax.random.uniform(k3, (out_features, fan_in), jnp.float32, -b_fc, b_fc)
    fc_b = jax.random.uniform(k4, (out_features,), jnp.float32, -b_fc, b_fc)
    return conv_w, conv_b, fc_w, fc_b


def pack_params(conv_w, conv_b, fc_w, fc_b):
    """One-time repack/pad of torch-layout params into kernel layouts."""
    out_features = fc_w.shape[0]
    out_sub = _round_up(max(out_features, 1), 8)       # outputs padded to one sublane tile
    w1 = jnp.zeros((C_PAD, K_PAD), jnp.float32)
    w1 = w1.at[:C_OUT, :K].set(conv_w.reshape(C_OUT, K))
    w1 = w1.at[:C_OUT, K].set(conv_b)                  # pairs with the ones row in patches
    # FC weight with outputs on sublanes: row c*out_sub + o, col s  <-  fc_w[o, c*S + s]
    w2 = jnp.zeros((C_OUT, out_sub, S_PAD), jnp.float32)
    w2 = w2.at[:, :out_features, :S].set(
        fc_w.reshape(out_features, C_OUT, S).transpose(1, 0, 2))
    w2 = w2.reshape(C_OUT * out_sub, S_PAD)            # dense ~224 KiB in HBM and VMEM
    b2 = jnp.zeros((1, out_sub), jnp.float32).at[0, :out_features].set(fc_b)
    return (w1.astype(jnp.bfloat16), w2.astype(jnp.bfloat16), b2)


class ModelNetPallas:
    """ModelNet forward pass backed by a single Pallas TPU kernel."""

    def __init__(self, key, out_features=7):
        self.out_features = out_features
        self.raw_params = init_modelnet_params(key, out_features)
        # All padding / layout repacking done once here.
        self.packed = pack_params(*self.raw_params)

    def __call__(self, x):
        B, cin, H, W = x.shape
        assert cin == C_IN
        assert (H - KH) // STRIDE + 1 == OUT_H and (W - KW) // STRIDE + 1 == OUT_W, \
            "ModelNet's Linear layer hard-codes a 57x61 conv output"
        return modelnet_forward(self.packed, x, self.out_features)


# ------------------------------ f32 reference -------------------------------- #
@jax.jit
def reference_forward(conv_w, conv_b, fc_w, fc_b, x):
    y = jax.lax.conv_general_dilated(
        x, conv_w, window_strides=(STRIDE, STRIDE), padding="VALID",
        dimension_numbers=("NCHW", "OIHW", "NCHW"))
    y = jnp.maximum(y + conv_b.reshape(1, -1, 1, 1), 0.0)
    return y.reshape(x.shape[0], -1) @ fc_w.T + fc_b


# ----------------------------------- main ------------------------------------ #
if __name__ == "__main__":
    key = jax.random.PRNGKey(0)
    k_params, k_x = jax.random.split(key)

    # Smallest shapes the module admits: batch=2, spatial 119x127 so that the conv
    # (kernel 7, stride 2) yields exactly the 4*57*61 features Linear expects.
    batch, H, W = 2, 119, 127
    x = jax.random.normal(k_x, (batch, C_IN, H, W), jnp.float32)

    model = ModelNetPallas(k_params, out_features=7)
    q = jax.block_until_ready(model(x))
    assert q.shape == (batch, 7)

    q_ref = jax.block_until_ready(reference_forward(*model.raw_params, x))
    assert jnp.allclose(q, q_ref, rtol=5e-2, atol=2e-2), (q, q_ref)

    print("KERNEL_OK")
</pallas_src>

<mosaic_0001>
module attributes {stable_mosaic.version = 11 : i64} {
  func.func @_convnet_kernel(%arg0: memref<2x64x3584xbf16, #tpu.memory_space<vmem>>, %arg1: memref<8x64xbf16, #tpu.memory_space<vmem>>, %arg2: memref<32x3584xbf16, #tpu.memory_space<vmem>>, %arg3: memref<1x8xf32, #tpu.memory_space<vmem>>, %arg4: memref<8x8xf32, #tpu.memory_space<vmem>>, %arg5: memref<32x3584xf32, #tpu.memory_space<vmem>>) attributes {dimension_semantics = [], scalar_prefetch = 0 : i64, scratch_operands = 1 : i64, tpu.core_type = #tpu.core_type<tc>} {
    %c0 = arith.constant 0 : index
    %c0_0 = arith.constant 0 : index
    %0 = vector.load %arg1[%c0, %c0_0] : memref<8x64xbf16, #tpu.memory_space<vmem>>, vector<8x64xbf16>
    %c0_1 = arith.constant 0 : index
    %c0_2 = arith.constant 0 : index
    %c0_3 = arith.constant 0 : index
    %1 = vector.load %arg0[%c0_1, %c0_2, %c0_3] : memref<2x64x3584xbf16, #tpu.memory_space<vmem>>, vector<1x64x3584xbf16>
    %2 = vector.shape_cast %1 : vector<1x64x3584xbf16> to vector<64x3584xbf16>
    %cst = arith.constant dense<0.000000e+00> : vector<8x3584xf32>
    %3 = tpu.matmul %0, %2, %cst {dimension_numbers = #tpu.dot_dimension_numbers<[1], [0], [0], [1], [0, 0, 1, 1], [], []>} : vector<8x64xbf16>, vector<64x3584xbf16>, vector<8x3584xf32> -> vector<8x3584xf32>
    %cst_4 = arith.constant 0.000000e+00 : f32
    %4 = vector.broadcast %cst_4 : f32 to vector<8x3584xf32>
    %5 = arith.maximumf %3, %4 : vector<8x3584xf32>
    %6 = vector.extract_strided_slice %5 {offsets = [0, 0], sizes = [1, 3584], strides = [1, 1]} : vector<8x3584xf32> to vector<1x3584xf32>
    %c0_5 = arith.constant 0 : index
    %c0_6 = arith.constant 0 : index
    %7 = vector.load %arg5[%c0_5, %c0_6] : memref<32x3584xf32, #tpu.memory_space<vmem>>, vector<1x3584xf32>
    tpu.vector_store %arg5[%c0_5, %c0_6], %6 {strides = array<i32>} : memref<32x3584xf32, #tpu.memory_space<vmem>>, vector<1x3584xf32>,
    %8 = vector.extract_strided_slice %5 {offsets = [1, 0], sizes = [1, 3584], strides = [1, 1]} : vector<8x3584xf32> to vector<1x3584xf32>
    %c8 = arith.constant 8 : index
    %c0_7 = arith.constant 0 : index
    %9 = vector.load %arg5[%c8, %c0_7] : memref<32x3584xf32, #tpu.memory_space<vmem>>, vector<1x3584xf32>
    tpu.vector_store %arg5[%c8, %c0_7], %8 {strides = array<i32>} : memref<32x3584xf32, #tpu.memory_space<vmem>>, vector<1x3584xf32>,
    %10 = vector.extract_strided_slice %5 {offsets = [2, 0], sizes = [1, 3584], strides = [1, 1]} : vector<8x3584xf32> to vector<1x3584xf32>
    %c16 = arith.constant 16 : index
    %c0_8 = arith.constant 0 : index
    %11 = vector.load %arg5[%c16, %c0_8] : memref<32x3584xf32, #tpu.memory_space<vmem>>, vector<1x3584xf32>
    tpu.vector_store %arg5[%c16, %c0_8], %10 {strides = array<i32>} : memref<32x3584xf32, #tpu.memory_space<vmem>>, vector<1x3584xf32>,
    %12 = vector.extract_strided_slice %5 {offsets = [3, 0], sizes = [1, 3584], strides = [1, 1]} : vector<8x3584xf32> to vector<1x3584xf32>
    %c24 = arith.constant 24 : index
    %c0_9 = arith.constant 0 : index
    %13 = vector.load %arg5[%c24, %c0_9] : memref<32x3584xf32, #tpu.memory_space<vmem>>, vector<1x3584xf32>
    tpu.vector_store %arg5[%c24, %c0_9], %12 {strides = array<i32>} : memref<32x3584xf32, #tpu.memory_space<vmem>>, vector<1x3584xf32>,
    %c1 = arith.constant 1 : index
    %c0_10 = arith.constant 0 : index
    %c0_11 = arith.constant 0 : index
    %14 = vector.load %arg0[%c1, %c0_10, %c0_11] : memref<2x64x3584xbf16, #tpu.memory_space<vmem>>, vector<1x64x3584xbf16>
    %15 = vector.shape_cast %14 : vector<1x64x3584xbf16> to vector<64x3584xbf16>
    %cst_12 = arith.constant dense<0.000000e+00> : vector<8x3584xf32>
    %16 = tpu.matmul %0, %15, %cst_12 {dimension_numbers = #tpu.dot_dimension_numbers<[1], [0], [0], [1], [0, 0, 1, 1], [], []>} : vector<8x64xbf16>, vector<64x3584xbf16>, vector<8x3584xf32> -> vector<8x3584xf32>
    %cst_13 = arith.constant 0.000000e+00 : f32
    %17 = vector.broadcast %cst_13 : f32 to vector<8x3584xf32>
    %18 = arith.maximumf %16, %17 : vector<8x3584xf32>
    %19 = vector.extract_strided_slice %18 {offsets = [0, 0], sizes = [1, 3584], strides = [1, 1]} : vector<8x3584xf32> to vector<1x3584xf32>
    %c1_14 = arith.constant 1 : index
    %c0_15 = arith.constant 0 : index
    %20 = vector.load %arg5[%c1_14, %c0_15] : memref<32x3584xf32, #tpu.memory_space<vmem>>, vector<1x3584xf32>
    tpu.vector_store %arg5[%c1_14, %c0_15], %19 {strides = array<i32>} : memref<32x3584xf32, #tpu.memory_space<vmem>>, vector<1x3584xf32>,
    %21 = vector.extract_strided_slice %18 {offsets = [1, 0], sizes = [1, 3584], strides = [1, 1]} : vector<8x3584xf32> to vector<1x3584xf32>
    %c9 = arith.constant 9 : index
    %c0_16 = arith.constant 0 : index
    %22 = vector.load %arg5[%c9, %c0_16] : memref<32x3584xf32, #tpu.memory_space<vmem>>, vector<1x3584xf32>
    tpu.vector_store %arg5[%c9, %c0_16], %21 {strides = array<i32>} : memref<32x3584xf32, #tpu.memory_space<vmem>>, vector<1x3584xf32>,
    %23 = vector.extract_strided_slice %18 {offsets = [2, 0], sizes = [1, 3584], strides = [1, 1]} : vector<8x3584xf32> to vector<1x3584xf32>
    %c17 = arith.constant 17 : index
    %c0_17 = arith.constant 0 : index
    %24 = vector.load %arg5[%c17, %c0_17] : memref<32x3584xf32, #tpu.memory_space<vmem>>, vector<1x3584xf32>
    tpu.vector_store %arg5[%c17, %c0_17], %23 {strides = array<i32>} : memref<32x3584xf32, #tpu.memory_space<vmem>>, vector<1x3584xf32>,
    %25 = vector.extract_strided_slice %18 {offsets = [3, 0], sizes = [1, 3584], strides = [1, 1]} : vector<8x3584xf32> to vector<1x3584xf32>
    %c25 = arith.constant 25 : index
    %c0_18 = arith.constant 0 : index
    %26 = vector.load %arg5[%c25, %c0_18] : memref<32x3584xf32, #tpu.memory_space<vmem>>, vector<1x3584xf32>
    tpu.vector_store %arg5[%c25, %c0_18], %25 {strides = array<i32>} : memref<32x3584xf32, #tpu.memory_space<vmem>>, vector<1x3584xf32>,
    %c0_19 = arith.constant 0 : index
    %c0_20 = arith.constant 0 : index
    %27 = vector.load %arg5[%c0_19, %c0_20] : memref<32x3584xf32, #tpu.memory_space<vmem>>, vector<8x3584xf32>
    %28 = arith.truncf %27 : vector<8x3584xf32> to vector<8x3584xbf16>
    %c0_21 = arith.constant 0 : index
    %c0_22 = arith.constant 0 : index
    %29 = vector.load %arg2[%c0_21, %c0_22] : memref<32x3584xbf16, #tpu.memory_space<vmem>>, vector<8x3584xbf16>
    %cst_23 = arith.constant dense<0.000000e+00> : vector<8x8xf32>
    %30 = tpu.matmul %28, %29, %cst_23 {dimension_numbers = #tpu.dot_dimension_numbers<[1], [1], [0], [0], [0, 0, 1, 0], [], []>} : vector<8x3584xbf16>, vector<8x3584xbf16>, vector<8x8xf32> -> vector<8x8xf32>
    %c8_24 = arith.constant 8 : index
    %c0_25 = arith.constant 0 : index
    %31 = vector.load %arg5[%c8_24, %c0_25] : memref<32x3584xf32, #tpu.memory_space<vmem>>, vector<8x3584xf32>
    %32 = arith.truncf %31 : vector<8x3584xf32> to vector<8x3584xbf16>
    %c8_26 = arith.constant 8 : index
    %c0_27 = arith.constant 0 : index
    %33 = vector.load %arg2[%c8_26, %c0_27] : memref<32x3584xbf16, #tpu.memory_space<vmem>>, vector<8x3584xbf16>
    %cst_28 = arith.constant dense<0.000000e+00> : vector<8x8xf32>
    %34 = tpu.matmul %32, %33, %cst_28 {dimension_numbers = #tpu.dot_dimension_numbers<[1], [1], [0], [0], [0, 0, 1, 0], [], []>} : vector<8x3584xbf16>, vector<8x3584xbf16>, vector<8x8xf32> -> vector<8x8xf32>
    %35 = arith.addf %30, %34 : vector<8x8xf32>
    %c16_29 = arith.constant 16 : index
    %c0_30 = arith.constant 0 : index
    %36 = vector.load %arg5[%c16_29, %c0_30] : memref<32x3584xf32, #tpu.memory_space<vmem>>, vector<8x3584xf32>
    %37 = arith.truncf %36 : vector<8x3584xf32> to vector<8x3584xbf16>
    %c16_31 = arith.constant 16 : index
    %c0_32 = arith.constant 0 : index
    %38 = vector.load %arg2[%c16_31, %c0_32] : memref<32x3584xbf16, #tpu.memory_space<vmem>>, vector<8x3584xbf16>
    %cst_33 = arith.constant dense<0.000000e+00> : vector<8x8xf32>
    %39 = tpu.matmul %37, %38, %cst_33 {dimension_numbers = #tpu.dot_dimension_numbers<[1], [1], [0], [0], [0, 0, 1, 0], [], []>} : vector<8x3584xbf16>, vector<8x3584xbf16>, vector<8x8xf32> -> vector<8x8xf32>
    %40 = arith.addf %35, %39 : vector<8x8xf32>
    %c24_34 = arith.constant 24 : index
    %c0_35 = arith.constant 0 : index
    %41 = vector.load %arg5[%c24_34, %c0_35] : memref<32x3584xf32, #tpu.memory_space<vmem>>, vector<8x3584xf32>
    %42 = arith.truncf %41 : vector<8x3584xf32> to vector<8x3584xbf16>
    %c24_36 = arith.constant 24 : index
    %c0_37 = arith.constant 0 : index
    %43 = vector.load %arg2[%c24_36, %c0_37] : memref<32x3584xbf16, #tpu.memory_space<vmem>>, vector<8x3584xbf16>
    %cst_38 = arith.constant dense<0.000000e+00> : vector<8x8xf32>
    %44 = tpu.matmul %42, %43, %cst_38 {dimension_numbers = #tpu.dot_dimension_numbers<[1], [1], [0], [0], [0, 0, 1, 0], [], []>} : vector<8x3584xbf16>, vector<8x3584xbf16>, vector<8x8xf32> -> vector<8x8xf32>
    %45 = arith.addf %40, %44 : vector<8x8xf32>
    %c0_39 = arith.constant 0 : index
    %c0_40 = arith.constant 0 : index
    %46 = vector.load %arg3[%c0_39, %c0_40] : memref<1x8xf32, #tpu.memory_space<vmem>>, vector<1x8xf32>
    %47 = vector.broadcast %46 : vector<1x8xf32> to vector<8x8xf32>
    %48 = arith.addf %45, %47 : vector<8x8xf32>
    %c0_41 = arith.constant 0 : index
    %c0_42 = arith.constant 0 : index
    %49 = vector.load %arg4[%c0_41, %c0_42] : memref<8x8xf32, #tpu.memory_space<vmem>>, vector<8x8xf32>
    tpu.vector_store %arg4[%c0_41, %c0_42], %48 {strides = array<i32>} : memref<8x8xf32, #tpu.memory_space<vmem>>, vector<8x8xf32>,
    return
  }
}

</mosaic_0001>

<llo_original>
// kernel: modelnet_forward.1
$region0: #{modelnet_forward.1}
  #allocation0 [shape = 'u32[]', space=smem, size = 0x4, offset = 0x4, fixed_abs, tag = 'smem constant byte address 0x4 - core index']
  #allocation1 [shape = 'u32[144,128]{1,0:T(1,128)}', space=vmem, size = 0x12000, scoped, tag = 'internal scratch']
  #allocation2 [shape = 'f32[32,3584]{1,0:T(8,128)}', space=vmem, size = 0x70000, scoped, tag = 'scratch operand']
  %s0 = inlined_call_operand.vmem [shape: bf16[2,64,3584], index: 0, kind: input, shape index: {}]
  %s1 = inlined_call_operand.vmem [shape: bf16[8,64], index: 1, kind: input, shape index: {}]
  %s2 = inlined_call_operand.vmem [shape: bf16[32,3584], index: 2, kind: input, shape index: {}]
  %s3 = inlined_call_operand.vmem [shape: f32[1,8], index: 3, kind: input, shape index: {}]
  %s4 = inlined_call_operand.vmem [shape: f32[8,8], index: 4, kind: output, shape index: {}]
  %s5 = sld [smem:[#allocation0]]
  $region26: #{modelnet_forward.1} parent=0
    _
  %s7 = ssub.s32 1, %s5
  %s8 = scalar_select 0, %s7, %s5
  // Predicated region
  $region2: #{modelnet_forward.1} parent=0 // pred_check
    _
  $region3: #{modelnet_forward.1} parent=0 // pred_check_branch
    %10 = sbr.rel (0) target = $region5
  $region4: #{modelnet_forward.1} parent=0 // pred_region
    _
  $region5: #{modelnet_forward.1} parent=0 // pred_fallthru
    _
  // Predicated region
  $region6: #{modelnet_forward.1} parent=0 // pred_check
    _
  $region7: #{modelnet_forward.1} parent=0 // pred_check_branch
    %12 = sbr.rel (0) target = $region9
  $region8: #{modelnet_forward.1} parent=0 // pred_region
    _
  $region9: #{modelnet_forward.1} parent=0 // pred_fallthru
    _
  // Predicated region
  $region10: #{modelnet_forward.1} parent=0 // pred_check
    _
  $region11: #{modelnet_forward.1} parent=0 // pred_check_branch
    %14 = sbr.rel (0) target = $region13
  $region12: #{modelnet_forward.1} parent=0 // pred_region
    _
  $region13: #{modelnet_forward.1} parent=0 // pred_fallthru
    _
  // Predicated region
  $region14: #{modelnet_forward.1} parent=0 // pred_check
    _
  $region15: #{modelnet_forward.1} parent=0 // pred_check_branch
    %16 = sbr.rel (0) target = $region17
  $region16: #{modelnet_forward.1} parent=0 // pred_region
    _
  $region17: #{modelnet_forward.1} parent=0 // pred_fallthru
    _
  %v18 = vld [vmem:[%s1] sm:$0xf]
  %v19 = vld [vmem:[%s0] sm:$0xff]
  %v20 = vld [vmem:[%s0 + $0x8] sm:$0xff]
  %v21 = vld [vmem:[%s0 + $0x10] sm:$0xff]
  %v22 = vld [vmem:[%s0 + $0x18] sm:$0xff]
  %v23 = vld [vmem:[%s0 + $0x20] sm:$0xff]
  %v24 = vld [vmem:[%s0 + $0x28] sm:$0xff]
  %v25 = vld [vmem:[%s0 + $0x30] sm:$0xff]
  %v26 = vld [vmem:[%s0 + $0x38] sm:$0xff]
  %v27 = vld [vmem:[%s0 + $0x40] sm:$0xff]
  %v28 = vld [vmem:[%s0 + $0x48] sm:$0xff]
  %v29 = vld [vmem:[%s0 + $0x50] sm:$0xff]
  %v30 = vld [vmem:[%s0 + $0x58] sm:$0xff]
  %v31 = vld [vmem:[%s0 + $0x60] sm:$0xff]
  %v32 = vld [vmem:[%s0 + $0x68] sm:$0xff]
  %v33 = vld [vmem:[%s0 + $0x70] sm:$0xff]
  %v34 = vld [vmem:[%s0 + $0x78] sm:$0xff]
  %v35 = vld [vmem:[%s0 + $0x80] sm:$0xff]
  %v36 = vld [vmem:[%s0 + $0x88] sm:$0xff]
  %v37 = vld [vmem:[%s0 + $0x90] sm:$0xff]
  %v38 = vld [vmem:[%s0 + $0x98] sm:$0xff]
  %v39 = vld [vmem:[%s0 + $0xa0] sm:$0xff]
  %v40 = vld [vmem:[%s0 + $0xa8] sm:$0xff]
  %v41 = vld [vmem:[%s0 + $0xb0] sm:$0xff]
  %v42 = vld [vmem:[%s0 + $0xb8] sm:$0xff]
  %v43 = vld [vmem:[%s0 + $0xc0] sm:$0xff]
  %v44 = vld [vmem:[%s0 + $0xc8] sm:$0xff]
  %v45 = vld [vmem:[%s0 + $0xd0] sm:$0xff]
  %v46 = vld [vmem:[%s0 + $0xd8] sm:$0xff]
  %v47 = vld [vmem:[%s0 + $0xe0] sm:$0xff]
  %v48 = vld [vmem:[%s0 + $0xe8] sm:$0xff]
  %v49 = vld [vmem:[%s0 + $0xf0] sm:$0xff]
  %v50 = vld [vmem:[%s0 + $0xf8] sm:$0xff]
  %v51 = vld [vmem:[%s0 + $0x100] sm:$0xff]
  %v52 = vld [vmem:[%s0 + $0x108] sm:$0xff]
  %v53 = vld [vmem:[%s0 + $0x110] sm:$0xff]
  %v54 = vld [vmem:[%s0 + $0x118] sm:$0xff]
  %v55 = vld [vmem:[%s0 + $0x120] sm:$0xff]
  %v56 = vld [vmem:[%s0 + $0x128] sm:$0xff]
  %v57 = vld [vmem:[%s0 + $0x130] sm:$0xff]
  %v58 = vld [vmem:[%s0 + $0x138] sm:$0xff]
  %v59 = vld [vmem:[%s0 + $0x140] sm:$0xff]
  %v60 = vld [vmem:[%s0 + $0x148] sm:$0xff]
  %v61 = vld [vmem:[%s0 + $0x150] sm:$0xff]
  %v62 = vld [vmem:[%s0 + $0x158] sm:$0xff]
  %v63 = vld [vmem:[%s0 + $0x160] sm:$0xff]
  %v64 = vld [vmem:[%s0 + $0x168] sm:$0xff]
  %v65 = vld [vmem:[%s0 + $0x170] sm:$0xff]
  %v66 = vld [vmem:[%s0 + $0x178] sm:$0xff]
  %v67 = vld [vmem:[%s0 + $0x180] sm:$0xff]
  %v68 = vld [vmem:[%s0 + $0x188] sm:$0xff]
  %v69 = vld [vmem:[%s0 + $0x190] sm:$0xff]
  %v70 = vld [vmem:[%s0 + $0x198] sm:$0xff]
  %v71 = vld [vmem:[%s0 + $0x1a0] sm:$0xff]
  %v72 = vld [vmem:[%s0 + $0x1a8] sm:$0xff]
  %v73 = vld [vmem:[%s0 + $0x1b0] sm:$0xff]
  %v74 = vld [vmem:[%s0 + $0x1b8] sm:$0xff]
  %v75 = vld [vmem:[%s0 + $0x1c0] sm:$0xff]
  %v76 = vld [vmem:[%s0 + $0x1c8] sm:$0xff]
  %v77 = vld [vmem:[%s0 + $0x1d0] sm:$0xff]
  %v78 = vld [vmem:[%s0 + $0x1d8] sm:$0xff]
  %v79 = vld [vmem:[%s0 + $0x1e0] sm:$0xff]
  %v80 = vld [vmem:[%s0 + $0x1e8] sm:$0xff]
  %v81 = vld [vmem:[%s0 + $0x1f0] sm:$0xff]
  %v82 = vld [vmem:[%s0 + $0x1f8] sm:$0xff]
  %v83 = vld [vmem:[%s0 + $0x200] sm:$0xff]
  %v84 = vld [vmem:[%s0 + $0x208] sm:$0xff]
  %v85 = vld [vmem:[%s0 + $0x210] sm:$0xff]
  %v86 = vld [vmem:[%s0 + $0x218] sm:$0xff]
  %v87 = vld [vmem:[%s0 + $0x220] sm:$0xff]
  %v88 = vld [vmem:[%s0 + $0x228] sm:$0xff]
  %v89 = vld [vmem:[%s0 + $0x230] sm:$0xff]
  %v90 = vld [vmem:[%s0 + $0x238] sm:$0xff]
  %v91 = vld [vmem:[%s0 + $0x240] sm:$0xff]
  %v92 = vld [vmem:[%s0 + $0x248] sm:$0xff]
  %v93 = vld [vmem:[%s0 + $0x250] sm:$0xff]
  %v94 = vld [vmem:[%s0 + $0x258] sm:$0xff]
  %v95 = vld [vmem:[%s0 + $0x260] sm:$0xff]
  %v96 = vld [vmem:[%s0 + $0x268] sm:$0xff]
  %v97 = vld [vmem:[%s0 + $0x270] sm:$0xff]
  %v98 = vld [vmem:[%s0 + $0x278] sm:$0xff]
  %v99 = vld [vmem:[%s0 + $0x280] sm:$0xff]
  %v100 = vld [vmem:[%s0 + $0x288] sm:$0xff]
  %v101 = vld [vmem:[%s0 + $0x290] sm:$0xff]
  %v102 = vld [vmem:[%s0 + $0x298] sm:$0xff]
  %v103 = vld [vmem:[%s0 + $0x2a0] sm:$0xff]
  %v104 = vld [vmem:[%s0 + $0x2a8] sm:$0xff]
  %v105 = vld [vmem:[%s0 + $0x2b0] sm:$0xff]
  %v106 = vld [vmem:[%s0 + $0x2b8] sm:$0xff]
  %v107 = vld [vmem:[%s0 + $0x2c0] sm:$0xff]
  %v108 = vld [vmem:[%s0 + $0x2c8] sm:$0xff]
  %v109 = vld [vmem:[%s0 + $0x2d0] sm:$0xff]
  %v110 = vld [vmem:[%s0 + $0x2d8] sm:$0xff]
  %v111 = vld [vmem:[%s0 + $0x2e0] sm:$0xff]
  %v112 = vld [vmem:[%s0 + $0x2e8] sm:$0xff]
  %v113 = vld [vmem:[%s0 + $0x2f0] sm:$0xff]
  %v114 = vld [vmem:[%s0 + $0x2f8] sm:$0xff]
  %v115 = vld [vmem:[%s0 + $0x300] sm:$0xff]
  %v116 = vld [vmem:[%s0 + $0x308] sm:$0xff]
  %v117 = vld [vmem:[%s0 + $0x310] sm:$0xff]
  %v118 = vld [vmem:[%s0 + $0x318] sm:$0xff]
  %v119 = vld [vmem:[%s0 + $0x320] sm:$0xff]
  %v120 = vld [vmem:[%s0 + $0x328] sm:$0xff]
  %v121 = vld [vmem:[%s0 + $0x330] sm:$0xff]
  %v122 = vld [vmem:[%s0 + $0x338] sm:$0xff]
  %v123 = vld [vmem:[%s0 + $0x340] sm:$0xff]
  %v124 = vld [vmem:[%s0 + $0x348] sm:$0xff]
  %v125 = vld [vmem:[%s0 + $0x350] sm:$0xff]
  %v126 = vld [vmem:[%s0 + $0x358] sm:$0xff]
  %v127 = vld [vmem:[%s0 + $0x360] sm:$0xff]
  %v128 = vld [vmem:[%s0 + $0x368] sm:$0xff]
  %v129 = vld [vmem:[%s0 + $0x370] sm:$0xff]
  %v130 = vld [vmem:[%s0 + $0x378] sm:$0xff]
  %v243 = vunpack.c.l.b16 %v19
  %v244 = vunpack.c.h.b16 %v19
  %v245 = vunpack.c.l.b16 %v20
  %v246 = vunpack.c.h.b16 %v20
  %v247 = vunpack.c.l.b16 %v21
  %v248 = vunpack.c.h.b16 %v21
  %v249 = vunpack.c.l.b16 %v22
  %v250 = vunpack.c.h.b16 %v22
  %v251 = vunpack.c.l.b16 %v23
  %v252 = vunpack.c.h.b16 %v23
  %v253 = vunpack.c.l.b16 %v24
  %v254 = vunpack.c.h.b16 %v24
  %v255 = vunpack.c.l.b16 %v25
  %v256 = vunpack.c.h.b16 %v25
  %v257 = vunpack.c.l.b16 %v26
  %v258 = vunpack.c.h.b16 %v26
  %v259 = vunpack.c.l.b16 %v27
  %v260 = vunpack.c.h.b16 %v27
  %v261 = vunpack.c.l.b16 %v28
  %v262 = vunpack.c.h.b16 %v28
  %v263 = vunpack.c.l.b16 %v29
  %v264 = vunpack.c.h.b16 %v29
  %v265 = vunpack.c.l.b16 %v30
  %v266 = vunpack.c.h.b16 %v30
  %v267 = vunpack.c.l.b16 %v31
  %v268 = vunpack.c.h.b16 %v31
  %v269 = vunpack.c.l.b16 %v32
  %v270 = vunpack.c.h.b16 %v32
  %v271 = vunpack.c.l.b16 %v33
  %v272 = vunpack.c.h.b16 %v33
  %v273 = vunpack.c.l.b16 %v34
  %v274 = vunpack.c.h.b16 %v34
  %v275 = vunpack.c.l.b16 %v35
  %v276 = vunpack.c.h.b16 %v35
  %v277 = vunpack.c.l.b16 %v36
  %v278 = vunpack.c.h.b16 %v36
  %v279 = vunpack.c.l.b16 %v37
  %v280 = vunpack.c.h.b16 %v37
  %v281 = vunpack.c.l.b16 %v38
  %v282 = vunpack.c.h.b16 %v38
  %v283 = vunpack.c.l.b16 %v39
  %v284 = vunpack.c.h.b16 %v39
  %v285 = vunpack.c.l.b16 %v40
  %v286 = vunpack.c.h.b16 %v40
  %v287 = vunpack.c.l.b16 %v41
  %v288 = vunpack.c.h.b16 %v41
  %v289 = vunpack.c.l.b16 %v42
  %v290 = vunpack.c.h.b16 %v42
  %v291 = vunpack.c.l.b16 %v43
  %v292 = vunpack.c.h.b16 %v43
  %v293 = vunpack.c.l.b16 %v44
  %v294 = vunpack.c.h.b16 %v44
  %v295 = vunpack.c.l.b16 %v45
  %v296 = vunpack.c.h.b16 %v45
  %v297 = vunpack.c.l.b16 %v46
  %v298 = vunpack.c.h.b16 %v46
  %v299 = vunpack.c.l.b16 %v47
  %v300 = vunpack.c.h.b16 %v47
  %v301 = vunpack.c.l.b16 %v48
  %v302 = vunpack.c.h.b16 %v48
  %v303 = vunpack.c.l.b16 %v49
  %v304 = vunpack.c.h.b16 %v49
  %v305 = vunpack.c.l.b16 %v50
  %v306 = vunpack.c.h.b16 %v50
  %v307 = vunpack.c.l.b16 %v51
  %v308 = vunpack.c.h.b16 %v51
  %v309 = vunpack.c.l.b16 %v52
  %v310 = vunpack.c.h.b16 %v52
  %v311 = vunpack.c.l.b16 %v53
  %v312 = vunpack.c.h.b16 %v53
  %v313 = vunpack.c.l.b16 %v54
  %v314 = vunpack.c.h.b16 %v54
  %v315 = vunpack.c.l.b16 %v55
  %v316 = vunpack.c.h.b16 %v55
  %v317 = vunpack.c.l.b16 %v56
  %v318 = vunpack.c.h.b16 %v56
  %v319 = vunpack.c.l.b16 %v57
  %v320 = vunpack.c.h.b16 %v57
  %v321 = vunpack.c.l.b16 %v58
  %v322 = vunpack.c.h.b16 %v58
  %v323 = vunpack.c.l.b16 %v59
  %v324 = vunpack.c.h.b16 %v59
  %v325 = vunpack.c.l.b16 %v60
  %v326 = vunpack.c.h.b16 %v60
  %v327 = vunpack.c.l.b16 %v61
  %v328 = vunpack.c.h.b16 %v61
  %v329 = vunpack.c.l.b16 %v62
  %v330 = vunpack.c.h.b16 %v62
  %v331 = vunpack.c.l.b16 %v63
  %v332 = vunpack.c.h.b16 %v63
  %v333 = vunpack.c.l.b16 %v64
  %v334 = vunpack.c.h.b16 %v64
  %v335 = vunpack.c.l.b16 %v65
  %v336 = vunpack.c.h.b16 %v65
  %v337 = vunpack.c.l.b16 %v66
  %v338 = vunpack.c.h.b16 %v66
  %v339 = vunpack.c.l.b16 %v67
  %v340 = vunpack.c.h.b16 %v67
  %v341 = vunpack.c.l.b16 %v68
  %v342 = vunpack.c.h.b16 %v68
  %v343 = vunpack.c.l.b16 %v69
  %v344 = vunpack.c.h.b16 %v69
  %v345 = vunpack.c.l.b16 %v70
  %v346 = vunpack.c.h.b16 %v70
  %v347 = vunpack.c.l.b16 %v71
  %v348 = vunpack.c.h.b16 %v71
  %v349 = vunpack.c.l.b16 %v72
  %v350 = vunpack.c.h.b16 %v72
  %v351 = vunpack.c.l.b16 %v73
  %v352 = vunpack.c.h.b16 %v73
  %v353 = vunpack.c.l.b16 %v74
  %v354 = vunpack.c.h.b16 %v74
  %v355 = vunpack.c.l.b16 %v75
  %v356 = vunpack.c.h.b16 %v75
  %v357 = vunpack.c.l.b16 %v76
  %v358 = vunpack.c.h.b16 %v76
  %v359 = vunpack.c.l.b16 %v77
  %v360 = vunpack.c.h.b16 %v77
  %v361 = vunpack.c.l.b16 %v78
  %v362 = vunpack.c.h.b16 %v78
  %v363 = vunpack.c.l.b16 %v79
  %v364 = vunpack.c.h.b16 %v79
  %v365 = vunpack.c.l.b16 %v80
  %v366 = vunpack.c.h.b16 %v80
  %v367 = vunpack.c.l.b16 %v81
  %v368 = vunpack.c.h.b16 %v81
  %v369 = vunpack.c.l.b16 %v82
  %v370 = vunpack.c.h.b16 %v82
  %v371 = vunpack.c.l.b16 %v83
  %v372 = vunpack.c.h.b16 %v83
  %v373 = vunpack.c.l.b16 %v84
  %v374 = vunpack.c.h.b16 %v84
  %v375 = vunpack.c.l.b16 %v85
  %v376 = vunpack.c.h.b16 %v85
  %v377 = vunpack.c.l.b16 %v86
  %v378 = vunpack.c.h.b16 %v86
  %v379 = vunpack.c.l.b16 %v87
  %v380 = vunpack.c.h.b16 %v87
  %v381 = vunpack.c.l.b16 %v88
  %v382 = vunpack.c.h.b16 %v88
  %v383 = vunpack.c.l.b16 %v89
  %v384 = vunpack.c.h.b16 %v89
  %v385 = vunpack.c.l.b16 %v90
  %v386 = vunpack.c.h.b16 %v90
  %v387 = vunpack.c.l.b16 %v91
  %v388 = vunpack.c.h.b16 %v91
  %v389 = vunpack.c.l.b16 %v92
  %v390 = vunpack.c.h.b16 %v92
  %v391 = vunpack.c.l.b16 %v93
  %v392 = vunpack.c.h.b16 %v93
  %v393 = vunpack.c.l.b16 %v94
  %v394 = vunpack.c.h.b16 %v94
  %v395 = vunpack.c.l.b16 %v95
  %v396 = vunpack.c.h.b16 %v95
  %v397 = vunpack.c.l.b16 %v96
  %v398 = vunpack.c.h.b16 %v96
  %v399 = vunpack.c.l.b16 %v97
  %v400 = vunpack.c.h.b16 %v97
  %v401 = vunpack.c.l.b16 %v98
  %v402 = vunpack.c.h.b16 %v98
  %v403 = vunpack.c.l.b16 %v99
  %v404 = vunpack.c.h.b16 %v99
  %v405 = vunpack.c.l.b16 %v100
  %v406 = vunpack.c.h.b16 %v100
  %v407 = vunpack.c.l.b16 %v101
  %v408 = vunpack.c.h.b16 %v101
  %v409 = vunpack.c.l.b16 %v102
  %v410 = vunpack.c.h.b16 %v102
  %v411 = vunpack.c.l.b16 %v103
  %v412 = vunpack.c.h.b16 %v103
  %v413 = vunpack.c.l.b16 %v104
  %v414 = vunpack.c.h.b16 %v104
  %v415 = vunpack.c.l.b16 %v105
  %v416 = vunpack.c.h.b16 %v105
  %v417 = vunpack.c.l.b16 %v106
  %v418 = vunpack.c.h.b16 %v106
  %v419 = vunpack.c.l.b16 %v107
  %v420 = vunpack.c.h.b16 %v107
  %v421 = vunpack.c.l.b16 %v108
  %v422 = vunpack.c.h.b16 %v108
  %v423 = vunpack.c.l.b16 %v109
  %v424 = vunpack.c.h.b16 %v109
  %v425 = vunpack.c.l.b16 %v110
  %v426 = vunpack.c.h.b16 %v110
  %v427 = vunpack.c.l.b16 %v111
  %v428 = vunpack.c.h.b16 %v111
  %v429 = vunpack.c.l.b16 %v112
  %v430 = vunpack.c.h.b16 %v112
  %v431 = vunpack.c.l.b16 %v113
  %v432 = vunpack.c.h.b16 %v113
  %v433 = vunpack.c.l.b16 %v114
  %v434 = vunpack.c.h.b16 %v114
  %v435 = vunpack.c.l.b16 %v115
  %v436 = vunpack.c.h.b16 %v115
  %v437 = vunpack.c.l.b16 %v116
  %v438 = vunpack.c.h.b16 %v116
  %v439 = vunpack.c.l.b16 %v117
  %v440 = vunpack.c.h.b16 %v117
  %v441 = vunpack.c.l.b16 %v118
  %v442 = vunpack.c.h.b16 %v118
  %v443 = vunpack.c.l.b16 %v119
  %v444 = vunpack.c.h.b16 %v119
  %v445 = vunpack.c.l.b16 %v120
  %v446 = vunpack.c.h.b16 %v120
  %v447 = vunpack.c.l.b16 %v121
  %v448 = vunpack.c.h.b16 %v121
  %v449 = vunpack.c.l.b16 %v122
  %v450 = vunpack.c.h.b16 %v122
  %v451 = vunpack.c.l.b16 %v123
  %v452 = vunpack.c.h.b16 %v123
  %v453 = vunpack.c.l.b16 %v124
  %v454 = vunpack.c.h.b16 %v124
  %v455 = vunpack.c.l.b16 %v125
  %v456 = vunpack.c.h.b16 %v125
  %v457 = vunpack.c.l.b16 %v126
  %v458 = vunpack.c.h.b16 %v126
  %v459 = vunpack.c.l.b16 %v127
  %v460 = vunpack.c.h.b16 %v127
  %v461 = vunpack.c.l.b16 %v128
  %v462 = vunpack.c.h.b16 %v128
  %v463 = vunpack.c.l.b16 %v129
  %v464 = vunpack.c.h.b16 %v129
  %v465 = vunpack.c.l.b16 %v130
  %v466 = vunpack.c.h.b16 %v130
  %v467 = vpack.c.b16 %v271, %v243
  %v468 = vpack.c.b16 %v272, %v244
  %v469 = vpack.c.b16 %v273, %v245
  %v470 = vpack.c.b16 %v274, %v246
  %v471 = vpack.c.b16 %v275, %v247
  %v472 = vpack.c.b16 %v276, %v248
  %v473 = vpack.c.b16 %v277, %v249
  %v474 = vpack.c.b16 %v278, %v250
  %v475 = vpack.c.b16 %v279, %v251
  %v476 = vpack.c.b16 %v280, %v252
  %v477 = vpack.c.b16 %v281, %v253
  %v478 = vpack.c.b16 %v282, %v254
  %v479 = vpack.c.b16 %v283, %v255
  %v480 = vpack.c.b16 %v284, %v256
  %v481 = vpack.c.b16 %v285, %v257
  %v482 = vpack.c.b16 %v286, %v258
  %v483 = vpack.c.b16 %v287, %v259
  %v484 = vpack.c.b16 %v288, %v260
  %v485 = vpack.c.b16 %v289, %v261
  %v486 = vpack.c.b16 %v290, %v262
  %v487 = vpack.c.b16 %v291, %v263
  %v488 = vpack.c.b16 %v292, %v264
  %v489 = vpack.c.b16 %v293, %v265
  %v490 = vpack.c.b16 %v294, %v266
  %v491 = vpack.c.b16 %v295, %v267
  %v492 = vpack.c.b16 %v296, %v268
  %v493 = vpack.c.b16 %v297, %v269
  %v494 = vpack.c.b16 %v298, %v270
  %v495 = vpack.c.b16 %v327, %v299
  %v496 = vpack.c.b16 %v328, %v300
  %v497 = vpack.c.b16 %v329, %v301
  %v498 = vpack.c.b16 %v330, %v302
  %v499 = vpack.c.b16 %v331, %v303
  %v500 = vpack.c.b16 %v332, %v304
  %v501 = vpack.c.b16 %v333, %v305
  %v502 = vpack.c.b16 %v334, %v306
  %v503 = vpack.c.b16 %v335, %v307
  %v504 = vpack.c.b16 %v336, %v308
  %v505 = vpack.c.b16 %v337, %v309
  %v506 = vpack.c.b16 %v338, %v310
  %v507 = vpack.c.b16 %v339, %v311
  %v508 = vpack.c.b16 %v340, %v312
  %v509 = vpack.c.b16 %v341, %v313
  %v510 = vpack.c.b16 %v342, %v314
  %v511 = vpack.c.b16 %v343, %v315
  %v512 = vpack.c.b16 %v344, %v316
  %v513 = vpack.c.b16 %v345, %v317
  %v514 = vpack.c.b16 %v346, %v318
  %v515 = vpack.c.b16 %v347, %v319
  %v516 = vpack.c.b16 %v348, %v320
  %v517 = vpack.c.b16 %v349, %v321
  %v518 = vpack.c.b16 %v350, %v322
  %v519 = vpack.c.b16 %v351, %v323
  %v520 = vpack.c.b16 %v352, %v324
  %v521 = vpack.c.b16 %v353, %v325
  %v522 = vpack.c.b16 %v354, %v326
  %v523 = vpack.c.b16 %v383, %v355
  %v524 = vpack.c.b16 %v384, %v356
  %v525 = vpack.c.b16 %v385, %v357
  %v526 = vpack.c.b16 %v386, %v358
  %v527 = vpack.c.b16 %v387, %v359
  %v528 = vpack.c.b16 %v388, %v360
  %v529 = vpack.c.b16 %v389, %v361
  %v530 = vpack.c.b16 %v390, %v362
  %v531 = vpack.c.b16 %v391, %v363
  %v532 = vpack.c.b16 %v392, %v364
  %v533 = vpack.c.b16 %v393, %v365
  %v534 = vpack.c.b16 %v394, %v366
  %v535 = vpack.c.b16 %v395, %v367
  %v536 = vpack.c.b16 %v396, %v368
  %v537 = vpack.c.b16 %v397, %v369
  %v538 = vpack.c.b16 %v398, %v370
  %v539 = vpack.c.b16 %v399, %v371
  %v540 = vpack.c.b16 %v400, %v372
  %v541 = vpack.c.b16 %v401, %v373
  %v542 = vpack.c.b16 %v402, %v374
  %v543 = vpack.c.b16 %v403, %v375
  %v544 = vpack.c.b16 %v404, %v376
  %v545 = vpack.c.b16 %v405, %v377
  %v546 = vpack.c.b16 %v406, %v378
  %v547 = vpack.c.b16 %v407, %v379
  %v548 = vpack.c.b16 %v408, %v380
  %v549 = vpack.c.b16 %v409, %v381
  %v550 = vpack.c.b16 %v410, %v382
  %v551 = vpack.c.b16 %v439, %v411
  %v552 = vpack.c.b16 %v440, %v412
  %v553 = vpack.c.b16 %v441, %v413
  %v554 = vpack.c.b16 %v442, %v414
  %v555 = vpack.c.b16 %v443, %v415
  %v556 = vpack.c.b16 %v444, %v416
  %v557 = vpack.c.b16 %v445, %v417
  %v558 = vpack.c.b16 %v446, %v418
  %v559 = vpack.c.b16 %v447, %v419
  %v560 = vpack.c.b16 %v448, %v420
  %v561 = vpack.c.b16 %v449, %v421
  %v562 = vpack.c.b16 %v450, %v422
  %v563 = vpack.c.b16 %v451, %v423
  %v564 = vpack.c.b16 %v452, %v424
  %v565 = vpack.c.b16 %v453, %v425
  %v566 = vpack.c.b16 %v454, %v426
  %v567 = vpack.c.b16 %v455, %v427
  %v568 = vpack.c.b16 %v456, %v428
  %v569 = vpack.c.b16 %v457, %v429
  %v570 = vpack.c.b16 %v458, %v430
  %v571 = vpack.c.b16 %v459, %v431
  %v572 = vpack.c.b16 %v460, %v432
  %v573 = vpack.c.b16 %v461, %v433
  %v574 = vpack.c.b16 %v462, %v434
  %v575 = vpack.c.b16 %v463, %v435
  %v576 = vpack.c.b16 %v464, %v436
  %v577 = vpack.c.b16 %v465, %v437
  %v578 = vpack.c.b16 %v466, %v438
  %vm691 = vcmask 523264
  %v693 = vsel %vm691, %v18, 0
  %695 = vmatprep.subr.bf16.mxu0 %v468
  %696 = vmatpush1.bf16.msra.mxu0 %v467
  %697 = vmatprep.subr.bf16.mxu0 %v496
  %698 = vmatpush1.bf16.msra.mxu0 %v495
  %699 = vmatprep.subr.bf16.mxu0 %v524
  %700 = vmatpush1.bf16.msra.mxu0 %v523
  %701 = vmatprep.subr.bf16.mxu0 %v552
  %702 = vmatpush1.bf16.msra.mxu0 %v551
  %703 = vmatprep.subr.bf16.mxu0 0
  %704 = vmatpush1.bf16.msra.mxu0 0
  %705 = vmatprep.subr.bf16.mxu0 0
  %706 = vmatpush1.bf16.msra.mxu0 0
  %707 = vmatprep.subr.bf16.mxu0 0
  %708 = vmatpush1.bf16.msra.mxu0 0
  %709 = vmatprep.subr.bf16.mxu0 0
  %710 = vmatpush1.bf16.msra.mxu0 0
  %711 = vmatprep.subr.bf16.mxu0 0
  %712 = vmatpush1.bf16.msra.mxu0 0
  %713 = vmatprep.subr.bf16.mxu0 0
  %714 = vmatpush1.bf16.msra.mxu0 0
  %715 = vmatprep.subr.bf16.mxu0 0
  %716 = vmatpush1.bf16.msra.mxu0 0
  %717 = vmatprep.subr.bf16.mxu0 0
  %718 = vmatpush1.bf16.msra.mxu0 0
  %719 = vmatprep.subr.bf16.mxu0 0
  %720 = vmatpush1.bf16.msra.mxu0 0
  %721 = vmatprep.subr.bf16.mxu0 0
  %722 = vmatpush1.bf16.msra.mxu0 0
  %723 = vmatprep.subr.bf16.mxu0 0
  %724 = vmatpush1.bf16.msra.mxu0 0
  %725 = vmatprep.subr.bf16.mxu0 0
  %726 = vmatpush1.bf16.msra.mxu0 0
  %727 = vmatprep.mubr.bf16.mxu0 0
  %728 = vmatmul.mubr.bf16.gmra.mrb[0].mxu0 %v693
  %v729 = vpop.f32.mrb[0].mxu0
  %v730 = vadd.f32 0.0, %v729
  %v731 = vpop.f32.mrb[0].mxu0
  %v732 = vadd.f32 0.0, %v731
  %v733 = vpop.f32.mrb[0].mxu0
  %v734 = vpop.f32.mrb[0].mxu0
  %735 = vdwg.mxu0
  %736 = vmatprep.subr.bf16.mxu0 %v470
  %737 = vmatpush1.bf16.msra.mxu0 %v469
  %738 = vmatprep.subr.bf16.mxu0 %v498
  %739 = vmatpush1.bf16.msra.mxu0 %v497
  %740 = vmatprep.subr.bf16.mxu0 %v526
  %741 = vmatpush1.bf16.msra.mxu0 %v525
  %742 = vmatprep.subr.bf16.mxu0 %v554
  %743 = vmatpush1.bf16.msra.mxu0 %v553
  %744 = vmatprep.subr.bf16.mxu0 0
  %745 = vmatpush1.bf16.msra.mxu0 0
  %746 = vmatprep.subr.bf16.mxu0 0
  %747 = vmatpush1.bf16.msra.mxu0 0
  %748 = vmatprep.subr.bf16.mxu0 0
  %749 = vmatpush1.bf16.msra.mxu0 0
  %750 = vmatprep.subr.bf16.mxu0 0
  %751 = vmatpush1.bf16.msra.mxu0 0
  %752 = vmatprep.subr.bf16.mxu0 0
  %753 = vmatpush1.bf16.msra.mxu0 0
  %754 = vmatprep.subr.bf16.mxu0 0
  %755 = vmatpush1.bf16.msra.mxu0 0
  %756 = vmatprep.subr.bf16.mxu0 0
  %757 = vmatpush1.bf16.msra.mxu0 0
  %758 = vmatprep.subr.bf16.mxu0 0
  %759 = vmatpush1.bf16.msra.mxu0 0
  %760 = vmatprep.subr.bf16.mxu0 0
  %761 = vmatpush1.bf16.msra.mxu0 0
  %762 = vmatprep.subr.bf16.mxu0 0
  %763 = vmatpush1.bf16.msra.mxu0 0
  %764 = vmatprep.subr.bf16.mxu0 0
  %765 = vmatpush1.bf16.msra.mxu0 0
  %766 = vmatprep.subr.bf16.mxu0 0
  %767 = vmatpush1.bf16.msra.mxu0 0
  %768 = vmatprep.mubr.bf16.mxu0 0
  %769 = vmatmul.mubr.bf16.gmra.mrb[0].mxu0 %v693
  %v770 = vpop.f32.mrb[0].mxu0
  %v771 = vadd.f32 0.0, %v770
  %v772 = vpop.f32.mrb[0].mxu0
  %v773 = vadd.f32 0.0, %v772
  %v774 = vpop.f32.mrb[0].mxu0
  %v775 = vpop.f32.mrb[0].mxu0
  %776 = vdwg.mxu0
  %777 = vmatprep.subr.bf16.mxu0 %v472
  %778 = vmatpush1.bf16.msra.mxu0 %v471
  %779 = vmatprep.subr.bf16.mxu0 %v500
  %780 = vmatpush1.bf16.msra.mxu0 %v499
  %781 = vmatprep.subr.bf16.mxu0 %v528
  %782 = vmatpush1.bf16.msra.mxu0 %v527
  %783 = vmatprep.subr.bf16.mxu0 %v556
  %784 = vmatpush1.bf16.msra.mxu0 %v555
  %785 = vmatprep.subr.bf16.mxu0 0
  %786 = vmatpush1.bf16.msra.mxu0 0
  %787 = vmatprep.subr.bf16.mxu0 0
  %788 = vmatpush1.bf16.msra.mxu0 0
  %789 = vmatprep.subr.bf16.mxu0 0
  %790 = vmatpush1.bf16.msra.mxu0 0
  %791 = vmatprep.subr.bf16.mxu0 0
  %792 = vmatpush1.bf16.msra.mxu0 0
  %793 = vmatprep.subr.bf16.mxu0 0
  %794 = vmatpush1.bf16.msra.mxu0 0
  %795 = vmatprep.subr.bf16.mxu0 0
  %796 = vmatpush1.bf16.msra.mxu0 0
  %797 = vmatprep.subr.bf16.mxu0 0
  %798 = vmatpush1.bf16.msra.mxu0 0
  %799 = vmatprep.subr.bf16.mxu0 0
  %800 = vmatpush1.bf16.msra.mxu0 0
  %801 = vmatprep.subr.bf16.mxu0 0
  %802 = vmatpush1.bf16.msra.mxu0 0
  %803 = vmatprep.subr.bf16.mxu0 0
  %804 = vmatpush1.bf16.msra.mxu0 0
  %805 = vmatprep.subr.bf16.mxu0 0
  %806 = vmatpush1.bf16.msra.mxu0 0
  %807 = vmatprep.subr.bf16.mxu0 0
  %808 = vmatpush1.bf16.msra.mxu0 0
  %809 = vmatprep.mubr.bf16.mxu0 0
  %810 = vmatmul.mubr.bf16.gmra.mrb[0].mxu0 %v693
  %v811 = vpop.f32.mrb[0].mxu0
  %v812 = vadd.f32 0.0, %v811
  %v813 = vpop.f32.mrb[0].mxu0
  %v814 = vadd.f32 0.0, %v813
  %v815 = vpop.f32.mrb[0].mxu0
  %v816 = vpop.f32.mrb[0].mxu0
  %817 = vdwg.mxu0
  %818 = vmatprep.subr.bf16.mxu0 %v474
  %819 = vmatpush1.bf16.msra.mxu0 %v473
  %820 = vmatprep.subr.bf16.mxu0 %v502
  %821 = vmatpush1.bf16.msra.mxu0 %v501
  %822 = vmatprep.subr.bf16.mxu0 %v530
  %823 = vmatpush1.bf16.msra.mxu0 %v529
  %824 = vmatprep.subr.bf16.mxu0 %v558
  %825 = vmatpush1.bf16.msra.mxu0 %v557
  %826 = vmatprep.subr.bf16.mxu0 0
  %827 = vmatpush1.bf16.msra.mxu0 0
  %828 = vmatprep.subr.bf16.mxu0 0
  %829 = vmatpush1.bf16.msra.mxu0 0
  %830 = vmatprep.subr.bf16.mxu0 0
  %831 = vmatpush1.bf16.msra.mxu0 0
  %832 = vmatprep.subr.bf16.mxu0 0
  %833 = vmatpush1.bf16.msra.mxu0 0
  %834 = vmatprep.subr.bf16.mxu0 0
  %835 = vmatpush1.bf16.msra.mxu0 0
  %836 = vmatprep.subr.bf16.mxu0 0
  %837 = vmatpush1.bf16.msra.mxu0 0
  %838 = vmatprep.subr.bf16.mxu0 0
  %839 = vmatpush1.bf16.msra.mxu0 0
  %840 = vmatprep.subr.bf16.mxu0 0
  %841 = vmatpush1.bf16.msra.mxu0 0
  %842 = vmatprep.subr.bf16.mxu0 0
  %843 = vmatpush1.bf16.msra.mxu0 0
  %844 = vmatprep.subr.bf16.mxu0 0
  %845 = vmatpush1.bf16.msra.mxu0 0
  %846 = vmatprep.subr.bf16.mxu0 0
  %847 = vmatpush1.bf16.msra.mxu0 0
  %848 = vmatprep.subr.bf16.mxu0 0
  %849 = vmatpush1.bf16.msra.mxu0 0
  %850 = vmatprep.mubr.bf16.mxu0 0
  %851 = vmatmul.mubr.bf16.gmra.mrb[0].mxu0 %v693
  %v852 = vpop.f32.mrb[0].mxu0
  %v853 = vadd.f32 0.0, %v852
  %v854 = vpop.f32.mrb[0].mxu0
  %v855 = vadd.f32 0.0, %v854
  %v856 = vpop.f32.mrb[0].mxu0
  %v857 = vpop.f32.mrb[0].mxu0
  %858 = vdwg.mxu0
  %859 = vmatprep.subr.bf16.mxu0 %v476
  %860 = vmatpush1.bf16.msra.mxu0 %v475
  %861 = vmatprep.subr.bf16.mxu0 %v504
  %862 = vmatpush1.bf16.msra.mxu0 %v503
  %863 = vmatprep.subr.bf16.mxu0 %v532
  %864 = vmatpush1.bf16.msra.mxu0 %v531
  %865 = vmatprep.subr.bf16.mxu0 %v560
  %866 = vmatpush1.bf16.msra.mxu0 %v559
  %867 = vmatprep.subr.bf16.mxu0 0
  %868 = vmatpush1.bf16.msra.mxu0 0
  %869 = vmatprep.subr.bf16.mxu0 0
  %870 = vmatpush1.bf16.msra.mxu0 0
  %871 = vmatprep.subr.bf16.mxu0 0
  %872 = vmatpush1.bf16.msra.mxu0 0
  %873 = vmatprep.subr.bf16.mxu0 0
  %874 = vmatpush1.bf16.msra.mxu0 0
  %875 = vmatprep.subr.bf16.mxu0 0
  %876 = vmatpush1.bf16.msra.mxu0 0
  %877 = vmatprep.subr.bf16.mxu0 0
  %878 = vmatpush1.bf16.msra.mxu0 0
  %879 = vmatprep.subr.bf16.mxu0 0
  %880 = vmatpush1.bf16.msra.mxu0 0
  %881 = vmatprep.subr.bf16.mxu0 0
  %882 = vmatpush1.bf16.msra.mxu0 0
  %883 = vmatprep.subr.bf16.mxu0 0
  %884 = vmatpush1.bf16.msra.mxu0 0
  %885 = vmatprep.subr.bf16.mxu0 0
  %886 = vmatpush1.bf16.msra.mxu0 0
  %887 = vmatprep.subr.bf16.mxu0 0
  %888 = vmatpush1.bf16.msra.mxu0 0
  %889 = vmatprep.subr.bf16.mxu0 0
  %890 = vmatpush1.bf16.msra.mxu0 0
  %891 = vmatprep.mubr.bf16.mxu0 0
  %892 = vmatmul.mubr.bf16.gmra.mrb[0].mxu0 %v693
  %v893 = vpop.f32.mrb[0].mxu0
  %v894 = vadd.f32 0.0, %v893
  %v895 = vpop.f32.mrb[0].mxu0
  %v896 = vadd.f32 0.0, %v895
  %v897 = vpop.f32.mrb[0].mxu0
  %v898 = vpop.f32.mrb[0].mxu0
  %899 = vdwg.mxu0
  %900 = vmatprep.subr.bf16.mxu0 %v478
  %901 = vmatpush1.bf16.msra.mxu0 %v477
  %902 = vmatprep.subr.bf16.mxu0 %v506
  %903 = vmatpush1.bf16.msra.mxu0 %v505
  %904 = vmatprep.subr.bf16.mxu0 %v534
  %905 = vmatpush1.bf16.msra.mxu0 %v533
  %906 = vmatprep.subr.bf16.mxu0 %v562
  %907 = vmatpush1.bf16.msra.mxu0 %v561
  %908 = vmatprep.subr.bf16.mxu0 0
  %909 = vmatpush1.bf16.msra.mxu0 0
  %910 = vmatprep.subr.bf16.mxu0 0
  %911 = vmatpush1.bf16.msra.mxu0 0
  %912 = vmatprep.subr.bf16.mxu0 0
  %913 = vmatpush1.bf16.msra.mxu0 0
  %914 = vmatprep.subr.bf16.mxu0 0
  %915 = vmatpush1.bf16.msra.mxu0 0
  %916 = vmatprep.subr.bf16.mxu0 0
  %917 = vmatpush1.bf16.msra.mxu0 0
  %918 = vmatprep.subr.bf16.mxu0 0
  %919 = vmatpush1.bf16.msra.mxu0 0
  %920 = vmatprep.subr.bf16.mxu0 0
  %921 = vmatpush1.bf16.msra.mxu0 0
  %922 = vmatprep.subr.bf16.mxu0 0
  %923 = vmatpush1.bf16.msra.mxu0 0
  %924 = vmatprep.subr.bf16.mxu0 0
  %925 = vmatpush1.bf16.msra.mxu0 0
  %926 = vmatprep.subr.bf16.mxu0 0
  %927 = vmatpush1.bf16.msra.mxu0 0
  %928 = vmatprep.subr.bf16.mxu0 0
  %929 = vmatpush1.bf16.msra.mxu0 0
  %930 = vmatprep.subr.bf16.mxu0 0
  %931 = vmatpush1.bf16.msra.mxu0 0
  %932 = vmatprep.mubr.bf16.mxu0 0
  %933 = vmatmul.mubr.bf16.gmra.mrb[0].mxu0 %v693
  %v934 = vpop.f32.mrb[0].mxu0
  %v935 = vadd.f32 0.0, %v934
  %v936 = vpop.f32.mrb[0].mxu0
  %v937 = vadd.f32 0.0, %v936
  %v938 = vpop.f32.mrb[0].mxu0
  %v939 = vpop.f32.mrb[0].mxu0
  %940 = vdwg.mxu0
  %941 = vmatprep.subr.bf16.mxu0 %v480
  %942 = vmatpush1.bf16.msra.mxu0 %v479
  %943 = vmatprep.subr.bf16.mxu0 %v508
  %944 = vmatpush1.bf16.msra.mxu0 %v507
  %945 = vmatprep.subr.bf16.mxu0 %v536
  %946 = vmatpush1.bf16.msra.mxu0 %v535
  %947 = vmatprep.subr.bf16.mxu0 %v564
  %948 = vmatpush1.bf16.msra.mxu0 %v563
  %949 = vmatprep.subr.bf16.mxu0 0
  %950 = vmatpush1.bf16.msra.mxu0 0
  %951 = vmatprep.subr.bf16.mxu0 0
  %952 = vmatpush1.bf16.msra.mxu0 0
  %953 = vmatprep.subr.bf16.mxu0 0
  %954 = vmatpush1.bf16.msra.mxu0 0
  %955 = vmatprep.subr.bf16.mxu0 0
  %956 = vmatpush1.bf16.msra.mxu0 0
  %957 = vmatprep.subr.bf16.mxu0 0
  %958 = vmatpush1.bf16.msra.mxu0 0
  %959 = vmatprep.subr.bf16.mxu0 0
  %960 = vmatpush1.bf16.msra.mxu0 0
  %961 = vmatprep.subr.bf16.mxu0 0
  %962 = vmatpush1.bf16.msra.mxu0 0
  %963 = vmatprep.subr.bf16.mxu0 0
  %964 = vmatpush1.bf16.msra.mxu0 0
  %965 = vmatprep.subr.bf16.mxu0 0
  %966 = vmatpush1.bf16.msra.mxu0 0
  %967 = vmatprep.subr.bf16.mxu0 0
  %968 = vmatpush1.bf16.msra.mxu0 0
  %969 = vmatprep.subr.bf16.mxu0 0
  %970 = vmatpush1.bf16.msra.mxu0 0
  %971 = vmatprep.subr.bf16.mxu0 0
  %972 = vmatpush1.bf16.msra.mxu0 0
  %973 = vmatprep.mubr.bf16.mxu0 0
  %974 = vmatmul.mubr.bf16.gmra.mrb[0].mxu0 %v693
  %v975 = vpop.f32.mrb[0].mxu0
  %v976 = vadd.f32 0.0, %v975
  %v977 = vpop.f32.mrb[0].mxu0
  %v978 = vadd.f32 0.0, %v977
  %v979 = vpop.f32.mrb[0].mxu0
  %v980 = vpop.f32.mrb[0].mxu0
  %981 = vdwg.mxu0
  %982 = vmatprep.subr.bf16.mxu0 %v482
  %983 = vmatpush1.bf16.msra.mxu0 %v481
  %984 = vmatprep.subr.bf16.mxu0 %v510
  %985 = vmatpush1.bf16.msra.mxu0 %v509
  %986 = vmatprep.subr.bf16.mxu0 %v538
  %987 = vmatpush1.bf16.msra.mxu0 %v537
  %988 = vmatprep.subr.bf16.mxu0 %v566
  %989 = vmatpush1.bf16.msra.mxu0 %v565
  %990 = vmatprep.subr.bf16.mxu0 0
  %991 = vmatpush1.bf16.msra.mxu0 0
  %992 = vmatprep.subr.bf16.mxu0 0
  %993 = vmatpush1.bf16.msra.mxu0 0
  %994 = vmatprep.subr.bf16.mxu0 0
  %995 = vmatpush1.bf16.msra.mxu0 0
  %996 = vmatprep.subr.bf16.mxu0 0
  %997 = vmatpush1.bf16.msra.mxu0 0
  %998 = vmatprep.subr.bf16.mxu0 0
  %999 = vmatpush1.bf16.msra.mxu0 0
  %1000 = vmatprep.subr.bf16.mxu0 0
  %1001 = vmatpush1.bf16.msra.mxu0 0
  %1002 = vmatprep.subr.bf16.mxu0 0
  %1003 = vmatpush1.bf16.msra.mxu0 0
  %1004 = vmatprep.subr.bf16.mxu0 0
  %1005 = vmatpush1.bf16.msra.mxu0 0
  %1006 = vmatprep.subr.bf16.mxu0 0
  %1007 = vmatpush1.bf16.msra.mxu0 0
  %1008 = vmatprep.subr.bf16.mxu0 0
  %1009 = vmatpush1.bf16.msra.mxu0 0
  %1010 = vmatprep.subr.bf16.mxu0 0
  %1011 = vmatpush1.bf16.msra.mxu0 0
  %1012 = vmatprep.subr.bf16.mxu0 0
  %1013 = vmatpush1.bf16.msra.mxu0 0
  %1014 = vmatprep.mubr.bf16.mxu0 0
  %1015 = vmatmul.mubr.bf16.gmra.mrb[0].mxu0 %v693
  %v1016 = vpop.f32.mrb[0].mxu0
  %v1017 = vadd.f32 0.0, %v1016
  %v1018 = vpop.f32.mrb[0].mxu0
  %v1019 = vadd.f32 0.0, %v1018
  %v1020 = vpop.f32.mrb[0].mxu0
  %v1021 = vpop.f32.mrb[0].mxu0
  %1022 = vdwg.mxu0
  %1023 = vmatprep.subr.bf16.mxu0 %v484
  %1024 = vmatpush1.bf16.msra.mxu0 %v483
  %1025 = vmatprep.subr.bf16.mxu0 %v512
  %1026 = vmatpush1.bf16.msra.mxu0 %v511
  %1027 = vmatprep.subr.bf16.mxu0 %v540
  %1028 = vmatpush1.bf16.msra.mxu0 %v539
  %1029 = vmatprep.subr.bf16.mxu0 %v568
  %1030 = vmatpush1.bf16.msra.mxu0 %v567
  %1031 = vmatprep.subr.bf16.mxu0 0
  %1032 = vmatpush1.bf16.msra.mxu0 0
  %1033 = vmatprep.subr.bf16.mxu0 0
  %1034 = vmatpush1.bf16.msra.mxu0 0
  %1035 = vmatprep.subr.bf16.mxu0 0
  %1036 = vmatpush1.bf16.msra.mxu0 0
  %1037 = vmatprep.subr.bf16.mxu0 0
  %1038 = vmatpush1.bf16.msra.mxu0 0
  %1039 = vmatprep.subr.bf16.mxu0 0
  %1040 = vmatpush1.bf16.msra.mxu0 0
  %1041 = vmatprep.subr.bf16.mxu0 0
  %1042 = vmatpush1.bf16.msra.mxu0 0
  %1043 = vmatprep.subr.bf16.mxu0 0
  %1044 = vmatpush1.bf16.msra.mxu0 0
  %1045 = vmatprep.subr.bf16.mxu0 0
  %1046 = vmatpush1.bf16.msra.mxu0 0
  %1047 = vmatprep.subr.bf16.mxu0 0
  %1048 = vmatpush1.bf16.msra.mxu0 0
  %1049 = vmatprep.subr.bf16.mxu0 0
  %1050 = vmatpush1.bf16.msra.mxu0 0
  %1051 = vmatprep.subr.bf16.mxu0 0
  %1052 = vmatpush1.bf16.msra.mxu0 0
  %1053 = vmatprep.subr.bf16.mxu0 0
  %1054 = vmatpush1.bf16.msra.mxu0 0
  %1055 = vmatprep.mubr.bf16.mxu0 0
  %1056 = vmatmul.mubr.bf16.gmra.mrb[0].mxu0 %v693
  %v1057 = vpop.f32.mrb[0].mxu0
  %v1058 = vadd.f32 0.0, %v1057
  %v1059 = vpop.f32.mrb[0].mxu0
  %v1060 = vadd.f32 0.0, %v1059
  %v1061 = vpop.f32.mrb[0].mxu0
  %v1062 = vpop.f32.mrb[0].mxu0
  %1063 = vdwg.mxu0
  %1064 = vmatprep.subr.bf16.mxu0 %v486
  %1065 = vmatpush1.bf16.msra.mxu0 %v485
  %1066 = vmatprep.subr.bf16.mxu0 %v514
  %1067 = vmatpush1.bf16.msra.mxu0 %v513
  %1068 = vmatprep.subr.bf16.mxu0 %v542
  %1069 = vmatpush1.bf16.msra.mxu0 %v541
  %1070 = vmatprep.subr.bf16.mxu0 %v570
  %1071 = vmatpush1.bf16.msra.mxu0 %v569
  %1072 = vmatprep.subr.bf16.mxu0 0
  %1073 = vmatpush1.bf16.msra.mxu0 0
  %1074 = vmatprep.subr.bf16.mxu0 0
  %1075 = vmatpush1.bf16.msra.mxu0 0
  %1076 = vmatprep.subr.bf16.mxu0 0
  %1077 = vmatpush1.bf16.msra.mxu0 0
  %1078 = vmatprep.subr.bf16.mxu0 0
  %1079 = vmatpush1.bf16.msra.mxu0 0
  %1080 = vmatprep.subr.bf16.mxu0 0
  %1081 = vmatpush1.bf16.msra.mxu0 0
  %1082 = vmatprep.subr.bf16.mxu0 0
  %1083 = vmatpush1.bf16.msra.mxu0 0
  %1084 = vmatprep.subr.bf16.mxu0 0
  %1085 = vmatpush1.bf16.msra.mxu0 0
  %1086 = vmatprep.subr.bf16.mxu0 0
  %1087 = vmatpush1.bf16.msra.mxu0 0
  %1088 = vmatprep.subr.bf16.mxu0 0
  %1089 = vmatpush1.bf16.msra.mxu0 0
  %1090 = vmatprep.subr.bf16.mxu0 0
  %1091 = vmatpush1.bf16.msra.mxu0 0
  %1092 = vmatprep.subr.bf16.mxu0 0
  %1093 = vmatpush1.bf16.msra.mxu0 0
  %1094 = vmatprep.subr.bf16.mxu0 0
  %1095 = vmatpush1.bf16.msra.mxu0 0
  %1096 = vmatprep.mubr.bf16.mxu0 0
  %1097 = vmatmul.mubr.bf16.gmra.mrb[0].mxu0 %v693
  %v1098 = vpop.f32.mrb[0].mxu0
  %v1099 = vadd.f32 0.0, %v1098
  %v1100 = vpop.f32.mrb[0].mxu0
  %v1101 = vadd.f32 0.0, %v1100
  %v1102 = vpop.f32.mrb[0].mxu0
  %v1103 = vpop.f32.mrb[0].mxu0
  %1104 = vdwg.mxu0
  %1105 = vmatprep.subr.bf16.mxu0 %v488
  %1106 = vmatpush1.bf16.msra.mxu0 %v487
  %1107 = vmatprep.subr.bf16.mxu0 %v516
  %1108 = vmatpush1.bf16.msra.mxu0 %v515
  %1109 = vmatprep.subr.bf16.mxu0 %v544
  %1110 = vmatpush1.bf16.msra.mxu0 %v543
  %1111 = vmatprep.subr.bf16.mxu0 %v572
  %1112 = vmatpush1.bf16.msra.mxu0 %v571
  %1113 = vmatprep.subr.bf16.mxu0 0
  %1114 = vmatpush1.bf16.msra.mxu0 0
  %1115 = vmatprep.subr.bf16.mxu0 0
  %1116 = vmatpush1.bf16.msra.mxu0 0
  %1117 = vmatprep.subr.bf16.mxu0 0
  %1118 = vmatpush1.bf16.msra.mxu0 0
  %1119 = vmatprep.subr.bf16.mxu0 0
  %1120 = vmatpush1.bf16.msra.mxu0 0
  %1121 = vmatprep.subr.bf16.mxu0 0
  %1122 = vmatpush1.bf16.msra.mxu0 0
  %1123 = vmatprep.subr.bf16.mxu0 0
  %1124 = vmatpush1.bf16.msra.mxu0 0
  %1125 = vmatprep.subr.bf16.mxu0 0
  %1126 = vmatpush1.bf16.msra.mxu0 0
  %1127 = vmatprep.subr.bf16.mxu0 0
  %1128 = vmatpush1.bf16.msra.mxu0 0
  %1129 = vmatprep.subr.bf16.mxu0 0
  %1130 = vmatpush1.bf16.msra.mxu0 0
  %1131 = vmatprep.subr.bf16.mxu0 0
  %1132 = vmatpush1.bf16.msra.mxu0 0
  %1133 = vmatprep.subr.bf16.mxu0 0
  %1134 = vmatpush1.bf16.msra.mxu0 0
  %1135 = vmatprep.subr.bf16.mxu0 0
  %1136 = vmatpush1.bf16.msra.mxu0 0
  %1137 = vmatprep.mubr.bf16.mxu0 0
  %1138 = vmatmul.mubr.bf16.gmra.mrb[0].mxu0 %v693
  %v1139 = vpop.f32.mrb[0].mxu0
  %v1140 = vadd.f32 0.0, %v1139
  %v1141 = vpop.f32.mrb[0].mxu0
  %v1142 = vadd.f32 0.0, %v1141
  %v1143 = vpop.f32.mrb[0].mxu0
  %v1144 = vpop.f32.mrb[0].mxu0
  %1145 = vdwg.mxu0
  %1146 = vmatprep.subr.bf16.mxu0 %v490
  %1147 = vmatpush1.bf16.msra.mxu0 %v489
  %1148 = vmatprep.subr.bf16.mxu0 %v518
  %1149 = vmatpush1.bf16.msra.mxu0 %v517
  %1150 = vmatprep.subr.bf16.mxu0 %v546
  %1151 = vmatpush1.bf16.msra.mxu0 %v545
  %1152 = vmatprep.subr.bf16.mxu0 %v574
  %1153 = vmatpush1.bf16.msra.mxu0 %v573
  %1154 = vmatprep.subr.bf16.mxu0 0
  %1155 = vmatpush1.bf16.msra.mxu0 0
  %1156 = vmatprep.subr.bf16.mxu0 0
  %1157 = vmatpush1.bf16.msra.mxu0 0
  %1158 = vmatprep.subr.bf16.mxu0 0
  %1159 = vmatpush1.bf16.msra.mxu0 0
  %1160 = vmatprep.subr.bf16.mxu0 0
  %1161 = vmatpush1.bf16.msra.mxu0 0
  %1162 = vmatprep.subr.bf16.mxu0 0
  %1163 = vmatpush1.bf16.msra.mxu0 0
  %1164 = vmatprep.subr.bf16.mxu0 0
  %1165 = vmatpush1.bf16.msra.mxu0 0
  %1166 = vmatprep.subr.bf16.mxu0 0
  %1167 = vmatpush1.bf16.msra.mxu0 0
  %1168 = vmatprep.subr.bf16.mxu0 0
  %1169 = vmatpush1.bf16.msra.mxu0 0
  %1170 = vmatprep.subr.bf16.mxu0 0
  %1171 = vmatpush1.bf16.msra.mxu0 0
  %1172 = vmatprep.subr.bf16.mxu0 0
  %1173 = vmatpush1.bf16.msra.mxu0 0
  %1174 = vmatprep.subr.bf16.mxu0 0
  %1175 = vmatpush1.bf16.msra.mxu0 0
  %1176 = vmatprep.subr.bf16.mxu0 0
  %1177 = vmatpush1.bf16.msra.mxu0 0
  %1178 = vmatprep.mubr.bf16.mxu0 0
  %1179 = vmatmul.mubr.bf16.gmra.mrb[0].mxu0 %v693
  %v1180 = vpop.f32.mrb[0].mxu0
  %v1181 = vadd.f32 0.0, %v1180
  %v1182 = vpop.f32.mrb[0].mxu0
  %v1183 = vadd.f32 0.0, %v1182
  %v1184 = vpop.f32.mrb[0].mxu0
  %v1185 = vpop.f32.mrb[0].mxu0
  %1186 = vdwg.mxu0
  %1187 = vmatprep.subr.bf16.mxu0 %v492
  %1188 = vmatpush1.bf16.msra.mxu0 %v491
  %1189 = vmatprep.subr.bf16.mxu0 %v520
  %1190 = vmatpush1.bf16.msra.mxu0 %v519
  %1191 = vmatprep.subr.bf16.mxu0 %v548
  %1192 = vmatpush1.bf16.msra.mxu0 %v547
  %1193 = vmatprep.subr.bf16.mxu0 %v576
  %1194 = vmatpush1.bf16.msra.mxu0 %v575
  %1195 = vmatprep.subr.bf16.mxu0 0
  %1196 = vmatpush1.bf16.msra.mxu0 0
  %1197 = vmatprep.subr.bf16.mxu0 0
  %1198 = vmatpush1.bf16.msra.mxu0 0
  %1199 = vmatprep.subr.bf16.mxu0 0
  %1200 = vmatpush1.bf16.msra.mxu0 0
  %1201 = vmatprep.subr.bf16.mxu0 0
  %1202 = vmatpush1.bf16.msra.mxu0 0
  %1203 = vmatprep.subr.bf16.mxu0 0
  %1204 = vmatpush1.bf16.msra.mxu0 0
  %1205 = vmatprep.subr.bf16.mxu0 0
  %1206 = vmatpush1.bf16.msra.mxu0 0
  %1207 = vmatprep.subr.bf16.mxu0 0
  %1208 = vmatpush1.bf16.msra.mxu0 0
  %1209 = vmatprep.subr.bf16.mxu0 0
  %1210 = vmatpush1.bf16.msra.mxu0 0
  %1211 = vmatprep.subr.bf16.mxu0 0
  %1212 = vmatpush1.bf16.msra.mxu0 0
  %1213 = vmatprep.subr.bf16.mxu0 0
  %1214 = vmatpush1.bf16.msra.mxu0 0
  %1215 = vmatprep.subr.bf16.mxu0 0
  %1216 = vmatpush1.bf16.msra.mxu0 0
  %1217 = vmatprep.subr.bf16.mxu0 0
  %1218 = vmatpush1.bf16.msra.mxu0 0
  %1219 = vmatprep.mubr.bf16.mxu0 0
  %1220 = vmatmul.mubr.bf16.gmra.mrb[0].mxu0 %v693
  %v1221 = vpop.f32.mrb[0].mxu0
  %v1222 = vadd.f32 0.0, %v1221
  %v1223 = vpop.f32.mrb[0].mxu0
  %v1224 = vadd.f32 0.0, %v1223
  %v1225 = vpop.f32.mrb[0].mxu0
  %v1226 = vpop.f32.mrb[0].mxu0
  %1227 = vdwg.mxu0
  %1228 = vmatprep.subr.bf16.mxu0 %v494
  %1229 = vmatpush1.bf16.msra.mxu0 %v493
  %1230 = vmatprep.subr.bf16.mxu0 %v522
  %1231 = vmatpush1.bf16.msra.mxu0 %v521
  %1232 = vmatprep.subr.bf16.mxu0 %v550
  %1233 = vmatpush1.bf16.msra.mxu0 %v549
  %1234 = vmatprep.subr.bf16.mxu0 %v578
  %1235 = vmatpush1.bf16.msra.mxu0 %v577
  %1236 = vmatprep.subr.bf16.mxu0 0
  %1237 = vmatpush1.bf16.msra.mxu0 0
  %1238 = vmatprep.subr.bf16.mxu0 0
  %1239 = vmatpush1.bf16.msra.mxu0 0
  %1240 = vmatprep.subr.bf16.mxu0 0
  %1241 = vmatpush1.bf16.msra.mxu0 0
  %1242 = vmatprep.subr.bf16.mxu0 0
  %1243 = vmatpush1.bf16.msra.mxu0 0
  %1244 = vmatprep.subr.bf16.mxu0 0
  %1245 = vmatpush1.bf16.msra.mxu0 0
  %1246 = vmatprep.subr.bf16.mxu0 0
  %1247 = vmatpush1.bf16.msra.mxu0 0
  %1248 = vmatprep.subr.bf16.mxu0 0
  %1249 = vmatpush1.bf16.msra.mxu0 0
  %1250 = vmatprep.subr.bf16.mxu0 0
  %1251 = vmatpush1.bf16.msra.mxu0 0
  %1252 = vmatprep.subr.bf16.mxu0 0
  %1253 = vmatpush1.bf16.msra.mxu0 0
  %1254 = vmatprep.subr.bf16.mxu0 0
  %1255 = vmatpush1.bf16.msra.mxu0 0
  %1256 = vmatprep.subr.bf16.mxu0 0
  %1257 = vmatpush1.bf16.msra.mxu0 0
  %1258 = vmatprep.subr.bf16.mxu0 0
  %1259 = vmatpush1.bf16.msra.mxu0 0
  %1260 = vmatprep.mubr.bf16.mxu0 0
  %1261 = vmatmul.mubr.bf16.gmra.mrb[0].mxu0 %v693
  %v1262 = vpop.f32.mrb[0].mxu0
  %v1263 = vadd.f32 0.0, %v1262
  %v1264 = vpop.f32.mrb[0].mxu0
  %v1265 = vadd.f32 0.0, %v1264
  %v1266 = vpop.f32.mrb[0].mxu0
  %v1267 = vpop.f32.mrb[0].mxu0
  %1268 = vdwg.mxu0
  %v1269 = vmax.f32 %v730, 0.0
  %v1270 = vmax.f32 %v732, 0.0
  %v1271 = vmax.f32 %v771, 0.0
  %v1272 = vmax.f32 %v773, 0.0
  %v1273 = vmax.f32 %v812, 0.0
  %v1274 = vmax.f32 %v814, 0.0
  %v1275 = vmax.f32 %v853, 0.0
  %v1276 = vmax.f32 %v855, 0.0
  %v1277 = vmax.f32 %v894, 0.0
  %v1278 = vmax.f32 %v896, 0.0
  %v1279 = vmax.f32 %v935, 0.0
  %v1280 = vmax.f32 %v937, 0.0
  %v1281 = vmax.f32 %v976, 0.0
  %v1282 = vmax.f32 %v978, 0.0
  %v1283 = vmax.f32 %v1017, 0.0
  %v1284 = vmax.f32 %v1019, 0.0
  %v1285 = vmax.f32 %v1058, 0.0
  %v1286 = vmax.f32 %v1060, 0.0
  %v1287 = vmax.f32 %v1099, 0.0
  %v1288 = vmax.f32 %v1101, 0.0
  %v1289 = vmax.f32 %v1140, 0.0
  %v1290 = vmax.f32 %v1142, 0.0
  %v1291 = vmax.f32 %v1181, 0.0
  %v1292 = vmax.f32 %v1183, 0.0
  %v1293 = vmax.f32 %v1222, 0.0
  %v1294 = vmax.f32 %v1224, 0.0
  %v1295 = vmax.f32 %v1263, 0.0
  %v1296 = vmax.f32 %v1265, 0.0
  %v1325 = vcombine.low %v1269, %v1270
  %v1326 = vcombine.low %v1271, %v1272
  %v1327 = vcombine.low %v1273, %v1274
  %v1328 = vcombine.low %v1275, %v1276
  %v1330 = vunpack.c.l.s4 1966171168
  %v1331 = vunpack.c.0.s8 %v1330
  %v1332 = vlaneseq
  %v1333 = vshrl.u32 %v1332, 7
  %v1334 = vsub.s32 %v1331, %v1333
  %v1335 = vrot.slane %v1325, %v1334
  %v1337 = vunpack.c.l.s4 1966171168
  %v1338 = vunpack.c.0.s8 %v1337
  %v1339 = vlaneseq
  %v1340 = vshrl.u32 %v1339, 7
  %v1341 = vsub.s32 %v1338, %v1340
  %v1342 = vrot.slane %v1326, %v1341
  %v1344 = vunpack.c.l.s4 1966171168
  %v1345 = vunpack.c.0.s8 %v1344
  %v1346 = vlaneseq
  %v1347 = vshrl.u32 %v1346, 7
  %v1348 = vsub.s32 %v1345, %v1347
  %v1349 = vrot.slane %v1327, %v1348
  %v1351 = vunpack.c.l.s4 1966171168
  %v1352 = vunpack.c.0.s8 %v1351
  %v1353 = vlaneseq
  %v1354 = vshrl.u32 %v1353, 7
  %v1355 = vsub.s32 %v1352, %v1354
  %v1356 = vrot.slane %v1328, %v1355
  %v1357 = vcombine.low %v1335, %v1342
  %v1358 = vcombine.low %v1349, %v1356
  %v1360 = vunpack.c.l.s4 1966171168
  %v1361 = vunpack.c.0.s8 %v1360
  %v1362 = vlaneseq
  %v1363 = vshrl.u32 %v1362, 7
  %v1364 = vsub.s32 %v1361, %v1363
  %v1365 = vrot.slane %v1357, %v1364
  %v1367 = vunpack.c.l.s4 1966171168
  %v1368 = vunpack.c.0.s8 %v1367
  %v1369 = vlaneseq
  %v1370 = vshrl.u32 %v1369, 7
  %v1371 = vsub.s32 %v1368, %v1370
  %v1372 = vrot.slane %v1358, %v1371
  %v1373 = vcombine.low %v1365, %v1372
  %v1374 = vcombine.low %v1277, %v1278
  %v1375 = vcombine.low %v1279, %v1280
  %v1376 = vcombine.low %v1281, %v1282
  %v1377 = vcombine.low %v1283, %v1284
  %v1379 = vunpack.c.l.s4 1966171168
  %v1380 = vunpack.c.0.s8 %v1379
  %v1381 = vlaneseq
  %v1382 = vshrl.u32 %v1381, 7
  %v1383 = vsub.s32 %v1380, %v1382
  %v1384 = vrot.slane %v1374, %v1383
  %v1386 = vunpack.c.l.s4 1966171168
  %v1387 = vunpack.c.0.s8 %v1386
  %v1388 = vlaneseq
  %v1389 = vshrl.u32 %v1388, 7
  %v1390 = vsub.s32 %v1387, %v1389
  %v1391 = vrot.slane %v1375, %v1390
  %v1393 = vunpack.c.l.s4 1966171168
  %v1394 = vunpack.c.0.s8 %v1393
  %v1395 = vlaneseq
  %v1396 = vshrl.u32 %v1395, 7
  %v1397 = vsub.s32 %v1394, %v1396
  %v1398 = vrot.slane %v1376, %v1397
  %v1400 = vunpack.c.l.s4 1966171168
  %v1401 = vunpack.c.0.s8 %v1400
  %v1402 = vlaneseq
  %v1403 = vshrl.u32 %v1402, 7
  %v1404 = vsub.s32 %v1401, %v1403
  %v1405 = vrot.slane %v1377, %v1404
  %v1406 = vcombine.low %v1384, %v1391
  %v1407 = vcombine.low %v1398, %v1405
  %v1409 = vunpack.c.l.s4 1966171168
  %v1410 = vunpack.c.0.s8 %v1409
  %v1411 = vlaneseq
  %v1412 = vshrl.u32 %v1411, 7
  %v1413 = vsub.s32 %v1410, %v1412
  %v1414 = vrot.slane %v1406, %v1413
  %v1416 = vunpack.c.l.s4 1966171168
  %v1417 = vunpack.c.0.s8 %v1416
  %v1418 = vlaneseq
  %v1419 = vshrl.u32 %v1418, 7
  %v1420 = vsub.s32 %v1417, %v1419
  %v1421 = vrot.slane %v1407, %v1420
  %v1422 = vcombine.low %v1414, %v1421
  %v1423 = vcombine.low %v1285, %v1286
  %v1424 = vcombine.low %v1287, %v1288
  %v1425 = vcombine.low %v1289, %v1290
  %v1426 = vcombine.low %v1291, %v1292
  %v1428 = vunpack.c.l.s4 1966171168
  %v1429 = vunpack.c.0.s8 %v1428
  %v1430 = vlaneseq
  %v1431 = vshrl.u32 %v1430, 7
  %v1432 = vsub.s32 %v1429, %v1431
  %v1433 = vrot.slane %v1423, %v1432
  %v1435 = vunpack.c.l.s4 1966171168
  %v1436 = vunpack.c.0.s8 %v1435
  %v1437 = vlaneseq
  %v1438 = vshrl.u32 %v1437, 7
  %v1439 = vsub.s32 %v1436, %v1438
  %v1440 = vrot.slane %v1424, %v1439
  %v1442 = vunpack.c.l.s4 1966171168
  %v1443 = vunpack.c.0.s8 %v1442
  %v1444 = vlaneseq
  %v1445 = vshrl.u32 %v1444, 7
  %v1446 = vsub.s32 %v1443, %v1445
  %v1447 = vrot.slane %v1425, %v1446
  %v1449 = vunpack.c.l.s4 1966171168
  %v1450 = vunpack.c.0.s8 %v1449
  %v1451 = vlaneseq
  %v1452 = vshrl.u32 %v1451, 7
  %v1453 = vsub.s32 %v1450, %v1452
  %v1454 = vrot.slane %v1426, %v1453
  %v1455 = vcombine.low %v1433, %v1440
  %v1456 = vcombine.low %v1447, %v1454
  %v1458 = vunpack.c.l.s4 1966171168
  %v1459 = vunpack.c.0.s8 %v1458
  %v1460 = vlaneseq
  %v1461 = vshrl.u32 %v1460, 7
  %v1462 = vsub.s32 %v1459, %v1461
  %v1463 = vrot.slane %v1455, %v1462
  %v1465 = vunpack.c.l.s4 1966171168
  %v1466 = vunpack.c.0.s8 %v1465
  %v1467 = vlaneseq
  %v1468 = vshrl.u32 %v1467, 7
  %v1469 = vsub.s32 %v1466, %v1468
  %v1470 = vrot.slane %v1456, %v1469
  %v1471 = vcombine.low %v1463, %v1470
  %v1472 = vcombine.low %v1293, %v1294
  %v1473 = vcombine.low %v1295, %v1296
  %v1475 = vunpack.c.l.s4 1966171168
  %v1476 = vunpack.c.0.s8 %v1475
  %v1477 = vlaneseq
  %v1478 = vshrl.u32 %v1477, 7
  %v1479 = vsub.s32 %v1476, %v1478
  %v1480 = vrot.slane %v1472, %v1479
  %v1482 = vunpack.c.l.s4 1966171168
  %v1483 = vunpack.c.0.s8 %v1482
  %v1484 = vlaneseq
  %v1485 = vshrl.u32 %v1484, 7
  %v1486 = vsub.s32 %v1483, %v1485
  %v1487 = vrot.slane %v1473, %v1486
  %v1488 = vcombine.low %v1480, %v1487
  %v1490 = vunpack.c.l.s4 1966171168
  %v1491 = vunpack.c.0.s8 %v1490
  %v1492 = vlaneseq
  %v1493 = vshrl.u32 %v1492, 7
  %v1494 = vsub.s32 %v1491, %v1493
  %v1495 = vrot.slane %v1488, %v1494
  %1500 = vst [vmem:[#allocation2] ss:$8 sm:$0xf] %v1373
  %1501 = vst [vmem:[#allocation2] ss:$8 sm:$0xf0] %v1373
  %s1502 = scalar_lea.vmem [#allocation2], 64
  %1503 = vst [vmem:[%s1502] ss:$8 sm:$0xf] %v1422
  %1504 = vst [vmem:[%s1502] ss:$8 sm:$0xf0] %v1422
  %s1505 = scalar_lea.vmem [#allocation2], 128
  %1506 = vst [vmem:[%s1505] ss:$8 sm:$0xf] %v1471
  %1507 = vst [vmem:[%s1505] ss:$8 sm:$0xf0] %v1471
  %v1508 = vlaneseq
  %vm1509 = vcmp.ge.s32.totalorder %v1508, 0
  %vm1510 = vcmp.lt.s32.totalorder %v1508, 512
  %vm1511 = vmand %vm1509, %vm1510
  %s1512 = scalar_lea.vmem [#allocation2], 192
  %1513 = vst.msk [vmem:[%s1512] ss:$8 sm:$0xf] %vm1511, %v1495
  %1514 = vst.msk [vmem:[%s1512] ss:$8 sm:$0x0] %vm1511, %v1495
  %v1515 = vcombine.high %v1335, %v1342
  %v1516 = vcombine.high %v1349, %v1356
  %v1518 = vunpack.c.l.s4 1966171168
  %v1519 = vunpack.c.0.s8 %v1518
  %v1520 = vlaneseq
  %v1521 = vshrl.u32 %v1520, 7
  %v1522 = vsub.s32 %v1519, %v1521
  %v1523 = vrot.slane %v1515, %v1522
  %v1525 = vunpack.c.l.s4 1966171168
  %v1526 = vunpack.c.0.s8 %v1525
  %v1527 = vlaneseq
  %v1528 = vshrl.u32 %v1527, 7
  %v1529 = vsub.s32 %v1526, %v1528
  %v1530 = vrot.slane %v1516, %v1529
  %v1531 = vcombine.low %v1523, %v1530
  %v1532 = vcombine.high %v1384, %v1391
  %v1533 = vcombine.high %v1398, %v1405
  %v1535 = vunpack.c.l.s4 1966171168
  %v1536 = vunpack.c.0.s8 %v1535
  %v1537 = vlaneseq
  %v1538 = vshrl.u32 %v1537, 7
  %v1539 = vsub.s32 %v1536, %v1538
  %v1540 = vrot.slane %v1532, %v1539
  %v1542 = vunpack.c.l.s4 1966171168
  %v1543 = vunpack.c.0.s8 %v1542
  %v1544 = vlaneseq
  %v1545 = vshrl.u32 %v1544, 7
  %v1546 = vsub.s32 %v1543, %v1545
  %v1547 = vrot.slane %v1533, %v1546
  %v1548 = vcombine.low %v1540, %v1547
  %v1549 = vcombine.high %v1433, %v1440
  %v1550 = vcombine.high %v1447, %v1454
  %v1552 = vunpack.c.l.s4 1966171168
  %v1553 = vunpack.c.0.s8 %v1552
  %v1554 = vlaneseq
  %v1555 = vshrl.u32 %v1554, 7
  %v1556 = vsub.s32 %v1553, %v1555
  %v1557 = vrot.slane %v1549, %v1556
  %v1559 = vunpack.c.l.s4 1966171168
  %v1560 = vunpack.c.0.s8 %v1559
  %v1561 = vlaneseq
  %v1562 = vshrl.u32 %v1561, 7
  %v1563 = vsub.s32 %v1560, %v1562
  %v1564 = vrot.slane %v1550, %v1563
  %v1565 = vcombine.low %v1557, %v1564
  %v1566 = vcombine.high %v1480, %v1487
  %v1568 = vunpack.c.l.s4 1966171168
  %v1569 = vunpack.c.0.s8 %v1568
  %v1570 = vlaneseq
  %v1571 = vshrl.u32 %v1570, 7
  %v1572 = vsub.s32 %v1569, %v1571
  %v1573 = vrot.slane %v1566, %v1572
  %s1578 = scalar_lea.vmem [#allocation2], 224
  %1579 = vst [vmem:[%s1578] ss:$8 sm:$0xf] %v1531
  %1580 = vst [vmem:[%s1578] ss:$8 sm:$0xf0] %v1531
  %s1581 = scalar_lea.vmem [#allocation2], 288
  %1582 = vst [vmem:[%s1581] ss:$8 sm:$0xf] %v1548
  %1583 = vst [vmem:[%s1581] ss:$8 sm:$0xf0] %v1548
  %s1584 = scalar_lea.vmem [#allocation2], 352
  %1585 = vst [vmem:[%s1584] ss:$8 sm:$0xf] %v1565
  %1586 = vst [vmem:[%s1584] ss:$8 sm:$0xf0] %v1565
  %s1587 = scalar_lea.vmem [#allocation2], 416
  %1588 = vst.msk [vmem:[%s1587] ss:$8 sm:$0xf] %vm1511, %v1573
  %1589 = vst.msk [vmem:[%s1587] ss:$8 sm:$0x0] %vm1511, %v1573
  %v1590 = vcombine.high %v1365, %v1372
  %v1591 = vcombine.high %v1414, %v1421
  %v1592 = vcombine.high %v1463, %v1470
  %v1593 = vcombine.high %v1495, %v1495
  %s1598 = scalar_lea.vmem [#allocation2], 448
  %1599 = vst [vmem:[%s1598] ss:$8 sm:$0xf] %v1590
  %1600 = vst [vmem:[%s1598] ss:$8 sm:$0xf0] %v1590
  %s1601 = scalar_lea.vmem [#allocation2], 512
  %1602 = vst [vmem:[%s1601] ss:$8 sm:$0xf] %v1591
  %1603 = vst [vmem:[%s1601] ss:$8 sm:$0xf0] %v1591
  %s1604 = scalar_lea.vmem [#allocation2], 576
  %1605 = vst [vmem:[%s1604] ss:$8 sm:$0xf] %v1592
  %1606 = vst [vmem:[%s1604] ss:$8 sm:$0xf0] %v1592
  %s1607 = scalar_lea.vmem [#allocation2], 640
  %1608 = vst.msk [vmem:[%s1607] ss:$8 sm:$0xf] %vm1511, %v1593
  %1609 = vst.msk [vmem:[%s1607] ss:$8 sm:$0x0] %vm1511, %v1593
  %v1610 = vcombine.high %v1523, %v1530
  %v1611 = vcombine.high %v1540, %v1547
  %v1612 = vcombine.high %v1557, %v1564
  %v1613 = vcombine.high %v1573, %v1573
  %s1618 = scalar_lea.vmem [#allocation2], 672
  %1619 = vst [vmem:[%s1618] ss:$8 sm:$0xf] %v1610
  %1620 = vst [vmem:[%s1618] ss:$8 sm:$0xf0] %v1610
  %s1621 = scalar_lea.vmem [#allocation2], 736
  %1622 = vst [vmem:[%s1621] ss:$8 sm:$0xf] %v1611
  %1623 = vst [vmem:[%s1621] ss:$8 sm:$0xf0] %v1611
  %s1624 = scalar_lea.vmem [#allocation2], 800
  %1625 = vst [vmem:[%s1624] ss:$8 sm:$0xf] %v1612
  %1626 = vst [vmem:[%s1624] ss:$8 sm:$0xf0] %v1612
  %s1627 = scalar_lea.vmem [#allocation2], 864
  %1628 = vst.msk [vmem:[%s1627] ss:$8 sm:$0xf] %vm1511, %v1613
  %1629 = vst.msk [vmem:[%s1627] ss:$8 sm:$0x0] %vm1511, %v1613
  %s1630 = scalar_lea.vmem %s0, 896
  %v1631 = vld [vmem:[%s1630] sm:$0xff]
  %v1632 = vld [vmem:[%s1630 + $0x8] sm:$0xff]
  %v1633 = vld [vmem:[%s1630 + $0x10] sm:$0xff]
  %v1634 = vld [vmem:[%s1630 + $0x18] sm:$0xff]
  %v1635 = vld [vmem:[%s1630 + $0x20] sm:$0xff]
  %v1636 = vld [vmem:[%s1630 + $0x28] sm:$0xff]
  %v1637 = vld [vmem:[%s1630 + $0x30] sm:$0xff]
  %v1638 = vld [vmem:[%s1630 + $0x38] sm:$0xff]
  %v1639 = vld [vmem:[%s1630 + $0x40] sm:$0xff]
  %v1640 = vld [vmem:[%s1630 + $0x48] sm:$0xff]
  %v1641 = vld [vmem:[%s1630 + $0x50] sm:$0xff]
  %v1642 = vld [vmem:[%s1630 + $0x58] sm:$0xff]
  %v1643 = vld [vmem:[%s1630 + $0x60] sm:$0xff]
  %v1644 = vld [vmem:[%s1630 + $0x68] sm:$0xff]
  %v1645 = vld [vmem:[%s1630 + $0x70] sm:$0xff]
  %v1646 = vld [vmem:[%s1630 + $0x78] sm:$0xff]
  %v1647 = vld [vmem:[%s1630 + $0x80] sm:$0xff]
  %v1648 = vld [vmem:[%s1630 + $0x88] sm:$0xff]
  %v1649 = vld [vmem:[%s1630 + $0x90] sm:$0xff]
  %v1650 = vld [vmem:[%s1630 + $0x98] sm:$0xff]
  %v1651 = vld [vmem:[%s1630 + $0xa0] sm:$0xff]
  %v1652 = vld [vmem:[%s1630 + $0xa8] sm:$0xff]
  %v1653 = vld [vmem:[%s1630 + $0xb0] sm:$0xff]
  %v1654 = vld [vmem:[%s1630 + $0xb8] sm:$0xff]
  %v1655 = vld [vmem:[%s1630 + $0xc0] sm:$0xff]
  %v1656 = vld [vmem:[%s1630 + $0xc8] sm:$0xff]
  %v1657 = vld [vmem:[%s1630 + $0xd0] sm:$0xff]
  %v1658 = vld [vmem:[%s1630 + $0xd8] sm:$0xff]
  %v1659 = vld [vmem:[%s1630 + $0xe0] sm:$0xff]
  %v1660 = vld [vmem:[%s1630 + $0xe8] sm:$0xff]
  %v1661 = vld [vmem:[%s1630 + $0xf0] sm:$0xff]
  %v1662 = vld [vmem:[%s1630 + $0xf8] sm:$0xff]
  %v1663 = vld [vmem:[%s1630 + $0x100] sm:$0xff]
  %v1664 = vld [vmem:[%s1630 + $0x108] sm:$0xff]
  %v1665 = vld [vmem:[%s1630 + $0x110] sm:$0xff]
  %v1666 = vld [vmem:[%s1630 + $0x118] sm:$0xff]
  %v1667 = vld [vmem:[%s1630 + $0x120] sm:$0xff]
  %v1668 = vld [vmem:[%s1630 + $0x128] sm:$0xff]
  %v1669 = vld [vmem:[%s1630 + $0x130] sm:$0xff]
  %v1670 = vld [vmem:[%s1630 + $0x138] sm:$0xff]
  %v1671 = vld [vmem:[%s1630 + $0x140] sm:$0xff]
  %v1672 = vld [vmem:[%s1630 + $0x148] sm:$0xff]
  %v1673 = vld [vmem:[%s1630 + $0x150] sm:$0xff]
  %v1674 = vld [vmem:[%s1630 + $0x158] sm:$0xff]
  %v1675 = vld [vmem:[%s1630 + $0x160] sm:$0xff]
  %v1676 = vld [vmem:[%s1630 + $0x168] sm:$0xff]
  %v1677 = vld [vmem:[%s1630 + $0x170] sm:$0xff]
  %v1678 = vld [vmem:[%s1630 + $0x178] sm:$0xff]
  %v1679 = vld [vmem:[%s1630 + $0x180] sm:$0xff]
  %v1680 = vld [vmem:[%s1630 + $0x188] sm:$0xff]
  %v1681 = vld [vmem:[%s1630 + $0x190] sm:$0xff]
  %v1682 = vld [vmem:[%s1630 + $0x198] sm:$0xff]
  %v1683 = vld [vmem:[%s1630 + $0x1a0] sm:$0xff]
  %v1684 = vld [vmem:[%s1630 + $0x1a8] sm:$0xff]
  %v1685 = vld [vmem:[%s1630 + $0x1b0] sm:$0xff]
  %v1686 = vld [vmem:[%s1630 + $0x1b8] sm:$0xff]
  %v1687 = vld [vmem:[%s1630 + $0x1c0] sm:$0xff]
  %v1688 = vld [vmem:[%s1630 + $0x1c8] sm:$0xff]
  %v1689 = vld [vmem:[%s1630 + $0x1d0] sm:$0xff]
  %v1690 = vld [vmem:[%s1630 + $0x1d8] sm:$0xff]
  %v1691 = vld [vmem:[%s1630 + $0x1e0] sm:$0xff]
  %v1692 = vld [vmem:[%s1630 + $0x1e8] sm:$0xff]
  %v1693 = vld [vmem:[%s1630 + $0x1f0] sm:$0xff]
  %v1694 = vld [vmem:[%s1630 + $0x1f8] sm:$0xff]
  %v1695 = vld [vmem:[%s1630 + $0x200] sm:$0xff]
  %v1696 = vld [vmem:[%s1630 + $0x208] sm:$0xff]
  %v1697 = vld [vmem:[%s1630 + $0x210] sm:$0xff]
  %v1698 = vld [vmem:[%s1630 + $0x218] sm:$0xff]
  %v1699 = vld [vmem:[%s1630 + $0x220] sm:$0xff]
  %v1700 = vld [vmem:[%s1630 + $0x228] sm:$0xff]
  %v1701 = vld [vmem:[%s1630 + $0x230] sm:$0xff]
  %v1702 = vld [vmem:[%s1630 + $0x238] sm:$0xff]
  %v1703 = vld [vmem:[%s1630 + $0x240] sm:$0xff]
  %v1704 = vld [vmem:[%s1630 + $0x248] sm:$0xff]
  %v1705 = vld [vmem:[%s1630 + $0x250] sm:$0xff]
  %v1706 = vld [vmem:[%s1630 + $0x258] sm:$0xff]
  %v1707 = vld [vmem:[%s1630 + $0x260] sm:$0xff]
  %v1708 = vld [vmem:[%s1630 + $0x268] sm:$0xff]
  %v1709 = vld [vmem:[%s1630 + $0x270] sm:$0xff]
  %v1710 = vld [vmem:[%s1630 + $0x278] sm:$0xff]
  %v1711 = vld [vmem:[%s1630 + $0x280] sm:$0xff]
  %v1712 = vld [vmem:[%s1630 + $0x288] sm:$0xff]
  %v1713 = vld [vmem:[%s1630 + $0x290] sm:$0xff]
  %v1714 = vld [vmem:[%s1630 + $0x298] sm:$0xff]
  %v1715 = vld [vmem:[%s1630 + $0x2a0] sm:$0xff]
  %v1716 = vld [vmem:[%s1630 + $0x2a8] sm:$0xff]
  %v1717 = vld [vmem:[%s1630 + $0x2b0] sm:$0xff]
  %v1718 = vld [vmem:[%s1630 + $0x2b8] sm:$0xff]
  %v1719 = vld [vmem:[%s1630 + $0x2c0] sm:$0xff]
  %v1720 = vld [vmem:[%s1630 + $0x2c8] sm:$0xff]
  %v1721 = vld [vmem:[%s1630 + $0x2d0] sm:$0xff]
  %v1722 = vld [vmem:[%s1630 + $0x2d8] sm:$0xff]
  %v1723 = vld [vmem:[%s1630 + $0x2e0] sm:$0xff]
  %v1724 = vld [vmem:[%s1630 + $0x2e8] sm:$0xff]
  %v1725 = vld [vmem:[%s1630 + $0x2f0] sm:$0xff]
  %v1726 = vld [vmem:[%s1630 + $0x2f8] sm:$0xff]
  %v1727 = vld [vmem:[%s1630 + $0x300] sm:$0xff]
  %v1728 = vld [vmem:[%s1630 + $0x308] sm:$0xff]
  %v1729 = vld [vmem:[%s1630 + $0x310] sm:$0xff]
  %v1730 = vld [vmem:[%s1630 + $0x318] sm:$0xff]
  %v1731 = vld [vmem:[%s1630 + $0x320] sm:$0xff]
  %v1732 = vld [vmem:[%s1630 + $0x328] sm:$0xff]
  %v1733 = vld [vmem:[%s1630 + $0x330] sm:$0xff]
  %v1734 = vld [vmem:[%s1630 + $0x338] sm:$0xff]
  %v1735 = vld [vmem:[%s1630 + $0x340] sm:$0xff]
  %v1736 = vld [vmem:[%s1630 + $0x348] sm:$0xff]
  %v1737 = vld [vmem:[%s1630 + $0x350] sm:$0xff]
  %v1738 = vld [vmem:[%s1630 + $0x358] sm:$0xff]
  %v1739 = vld [vmem:[%s1630 + $0x360] sm:$0xff]
  %v1740 = vld [vmem:[%s1630 + $0x368] sm:$0xff]
  %v1741 = vld [vmem:[%s1630 + $0x370] sm:$0xff]
  %v1742 = vld [vmem:[%s1630 + $0x378] sm:$0xff]
  %v1855 = vunpack.c.l.b16 %v1631
  %v1856 = vunpack.c.h.b16 %v1631
  %v1857 = vunpack.c.l.b16 %v1632
  %v1858 = vunpack.c.h.b16 %v1632
  %v1859 = vunpack.c.l.b16 %v1633
  %v1860 = vunpack.c.h.b16 %v1633
  %v1861 = vunpack.c.l.b16 %v1634
  %v1862 = vunpack.c.h.b16 %v1634
  %v1863 = vunpack.c.l.b16 %v1635
  %v1864 = vunpack.c.h.b16 %v1635
  %v1865 = vunpack.c.l.b16 %v1636
  %v1866 = vunpack.c.h.b16 %v1636
  %v1867 = vunpack.c.l.b16 %v1637
  %v1868 = vunpack.c.h.b16 %v1637
  %v1869 = vunpack.c.l.b16 %v1638
  %v1870 = vunpack.c.h.b16 %v1638
  %v1871 = vunpack.c.l.b16 %v1639
  %v1872 = vunpack.c.h.b16 %v1639
  %v1873 = vunpack.c.l.b16 %v1640
  %v1874 = vunpack.c.h.b16 %v1640
  %v1875 = vunpack.c.l.b16 %v1641
  %v1876 = vunpack.c.h.b16 %v1641
  %v1877 = vunpack.c.l.b16 %v1642
  %v1878 = vunpack.c.h.b16 %v1642
  %v1879 = vunpack.c.l.b16 %v1643
  %v1880 = vunpack.c.h.b16 %v1643
  %v1881 = vunpack.c.l.b16 %v1644
  %v1882 = vunpack.c.h.b16 %v1644
  %v1883 = vunpack.c.l.b16 %v1645
  %v1884 = vunpack.c.h.b16 %v1645
  %v1885 = vunpack.c.l.b16 %v1646
  %v1886 = vunpack.c.h.b16 %v1646
  %v1887 = vunpack.c.l.b16 %v1647
  %v1888 = vunpack.c.h.b16 %v1647
  %v1889 = vunpack.c.l.b16 %v1648
  %v1890 = vunpack.c.h.b16 %v1648
  %v1891 = vunpack.c.l.b16 %v1649
  %v1892 = vunpack.c.h.b16 %v1649
  %v1893 = vunpack.c.l.b16 %v1650
  %v1894 = vunpack.c.h.b16 %v1650
  %v1895 = vunpack.c.l.b16 %v1651
  %v1896 = vunpack.c.h.b16 %v1651
  %v1897 = vunpack.c.l.b16 %v1652
  %v1898 = vunpack.c.h.b16 %v1652
  %v1899 = vunpack.c.l.b16 %v1653
  %v1900 = vunpack.c.h.b16 %v1653
  %v1901 = vunpack.c.l.b16 %v1654
  %v1902 = vunpack.c.h.b16 %v1654
  %v1903 = vunpack.c.l.b16 %v1655
  %v1904 = vunpack.c.h.b16 %v1655
  %v1905 = vunpack.c.l.b16 %v1656
  %v1906 = vunpack.c.h.b16 %v1656
  %v1907 = vunpack.c.l.b16 %v1657
  %v1908 = vunpack.c.h.b16 %v1657
  %v1909 = vunpack.c.l.b16 %v1658
  %v1910 = vunpack.c.h.b16 %v1658
  %v1911 = vunpack.c.l.b16 %v1659
  %v1912 = vunpack.c.h.b16 %v1659
  %v1913 = vunpack.c.l.b16 %v1660
  %v1914 = vunpack.c.h.b16 %v1660
  %v1915 = vunpack.c.l.b16 %v1661
  %v1916 = vunpack.c.h.b16 %v1661
  %v1917 = vunpack.c.l.b16 %v1662
  %v1918 = vunpack.c.h.b16 %v1662
  %v1919 = vunpack.c.l.b16 %v1663
  %v1920 = vunpack.c.h.b16 %v1663
  %v1921 = vunpack.c.l.b16 %v1664
  %v1922 = vunpack.c.h.b16 %v1664
  %v1923 = vunpack.c.l.b16 %v1665
  %v1924 = vunpack.c.h.b16 %v1665
  %v1925 = vunpack.c.l.b16 %v1666
  %v1926 = vunpack.c.h.b16 %v1666
  %v1927 = vunpack.c.l.b16 %v1667
  %v1928 = vunpack.c.h.b16 %v1667
  %v1929 = vunpack.c.l.b16 %v1668
  %v1930 = vunpack.c.h.b16 %v1668
  %v1931 = vunpack.c.l.b16 %v1669
  %v1932 = vunpack.c.h.b16 %v1669
  %v1933 = vunpack.c.l.b16 %v1670
  %v1934 = vunpack.c.h.b16 %v1670
  %v1935 = vunpack.c.l.b16 %v1671
  %v1936 = vunpack.c.h.b16 %v1671
  %v1937 = vunpack.c.l.b16 %v1672
  %v1938 = vunpack.c.h.b16 %v1672
  %v1939 = vunpack.c.l.b16 %v1673
  %v1940 = vunpack.c.h.b16 %v1673
  %v1941 = vunpack.c.l.b16 %v1674
  %v1942 = vunpack.c.h.b16 %v1674
  %v1943 = vunpack.c.l.b16 %v1675
  %v1944 = vunpack.c.h.b16 %v1675
  %v1945 = vunpack.c.l.b16 %v1676
  %v1946 = vunpack.c.h.b16 %v1676
  %v1947 = vunpack.c.l.b16 %v1677
  %v1948 = vunpack.c.h.b16 %v1677
  %v1949 = vunpack.c.l.b16 %v1678
  %v1950 = vunpack.c.h.b16 %v1678
  %v1951 = vunpack.c.l.b16 %v1679
  %v1952 = vunpack.c.h.b16 %v1679
  %v1953 = vunpack.c.l.b16 %v1680
  %v1954 = vunpack.c.h.b16 %v1680
  %v1955 = vunpack.c.l.b16 %v1681
  %v1956 = vunpack.c.h.b16 %v1681
  %v1957 = vunpack.c.l.b16 %v1682
  %v1958 = vunpack.c.h.b16 %v1682
  %v1959 = vunpack.c.l.b16 %v1683
  %v1960 = vunpack.c.h.b16 %v1683
  %v1961 = vunpack.c.l.b16 %v1684
  %v1962 = vunpack.c.h.b16 %v1684
  %v1963 = vunpack.c.l.b16 %v1685
  %v1964 = vunpack.c.h.b16 %v1685
  %v1965 = vunpack.c.l.b16 %v1686
  %v1966 = vunpack.c.h.b16 %v1686
  %v1967 = vunpack.c.l.b16 %v1687
  %v1968 = vunpack.c.h.b16 %v1687
  %v1969 = vunpack.c.l.b16 %v1688
  %v1970 = vunpack.c.h.b16 %v1688
  %v1971 = vunpack.c.l.b16 %v1689
  %v1972 = vunpack.c.h.b16 %v1689
  %v1973 = vunpack.c.l.b16 %v1690
  %v1974 = vunpack.c.h.b16 %v1690
  %v1975 = vunpack.c.l.b16 %v1691
  %v1976 = vunpack.c.h.b16 %v1691
  %v1977 = vunpack.c.l.b16 %v1692
  %v1978 = vunpack.c.h.b16 %v1692
  %v1979 = vunpack.c.l.b16 %v1693
  %v1980 = vunpack.c.h.b16 %v1693
  %v1981 = vunpack.c.l.b16 %v1694
  %v1982 = vunpack.c.h.b16 %v1694
  %v1983 = vunpack.c.l.b16 %v1695
  %v1984 = vunpack.c.h.b16 %v1695
  %v1985 = vunpack.c.l.b16 %v1696
  %v1986 = vunpack.c.h.b16 %v1696
  %v1987 = vunpack.c.l.b16 %v1697
  %v1988 = vunpack.c.h.b16 %v1697
  %v1989 = vunpack.c.l.b16 %v1698
  %v1990 = vunpack.c.h.b16 %v1698
  %v1991 = vunpack.c.l.b16 %v1699
  %v1992 = vunpack.c.h.b16 %v1699
  %v1993 = vunpack.c.l.b16 %v1700
  %v1994 = vunpack.c.h.b16 %v1700
  %v1995 = vunpack.c.l.b16 %v1701
  %v1996 = vunpack.c.h.b16 %v1701
  %v1997 = vunpack.c.l.b16 %v1702
  %v1998 = vunpack.c.h.b16 %v1702
  %v1999 = vunpack.c.l.b16 %v1703
  %v2000 = vunpack.c.h.b16 %v1703
  %v2001 = vunpack.c.l.b16 %v1704
  %v2002 = vunpack.c.h.b16 %v1704
  %v2003 = vunpack.c.l.b16 %v1705
  %v2004 = vunpack.c.h.b16 %v1705
  %v2005 = vunpack.c.l.b16 %v1706
  %v2006 = vunpack.c.h.b16 %v1706
  %v2007 = vunpack.c.l.b16 %v1707
  %v2008 = vunpack.c.h.b16 %v1707
  %v2009 = vunpack.c.l.b16 %v1708
  %v2010 = vunpack.c.h.b16 %v1708
  %v2011 = vunpack.c.l.b16 %v1709
  %v2012 = vunpack.c.h.b16 %v1709
  %v2013 = vunpack.c.l.b16 %v1710
  %v2014 = vunpack.c.h.b16 %v1710
  %v2015 = vunpack.c.l.b16 %v1711
  %v2016 = vunpack.c.h.b16 %v1711
  %v2017 = vunpack.c.l.b16 %v1712
  %v2018 = vunpack.c.h.b16 %v1712
  %v2019 = vunpack.c.l.b16 %v1713
  %v2020 = vunpack.c.h.b16 %v1713
  %v2021 = vunpack.c.l.b16 %v1714
  %v2022 = vunpack.c.h.b16 %v1714
  %v2023 = vunpack.c.l.b16 %v1715
  %v2024 = vunpack.c.h.b16 %v1715
  %v2025 = vunpack.c.l.b16 %v1716
  %v2026 = vunpack.c.h.b16 %v1716
  %v2027 = vunpack.c.l.b16 %v1717
  %v2028 = vunpack.c.h.b16 %v1717
  %v2029 = vunpack.c.l.b16 %v1718
  %v2030 = vunpack.c.h.b16 %v1718
  %v2031 = vunpack.c.l.b16 %v1719
  %v2032 = vunpack.c.h.b16 %v1719
  %v2033 = vunpack.c.l.b16 %v1720
  %v2034 = vunpack.c.h.b16 %v1720
  %v2035 = vunpack.c.l.b16 %v1721
  %v2036 = vunpack.c.h.b16 %v1721
  %v2037 = vunpack.c.l.b16 %v1722
  %v2038 = vunpack.c.h.b16 %v1722
  %v2039 = vunpack.c.l.b16 %v1723
  %v2040 = vunpack.c.h.b16 %v1723
  %v2041 = vunpack.c.l.b16 %v1724
  %v2042 = vunpack.c.h.b16 %v1724
  %v2043 = vunpack.c.l.b16 %v1725
  %v2044 = vunpack.c.h.b16 %v1725
  %v2045 = vunpack.c.l.b16 %v1726
  %v2046 = vunpack.c.h.b16 %v1726
  %v2047 = vunpack.c.l.b16 %v1727
  %v2048 = vunpack.c.h.b16 %v1727
  %v2049 = vunpack.c.l.b16 %v1728
  %v2050 = vunpack.c.h.b16 %v1728
  %v2051 = vunpack.c.l.b16 %v1729
  %v2052 = vunpack.c.h.b16 %v1729
  %v2053 = vunpack.c.l.b16 %v1730
  %v2054 = vunpack.c.h.b16 %v1730
  %v2055 = vunpack.c.l.b16 %v1731
  %v2056 = vunpack.c.h.b16 %v1731
  %v2057 = vunpack.c.l.b16 %v1732
  %v2058 = vunpack.c.h.b16 %v1732
  %v2059 = vunpack.c.l.b16 %v1733
  %v2060 = vunpack.c.h.b16 %v1733
  %v2061 = vunpack.c.l.b16 %v1734
  %v2062 = vunpack.c.h.b16 %v1734
  %v2063 = vunpack.c.l.b16 %v1735
  %v2064 = vunpack.c.h.b16 %v1735
  %v2065 = vunpack.c.l.b16 %v1736
  %v2066 = vunpack.c.h.b16 %v1736
  %v2067 = vunpack.c.l.b16 %v1737
  %v2068 = vunpack.c.h.b16 %v1737
  %v2069 = vunpack.c.l.b16 %v1738
  %v2070 = vunpack.c.h.b16 %v1738
  %v2071 = vunpack.c.l.b16 %v1739
  %v2072 = vunpack.c.h.b16 %v1739
  %v2073 = vunpack.c.l.b16 %v1740
  %v2074 = vunpack.c.h.b16 %v1740
  %v2075 = vunpack.c.l.b16 %v1741
  %v2076 = vunpack.c.h.b16 %v1741
  %v2077 = vunpack.c.l.b16 %v1742
  %v2078 = vunpack.c.h.b16 %v1742
  %v2079 = vpack.c.b16 %v1883, %v1855
  %v2080 = vpack.c.b16 %v1884, %v1856
  %v2081 = vpack.c.b16 %v1885, %v1857
  %v2082 = vpack.c.b16 %v1886, %v1858
  %v2083 = vpack.c.b16 %v1887, %v1859
  %v2084 = vpack.c.b16 %v1888, %v1860
  %v2085 = vpack.c.b16 %v1889, %v1861
  %v2086 = vpack.c.b16 %v1890, %v1862
  %v2087 = vpack.c.b16 %v1891, %v1863
  %v2088 = vpack.c.b16 %v1892, %v1864
  %v2089 = vpack.c.b16 %v1893, %v1865
  %v2090 = vpack.c.b16 %v1894, %v1866
  %v2091 = vpack.c.b16 %v1895, %v1867
  %v2092 = vpack.c.b16 %v1896, %v1868
  %v2093 = vpack.c.b16 %v1897, %v1869
  %v2094 = vpack.c.b16 %v1898, %v1870
  %v2095 = vpack.c.b16 %v1899, %v1871
  %v2096 = vpack.c.b16 %v1900, %v1872
  %v2097 = vpack.c.b16 %v1901, %v1873
  %v2098 = vpack.c.b16 %v1902, %v1874
  %v2099 = vpack.c.b16 %v1903, %v1875
  %v2100 = vpack.c.b16 %v1904, %v1876
  %v2101 = vpack.c.b16 %v1905, %v1877
  %v2102 = vpack.c.b16 %v1906, %v1878
  %v2103 = vpack.c.b16 %v1907, %v1879
  %v2104 = vpack.c.b16 %v1908, %v1880
  %v2105 = vpack.c.b16 %v1909, %v1881
  %v2106 = vpack.c.b16 %v1910, %v1882
  %v2107 = vpack.c.b16 %v1939, %v1911
  %v2108 = vpack.c.b16 %v1940, %v1912
  %v2109 = vpack.c.b16 %v1941, %v1913
  %v2110 = vpack.c.b16 %v1942, %v1914
  %v2111 = vpack.c.b16 %v1943, %v1915
  %v2112 = vpack.c.b16 %v1944, %v1916
  %v2113 = vpack.c.b16 %v1945, %v1917
  %v2114 = vpack.c.b16 %v1946, %v1918
  %v2115 = vpack.c.b16 %v1947, %v1919
  %v2116 = vpack.c.b16 %v1948, %v1920
  %v2117 = vpack.c.b16 %v1949, %v1921
  %v2118 = vpack.c.b16 %v1950, %v1922
  %v2119 = vpack.c.b16 %v1951, %v1923
  %v2120 = vpack.c.b16 %v1952, %v1924
  %v2121 = vpack.c.b16 %v1953, %v1925
  %v2122 = vpack.c.b16 %v1954, %v1926
  %v2123 = vpack.c.b16 %v1955, %v1927
  %v2124 = vpack.c.b16 %v1956, %v1928
  %v2125 = vpack.c.b16 %v1957, %v1929
  %v2126 = vpack.c.b16 %v1958, %v1930
  %v2127 = vpack.c.b16 %v1959, %v1931
  %v2128 = vpack.c.b16 %v1960, %v1932
  %v2129 = vpack.c.b16 %v1961, %v1933
  %v2130 = vpack.c.b16 %v1962, %v1934
  %v2131 = vpack.c.b16 %v1963, %v1935
  %v2132 = vpack.c.b16 %v1964, %v1936
  %v2133 = vpack.c.b16 %v1965, %v1937
  %v2134 = vpack.c.b16 %v1966, %v1938
  %v2135 = vpack.c.b16 %v1995, %v1967
  %v2136 = vpack.c.b16 %v1996, %v1968
  %v2137 = vpack.c.b16 %v1997, %v1969
  %v2138 = vpack.c.b16 %v1998, %v1970
  %v2139 = vpack.c.b16 %v1999, %v1971
  %v2140 = vpack.c.b16 %v2000, %v1972
  %v2141 = vpack.c.b16 %v2001, %v1973
  %v2142 = vpack.c.b16 %v2002, %v1974
  %v2143 = vpack.c.b16 %v2003, %v1975
  %v2144 = vpack.c.b16 %v2004, %v1976
  %v2145 = vpack.c.b16 %v2005, %v1977
  %v2146 = vpack.c.b16 %v2006, %v1978
  %v2147 = vpack.c.b16 %v2007, %v1979
  %v2148 = vpack.c.b16 %v2008, %v1980
  %v2149 = vpack.c.b16 %v2009, %v1981
  %v2150 = vpack.c.b16 %v2010, %v1982
  %v2151 = vpack.c.b16 %v2011, %v1983
  %v2152 = vpack.c.b16 %v2012, %v1984
  %v2153 = vpack.c.b16 %v2013, %v1985
  %v2154 = vpack.c.b16 %v2014, %v1986
  %v2155 = vpack.c.b16 %v2015, %v1987
  %v2156 = vpack.c.b16 %v2016, %v1988
  %v2157 = vpack.c.b16 %v2017, %v1989
  %v2158 = vpack.c.b16 %v2018, %v1990
  %v2159 = vpack.c.b16 %v2019, %v1991
  %v2160 = vpack.c.b16 %v2020, %v1992
  %v2161 = vpack.c.b16 %v2021, %v1993
  %v2162 = vpack.c.b16 %v2022, %v1994
  %v2163 = vpack.c.b16 %v2051, %v2023
  %v2164 = vpack.c.b16 %v2052, %v2024
  %v2165 = vpack.c.b16 %v2053, %v2025
  %v2166 = vpack.c.b16 %v2054, %v2026
  %v2167 = vpack.c.b16 %v2055, %v2027
  %v2168 = vpack.c.b16 %v2056, %v2028
  %v2169 = vpack.c.b16 %v2057, %v2029
  %v2170 = vpack.c.b16 %v2058, %v2030
  %v2171 = vpack.c.b16 %v2059, %v2031
  %v2172 = vpack.c.b16 %v2060, %v2032
  %v2173 = vpack.c.b16 %v2061, %v2033
  %v2174 = vpack.c.b16 %v2062, %v2034
  %v2175 = vpack.c.b16 %v2063, %v2035
  %v2176 = vpack.c.b16 %v2064, %v2036
  %v2177 = vpack.c.b16 %v2065, %v2037
  %v2178 = vpack.c.b16 %v2066, %v2038
  %v2179 = vpack.c.b16 %v2067, %v2039
  %v2180 = vpack.c.b16 %v2068, %v2040
  %v2181 = vpack.c.b16 %v2069, %v2041
  %v2182 = vpack.c.b16 %v2070, %v2042
  %v2183 = vpack.c.b16 %v2071, %v2043
  %v2184 = vpack.c.b16 %v2072, %v2044
  %v2185 = vpack.c.b16 %v2073, %v2045
  %v2186 = vpack.c.b16 %v2074, %v2046
  %v2187 = vpack.c.b16 %v2075, %v2047
  %v2188 = vpack.c.b16 %v2076, %v2048
  %v2189 = vpack.c.b16 %v2077, %v2049
  %v2190 = vpack.c.b16 %v2078, %v2050
  %2303 = vmatprep.subr.bf16.mxu0 %v2080
  %2304 = vmatpush1.bf16.msra.mxu0 %v2079
  %2305 = vmatprep.subr.bf16.mxu0 %v2108
  %2306 = vmatpush1.bf16.msra.mxu0 %v2107
  %2307 = vmatprep.subr.bf16.mxu0 %v2136
  %2308 = vmatpush1.bf16.msra.mxu0 %v2135
  %2309 = vmatprep.subr.bf16.mxu0 %v2164
  %2310 = vmatpush1.bf16.msra.mxu0 %v2163
  %2311 = vmatprep.subr.bf16.mxu0 0
  %2312 = vmatpush1.bf16.msra.mxu0 0
  %2313 = vmatprep.subr.bf16.mxu0 0
  %2314 = vmatpush1.bf16.msra.mxu0 0
  %2315 = vmatprep.subr.bf16.mxu0 0
  %2316 = vmatpush1.bf16.msra.mxu0 0
  %2317 = vmatprep.subr.bf16.mxu0 0
  %2318 = vmatpush1.bf16.msra.mxu0 0
  %2319 = vmatprep.subr.bf16.mxu0 0
  %2320 = vmatpush1.bf16.msra.mxu0 0
  %2321 = vmatprep.subr.bf16.mxu0 0
  %2322 = vmatpush1.bf16.msra.mxu0 0
  %2323 = vmatprep.subr.bf16.mxu0 0
  %2324 = vmatpush1.bf16.msra.mxu0 0
  %2325 = vmatprep.subr.bf16.mxu0 0
  %2326 = vmatpush1.bf16.msra.mxu0 0
  %2327 = vmatprep.subr.bf16.mxu0 0
  %2328 = vmatpush1.bf16.msra.mxu0 0
  %2329 = vmatprep.subr.bf16.mxu0 0
  %2330 = vmatpush1.bf16.msra.mxu0 0
  %2331 = vmatprep.subr.bf16.mxu0 0
  %2332 = vmatpush1.bf16.msra.mxu0 0
  %2333 = vmatprep.subr.bf16.mxu0 0
  %2334 = vmatpush1.bf16.msra.mxu0 0
  %2335 = vmatprep.mubr.bf16.mxu0 0
  %2336 = vmatmul.mubr.bf16.gmra.mrb[0].mxu0 %v693
  %v2337 = vpop.f32.mrb[0].mxu0
  %v2338 = vadd.f32 0.0, %v2337
  %v2339 = vpop.f32.mrb[0].mxu0
  %v2340 = vadd.f32 0.0, %v2339
  %v2341 = vpop.f32.mrb[0].mxu0
  %v2342 = vpop.f32.mrb[0].mxu0
  %2343 = vdwg.mxu0
  %2344 = vmatprep.subr.bf16.mxu0 %v2082
  %2345 = vmatpush1.bf16.msra.mxu0 %v2081
  %2346 = vmatprep.subr.bf16.mxu0 %v2110
  %2347 = vmatpush1.bf16.msra.mxu0 %v2109
  %2348 = vmatprep.subr.bf16.mxu0 %v2138
  %2349 = vmatpush1.bf16.msra.mxu0 %v2137
  %2350 = vmatprep.subr.bf16.mxu0 %v2166
  %2351 = vmatpush1.bf16.msra.mxu0 %v2165
  %2352 = vmatprep.subr.bf16.mxu0 0
  %2353 = vmatpush1.bf16.msra.mxu0 0
  %2354 = vmatprep.subr.bf16.mxu0 0
  %2355 = vmatpush1.bf16.msra.mxu0 0
  %2356 = vmatprep.subr.bf16.mxu0 0
  %2357 = vmatpush1.bf16.msra.mxu0 0
  %2358 = vmatprep.subr.bf16.mxu0 0
  %2359 = vmatpush1.bf16.msra.mxu0 0
  %2360 = vmatprep.subr.bf16.mxu0 0
  %2361 = vmatpush1.bf16.msra.mxu0 0
  %2362 = vmatprep.subr.bf16.mxu0 0
  %2363 = vmatpush1.bf16.msra.mxu0 0
  %2364 = vmatprep.subr.bf16.mxu0 0
  %2365 = vmatpush1.bf16.msra.mxu0 0
  %2366 = vmatprep.subr.bf16.mxu0 0
  %2367 = vmatpush1.bf16.msra.mxu0 0
  %2368 = vmatprep.subr.bf16.mxu0 0
  %2369 = vmatpush1.bf16.msra.mxu0 0
  %2370 = vmatprep.subr.bf16.mxu0 0
  %2371 = vmatpush1.bf16.msra.mxu0 0
  %2372 = vmatprep.subr.bf16.mxu0 0
  %2373 = vmatpush1.bf16.msra.mxu0 0
  %2374 = vmatprep.subr.bf16.mxu0 0
  %2375 = vmatpush1.bf16.msra.mxu0 0
  %2376 = vmatprep.mubr.bf16.mxu0 0
  %2377 = vmatmul.mubr.bf16.gmra.mrb[0].mxu0 %v693
  %v2378 = vpop.f32.mrb[0].mxu0
  %v2379 = vadd.f32 0.0, %v2378
  %v2380 = vpop.f32.mrb[0].mxu0
  %v2381 = vadd.f32 0.0, %v2380
  %v2382 = vpop.f32.mrb[0].mxu0
  %v2383 = vpop.f32.mrb[0].mxu0
  %2384 = vdwg.mxu0
  %2385 = vmatprep.subr.bf16.mxu0 %v2084
  %2386 = vmatpush1.bf16.msra.mxu0 %v2083
  %2387 = vmatprep.subr.bf16.mxu0 %v2112
  %2388 = vmatpush1.bf16.msra.mxu0 %v2111
  %2389 = vmatprep.subr.bf16.mxu0 %v2140
  %2390 = vmatpush1.bf16.msra.mxu0 %v2139
  %2391 = vmatprep.subr.bf16.mxu0 %v2168
  %2392 = vmatpush1.bf16.msra.mxu0 %v2167
  %2393 = vmatprep.subr.bf16.mxu0 0
  %2394 = vmatpush1.bf16.msra.mxu0 0
  %2395 = vmatprep.subr.bf16.mxu0 0
  %2396 = vmatpush1.bf16.msra.mxu0 0
  %2397 = vmatprep.subr.bf16.mxu0 0
  %2398 = vmatpush1.bf16.msra.mxu0 0
  %2399 = vmatprep.subr.bf16.mxu0 0
  %2400 = vmatpush1.bf16.msra.mxu0 0
  %2401 = vmatprep.subr.bf16.mxu0 0
  %2402 = vmatpush1.bf16.msra.mxu0 0
  %2403 = vmatprep.subr.bf16.mxu0 0
  %2404 = vmatpush1.bf16.msra.mxu0 0
  %2405 = vmatprep.subr.bf16.mxu0 0
  %2406 = vmatpush1.bf16.msra.mxu0 0
  %2407 = vmatprep.subr.bf16.mxu0 0
  %2408 = vmatpush1.bf16.msra.mxu0 0
  %2409 = vmatprep.subr.bf16.mxu0 0
  %2410 = vmatpush1.bf16.msra.mxu0 0
  %2411 = vmatprep.subr.bf16.mxu0 0
  %2412 = vmatpush1.bf16.msra.mxu0 0
  %2413 = vmatprep.subr.bf16.mxu0 0
  %2414 = vmatpush1.bf16.msra.mxu0 0
  %2415 = vmatprep.subr.bf16.mxu0 0
  %2416 = vmatpush1.bf16.msra.mxu0 0
  %2417 = vmatprep.mubr.bf16.mxu0 0
  %2418 = vmatmul.mubr.bf16.gmra.mrb[0].mxu0 %v693
  %v2419 = vpop.f32.mrb[0].mxu0
  %v2420 = vadd.f32 0.0, %v2419
  %v2421 = vpop.f32.mrb[0].mxu0
  %v2422 = vadd.f32 0.0, %v2421
  %v2423 = vpop.f32.mrb[0].mxu0
  %v2424 = vpop.f32.mrb[0].mxu0
  %2425 = vdwg.mxu0
  %2426 = vmatprep.subr.bf16.mxu0 %v2086
  %2427 = vmatpush1.bf16.msra.mxu0 %v2085
  %2428 = vmatprep.subr.bf16.mxu0 %v2114
  %2429 = vmatpush1.bf16.msra.mxu0 %v2113
  %2430 = vmatprep.subr.bf16.mxu0 %v2142
  %2431 = vmatpush1.bf16.msra.mxu0 %v2141
  %2432 = vmatprep.subr.bf16.mxu0 %v2170
  %2433 = vmatpush1.bf16.msra.mxu0 %v2169
  %2434 = vmatprep.subr.bf16.mxu0 0
  %2435 = vmatpush1.bf16.msra.mxu0 0
  %2436 = vmatprep.subr.bf16.mxu0 0
  %2437 = vmatpush1.bf16.msra.mxu0 0
  %2438 = vmatprep.subr.bf16.mxu0 0
  %2439 = vmatpush1.bf16.msra.mxu0 0
  %2440 = vmatprep.subr.bf16.mxu0 0
  %2441 = vmatpush1.bf16.msra.mxu0 0
  %2442 = vmatprep.subr.bf16.mxu0 0
  %2443 = vmatpush1.bf16.msra.mxu0 0
  %2444 = vmatprep.subr.bf16.mxu0 0
  %2445 = vmatpush1.bf16.msra.mxu0 0
  %2446 = vmatprep.subr.bf16.mxu0 0
  %2447 = vmatpush1.bf16.msra.mxu0 0
  %2448 = vmatprep.subr.bf16.mxu0 0
  %2449 = vmatpush1.bf16.msra.mxu0 0
  %2450 = vmatprep.subr.bf16.mxu0 0
  %2451 = vmatpush1.bf16.msra.mxu0 0
  %2452 = vmatprep.subr.bf16.mxu0 0
  %2453 = vmatpush1.bf16.msra.mxu0 0
  %2454 = vmatprep.subr.bf16.mxu0 0
  %2455 = vmatpush1.bf16.msra.mxu0 0
  %2456 = vmatprep.subr.bf16.mxu0 0
  %2457 = vmatpush1.bf16.msra.mxu0 0
  %2458 = vmatprep.mubr.bf16.mxu0 0
  %2459 = vmatmul.mubr.bf16.gmra.mrb[0].mxu0 %v693
  %v2460 = vpop.f32.mrb[0].mxu0
  %v2461 = vadd.f32 0.0, %v2460
  %v2462 = vpop.f32.mrb[0].mxu0
  %v2463 = vadd.f32 0.0, %v2462
  %v2464 = vpop.f32.mrb[0].mxu0
  %v2465 = vpop.f32.mrb[0].mxu0
  %2466 = vdwg.mxu0
  %2467 = vmatprep.subr.bf16.mxu0 %v2088
  %2468 = vmatpush1.bf16.msra.mxu0 %v2087
  %2469 = vmatprep.subr.bf16.mxu0 %v2116
  %2470 = vmatpush1.bf16.msra.mxu0 %v2115
  %2471 = vmatprep.subr.bf16.mxu0 %v2144
  %2472 = vmatpush1.bf16.msra.mxu0 %v2143
  %2473 = vmatprep.subr.bf16.mxu0 %v2172
  %2474 = vmatpush1.bf16.msra.mxu0 %v2171
  %2475 = vmatprep.subr.bf16.mxu0 0
  %2476 = vmatpush1.bf16.msra.mxu0 0
  %2477 = vmatprep.subr.bf16.mxu0 0
  %2478 = vmatpush1.bf16.msra.mxu0 0
  %2479 = vmatprep.subr.bf16.mxu0 0
  %2480 = vmatpush1.bf16.msra.mxu0 0
  %2481 = vmatprep.subr.bf16.mxu0 0
  %2482 = vmatpush1.bf16.msra.mxu0 0
  %2483 = vmatprep.subr.bf16.mxu0 0
  %2484 = vmatpush1.bf16.msra.mxu0 0
  %2485 = vmatprep.subr.bf16.mxu0 0
  %2486 = vmatpush1.bf16.msra.mxu0 0
  %2487 = vmatprep.subr.bf16.mxu0 0
  %2488 = vmatpush1.bf16.msra.mxu0 0
  %2489 = vmatprep.subr.bf16.mxu0 0
  %2490 = vmatpush1.bf16.msra.mxu0 0
  %2491 = vmatprep.subr.bf16.mxu0 0
  %2492 = vmatpush1.bf16.msra.mxu0 0
  %2493 = vmatprep.subr.bf16.mxu0 0
  %2494 = vmatpush1.bf16.msra.mxu0 0
  %2495 = vmatprep.subr.bf16.mxu0 0
  %2496 = vmatpush1.bf16.msra.mxu0 0
  %2497 = vmatprep.subr.bf16.mxu0 0
  %2498 = vmatpush1.bf16.msra.mxu0 0
  %2499 = vmatprep.mubr.bf16.mxu0 0
  %2500 = vmatmul.mubr.bf16.gmra.mrb[0].mxu0 %v693
  %v2501 = vpop.f32.mrb[0].mxu0
  %v2502 = vadd.f32 0.0, %v2501
  %v2503 = vpop.f32.mrb[0].mxu0
  %v2504 = vadd.f32 0.0, %v2503
  %v2505 = vpop.f32.mrb[0].mxu0
  %v2506 = vpop.f32.mrb[0].mxu0
  %2507 = vdwg.mxu0
  %2508 = vmatprep.subr.bf16.mxu0 %v2090
  %2509 = vmatpush1.bf16.msra.mxu0 %v2089
  %2510 = vmatprep.subr.bf16.mxu0 %v2118
  %2511 = vmatpush1.bf16.msra.mxu0 %v2117
  %2512 = vmatprep.subr.bf16.mxu0 %v2146
  %2513 = vmatpush1.bf16.msra.mxu0 %v2145
  %2514 = vmatprep.subr.bf16.mxu0 %v2174
  %2515 = vmatpush1.bf16.msra.mxu0 %v2173
  %2516 = vmatprep.subr.bf16.mxu0 0
  %2517 = vmatpush1.bf16.msra.mxu0 0
  %2518 = vmatprep.subr.bf16.mxu0 0
  %2519 = vmatpush1.bf16.msra.mxu0 0
  %2520 = vmatprep.subr.bf16.mxu0 0
  %2521 = vmatpush1.bf16.msra.mxu0 0
  %2522 = vmatprep.subr.bf16.mxu0 0
  %2523 = vmatpush1.bf16.msra.mxu0 0
  %2524 = vmatprep.subr.bf16.mxu0 0
  %2525 = vmatpush1.bf16.msra.mxu0 0
  %2526 = vmatprep.subr.bf16.mxu0 0
  %2527 = vmatpush1.bf16.msra.mxu0 0
  %2528 = vmatprep.subr.bf16.mxu0 0
  %2529 = vmatpush1.bf16.msra.mxu0 0
  %2530 = vmatprep.subr.bf16.mxu0 0
  %2531 = vmatpush1.bf16.msra.mxu0 0
  %2532 = vmatprep.subr.bf16.mxu0 0
  %2533 = vmatpush1.bf16.msra.mxu0 0
  %2534 = vmatprep.subr.bf16.mxu0 0
  %2535 = vmatpush1.bf16.msra.mxu0 0
  %2536 = vmatprep.subr.bf16.mxu0 0
  %2537 = vmatpush1.bf16.msra.mxu0 0
  %2538 = vmatprep.subr.bf16.mxu0 0
  %2539 = vmatpush1.bf16.msra.mxu0 0
  %2540 = vmatprep.mubr.bf16.mxu0 0
  %2541 = vmatmul.mubr.bf16.gmra.mrb[0].mxu0 %v693
  %v2542 = vpop.f32.mrb[0].mxu0
  %v2543 = vadd.f32 0.0, %v2542
  %v2544 = vpop.f32.mrb[0].mxu0
  %v2545 = vadd.f32 0.0, %v2544
  %v2546 = vpop.f32.mrb[0].mxu0
  %v2547 = vpop.f32.mrb[0].mxu0
  %2548 = vdwg.mxu0
  %2549 = vmatprep.subr.bf16.mxu0 %v2092
  %2550 = vmatpush1.bf16.msra.mxu0 %v2091
  %2551 = vmatprep.subr.bf16.mxu0 %v2120
  %2552 = vmatpush1.bf16.msra.mxu0 %v2119
  %2553 = vmatprep.subr.bf16.mxu0 %v2148
  %2554 = vmatpush1.bf16.msra.mxu0 %v2147
  %2555 = vmatprep.subr.bf16.mxu0 %v2176
  %2556 = vmatpush1.bf16.msra.mxu0 %v2175
  %2557 = vmatprep.subr.bf16.mxu0 0
  %2558 = vmatpush1.bf16.msra.mxu0 0
  %2559 = vmatprep.subr.bf16.mxu0 0
  %2560 = vmatpush1.bf16.msra.mxu0 0
  %2561 = vmatprep.subr.bf16.mxu0 0
  %2562 = vmatpush1.bf16.msra.mxu0 0
  %2563 = vmatprep.subr.bf16.mxu0 0
  %2564 = vmatpush1.bf16.msra.mxu0 0
  %2565 = vmatprep.subr.bf16.mxu0 0
  %2566 = vmatpush1.bf16.msra.mxu0 0
  %2567 = vmatprep.subr.bf16.mxu0 0
  %2568 = vmatpush1.bf16.msra.mxu0 0
  %2569 = vmatprep.subr.bf16.mxu0 0
  %2570 = vmatpush1.bf16.msra.mxu0 0
  %2571 = vmatprep.subr.bf16.mxu0 0
  %2572 = vmatpush1.bf16.msra.mxu0 0
  %2573 = vmatprep.subr.bf16.mxu0 0
  %2574 = vmatpush1.bf16.msra.mxu0 0
  %2575 = vmatprep.subr.bf16.mxu0 0
  %2576 = vmatpush1.bf16.msra.mxu0 0
  %2577 = vmatprep.subr.bf16.mxu0 0
  %2578 = vmatpush1.bf16.msra.mxu0 0
  %2579 = vmatprep.subr.bf16.mxu0 0
  %2580 = vmatpush1.bf16.msra.mxu0 0
  %2581 = vmatprep.mubr.bf16.mxu0 0
  %2582 = vmatmul.mubr.bf16.gmra.mrb[0].mxu0 %v693
  %v2583 = vpop.f32.mrb[0].mxu0
  %v2584 = vadd.f32 0.0, %v2583
  %v2585 = vpop.f32.mrb[0].mxu0
  %v2586 = vadd.f32 0.0, %v2585
  %v2587 = vpop.f32.mrb[0].mxu0
  %v2588 = vpop.f32.mrb[0].mxu0
  %2589 = vdwg.mxu0
  %2590 = vmatprep.subr.bf16.mxu0 %v2094
  %2591 = vmatpush1.bf16.msra.mxu0 %v2093
  %2592 = vmatprep.subr.bf16.mxu0 %v2122
  %2593 = vmatpush1.bf16.msra.mxu0 %v2121
  %2594 = vmatprep.subr.bf16.mxu0 %v2150
  %2595 = vmatpush1.bf16.msra.mxu0 %v2149
  %2596 = vmatprep.subr.bf16.mxu0 %v2178
  %2597 = vmatpush1.bf16.msra.mxu0 %v2177
  %2598 = vmatprep.subr.bf16.mxu0 0
  %2599 = vmatpush1.bf16.msra.mxu0 0
  %2600 = vmatprep.subr.bf16.mxu0 0
  %2601 = vmatpush1.bf16.msra.mxu0 0
  %2602 = vmatprep.subr.bf16.mxu0 0
  %2603 = vmatpush1.bf16.msra.mxu0 0
  %2604 = vmatprep.subr.bf16.mxu0 0
  %2605 = vmatpush1.bf16.msra.mxu0 0
  %2606 = vmatprep.subr.bf16.mxu0 0
  %2607 = vmatpush1.bf16.msra.mxu0 0
  %2608 = vmatprep.subr.bf16.mxu0 0
  %2609 = vmatpush1.bf16.msra.mxu0 0
  %2610 = vmatprep.subr.bf16.mxu0 0
  %2611 = vmatpush1.bf16.msra.mxu0 0
  %2612 = vmatprep.subr.bf16.mxu0 0
  %2613 = vmatpush1.bf16.msra.mxu0 0
  %2614 = vmatprep.subr.bf16.mxu0 0
  %2615 = vmatpush1.bf16.msra.mxu0 0
  %2616 = vmatprep.subr.bf16.mxu0 0
  %2617 = vmatpush1.bf16.msra.mxu0 0
  %2618 = vmatprep.subr.bf16.mxu0 0
  %2619 = vmatpush1.bf16.msra.mxu0 0
  %2620 = vmatprep.subr.bf16.mxu0 0
  %2621 = vmatpush1.bf16.msra.mxu0 0
  %2622 = vmatprep.mubr.bf16.mxu0 0
  %2623 = vmatmul.mubr.bf16.gmra.mrb[0].mxu0 %v693
  %v2624 = vpop.f32.mrb[0].mxu0
  %v2625 = vadd.f32 0.0, %v2624
  %v2626 = vpop.f32.mrb[0].mxu0
  %v2627 = vadd.f32 0.0, %v2626
  %v2628 = vpop.f32.mrb[0].mxu0
  %v2629 = vpop.f32.mrb[0].mxu0
  %2630 = vdwg.mxu0
  %2631 = vmatprep.subr.bf16.mxu0 %v2096
  %2632 = vmatpush1.bf16.msra.mxu0 %v2095
  %2633 = vmatprep.subr.bf16.mxu0 %v2124
  %2634 = vmatpush1.bf16.msra.mxu0 %v2123
  %2635 = vmatprep.subr.bf16.mxu0 %v2152
  %2636 = vmatpush1.bf16.msra.mxu0 %v2151
  %2637 = vmatprep.subr.bf16.mxu0 %v2180
  %2638 = vmatpush1.bf16.msra.mxu0 %v2179
  %2639 = vmatprep.subr.bf16.mxu0 0
  %2640 = vmatpush1.bf16.msra.mxu0 0
  %2641 = vmatprep.subr.bf16.mxu0 0
  %2642 = vmatpush1.bf16.msra.mxu0 0
  %2643 = vmatprep.subr.bf16.mxu0 0
  %2644 = vmatpush1.bf16.msra.mxu0 0
  %2645 = vmatprep.subr.bf16.mxu0 0
  %2646 = vmatpush1.bf16.msra.mxu0 0
  %2647 = vmatprep.subr.bf16.mxu0 0
  %2648 = vmatpush1.bf16.msra.mxu0 0
  %2649 = vmatprep.subr.bf16.mxu0 0
  %2650 = vmatpush1.bf16.msra.mxu0 0
  %2651 = vmatprep.subr.bf16.mxu0 0
  %2652 = vmatpush1.bf16.msra.mxu0 0
  %2653 = vmatprep.subr.bf16.mxu0 0
  %2654 = vmatpush1.bf16.msra.mxu0 0
  %2655 = vmatprep.subr.bf16.mxu0 0
  %2656 = vmatpush1.bf16.msra.mxu0 0
  %2657 = vmatprep.subr.bf16.mxu0 0
  %2658 = vmatpush1.bf16.msra.mxu0 0
  %2659 = vmatprep.subr.bf16.mxu0 0
  %2660 = vmatpush1.bf16.msra.mxu0 0
  %2661 = vmatprep.subr.bf16.mxu0 0
  %2662 = vmatpush1.bf16.msra.mxu0 0
  %2663 = vmatprep.mubr.bf16.mxu0 0
  %2664 = vmatmul.mubr.bf16.gmra.mrb[0].mxu0 %v693
  %v2665 = vpop.f32.mrb[0].mxu0
  %v2666 = vadd.f32 0.0, %v2665
  %v2667 = vpop.f32.mrb[0].mxu0
  %v2668 = vadd.f32 0.0, %v2667
  %v2669 = vpop.f32.mrb[0].mxu0
  %v2670 = vpop.f32.mrb[0].mxu0
  %2671 = vdwg.mxu0
  %2672 = vmatprep.subr.bf16.mxu0 %v2098
  %2673 = vmatpush1.bf16.msra.mxu0 %v2097
  %2674 = vmatprep.subr.bf16.mxu0 %v2126
  %2675 = vmatpush1.bf16.msra.mxu0 %v2125
  %2676 = vmatprep.subr.bf16.mxu0 %v2154
  %2677 = vmatpush1.bf16.msra.mxu0 %v2153
  %2678 = vmatprep.subr.bf16.mxu0 %v2182
  %2679 = vmatpush1.bf16.msra.mxu0 %v2181
  %2680 = vmatprep.subr.bf16.mxu0 0
  %2681 = vmatpush1.bf16.msra.mxu0 0
  %2682 = vmatprep.subr.bf16.mxu0 0
  %2683 = vmatpush1.bf16.msra.mxu0 0
  %2684 = vmatprep.subr.bf16.mxu0 0
  %2685 = vmatpush1.bf16.msra.mxu0 0
  %2686 = vmatprep.subr.bf16.mxu0 0
  %2687 = vmatpush1.bf16.msra.mxu0 0
  %2688 = vmatprep.subr.bf16.mxu0 0
  %2689 = vmatpush1.bf16.msra.mxu0 0
  %2690 = vmatprep.subr.bf16.mxu0 0
  %2691 = vmatpush1.bf16.msra.mxu0 0
  %2692 = vmatprep.subr.bf16.mxu0 0
  %2693 = vmatpush1.bf16.msra.mxu0 0
  %2694 = vmatprep.subr.bf16.mxu0 0
  %2695 = vmatpush1.bf16.msra.mxu0 0
  %2696 = vmatprep.subr.bf16.mxu0 0
  %2697 = vmatpush1.bf16.msra.mxu0 0
  %2698 = vmatprep.subr.bf16.mxu0 0
  %2699 = vmatpush1.bf16.msra.mxu0 0
  %2700 = vmatprep.subr.bf16.mxu0 0
  %2701 = vmatpush1.bf16.msra.mxu0 0
  %2702 = vmatprep.subr.bf16.mxu0 0
  %2703 = vmatpush1.bf16.msra.mxu0 0
  %2704 = vmatprep.mubr.bf16.mxu0 0
  %2705 = vmatmul.mubr.bf16.gmra.mrb[0].mxu0 %v693
  %v2706 = vpop.f32.mrb[0].mxu0
  %v2707 = vadd.f32 0.0, %v2706
  %v2708 = vpop.f32.mrb[0].mxu0
  %v2709 = vadd.f32 0.0, %v2708
  %v2710 = vpop.f32.mrb[0].mxu0
  %v2711 = vpop.f32.mrb[0].mxu0
  %2712 = vdwg.mxu0
  %2713 = vmatprep.subr.bf16.mxu0 %v2100
  %2714 = vmatpush1.bf16.msra.mxu0 %v2099
  %2715 = vmatprep.subr.bf16.mxu0 %v2128
  %2716 = vmatpush1.bf16.msra.mxu0 %v2127
  %2717 = vmatprep.subr.bf16.mxu0 %v2156
  %2718 = vmatpush1.bf16.msra.mxu0 %v2155
  %2719 = vmatprep.subr.bf16.mxu0 %v2184
  %2720 = vmatpush1.bf16.msra.mxu0 %v2183
  %2721 = vmatprep.subr.bf16.mxu0 0
  %2722 = vmatpush1.bf16.msra.mxu0 0
  %2723 = vmatprep.subr.bf16.mxu0 0
  %2724 = vmatpush1.bf16.msra.mxu0 0
  %2725 = vmatprep.subr.bf16.mxu0 0
  %2726 = vmatpush1.bf16.msra.mxu0 0
  %2727 = vmatprep.subr.bf16.mxu0 0
  %2728 = vmatpush1.bf16.msra.mxu0 0
  %2729 = vmatprep.subr.bf16.mxu0 0
  %2730 = vmatpush1.bf16.msra.mxu0 0
  %2731 = vmatprep.subr.bf16.mxu0 0
  %2732 = vmatpush1.bf16.msra.mxu0 0
  %2733 = vmatprep.subr.bf16.mxu0 0
  %2734 = vmatpush1.bf16.msra.mxu0 0
  %2735 = vmatprep.subr.bf16.mxu0 0
  %2736 = vmatpush1.bf16.msra.mxu0 0
  %2737 = vmatprep.subr.bf16.mxu0 0
  %2738 = vmatpush1.bf16.msra.mxu0 0
  %2739 = vmatprep.subr.bf16.mxu0 0
  %2740 = vmatpush1.bf16.msra.mxu0 0
  %2741 = vmatprep.subr.bf16.mxu0 0
  %2742 = vmatpush1.bf16.msra.mxu0 0
  %2743 = vmatprep.subr.bf16.mxu0 0
  %2744 = vmatpush1.bf16.msra.mxu0 0
  %2745 = vmatprep.mubr.bf16.mxu0 0
  %2746 = vmatmul.mubr.bf16.gmra.mrb[0].mxu0 %v693
  %v2747 = vpop.f32.mrb[0].mxu0
  %v2748 = vadd.f32 0.0, %v2747
  %v2749 = vpop.f32.mrb[0].mxu0
  %v2750 = vadd.f32 0.0, %v2749
  %v2751 = vpop.f32.mrb[0].mxu0
  %v2752 = vpop.f32.mrb[0].mxu0
  %2753 = vdwg.mxu0
  %2754 = vmatprep.subr.bf16.mxu0 %v2102
  %2755 = vmatpush1.bf16.msra.mxu0 %v2101
  %2756 = vmatprep.subr.bf16.mxu0 %v2130
  %2757 = vmatpush1.bf16.msra.mxu0 %v2129
  %2758 = vmatprep.subr.bf16.mxu0 %v2158
  %2759 = vmatpush1.bf16.msra.mxu0 %v2157
  %2760 = vmatprep.subr.bf16.mxu0 %v2186
  %2761 = vmatpush1.bf16.msra.mxu0 %v2185
  %2762 = vmatprep.subr.bf16.mxu0 0
  %2763 = vmatpush1.bf16.msra.mxu0 0
  %2764 = vmatprep.subr.bf16.mxu0 0
  %2765 = vmatpush1.bf16.msra.mxu0 0
  %2766 = vmatprep.subr.bf16.mxu0 0
  %2767 = vmatpush1.bf16.msra.mxu0 0
  %2768 = vmatprep.subr.bf16.mxu0 0
  %2769 = vmatpush1.bf16.msra.mxu0 0
  %2770 = vmatprep.subr.bf16.mxu0 0
  %2771 = vmatpush1.bf16.msra.mxu0 0
  %2772 = vmatprep.subr.bf16.mxu0 0
  %2773 = vmatpush1.bf16.msra.mxu0 0
  %2774 = vmatprep.subr.bf16.mxu0 0
  %2775 = vmatpush1.bf16.msra.mxu0 0
  %2776 = vmatprep.subr.bf16.mxu0 0
  %2777 = vmatpush1.bf16.msra.mxu0 0
  %2778 = vmatprep.subr.bf16.mxu0 0
  %2779 = vmatpush1.bf16.msra.mxu0 0
  %2780 = vmatprep.subr.bf16.mxu0 0
  %2781 = vmatpush1.bf16.msra.mxu0 0
  %2782 = vmatprep.subr.bf16.mxu0 0
  %2783 = vmatpush1.bf16.msra.mxu0 0
  %2784 = vmatprep.subr.bf16.mxu0 0
  %2785 = vmatpush1.bf16.msra.mxu0 0
  %2786 = vmatprep.mubr.bf16.mxu0 0
  %2787 = vmatmul.mubr.bf16.gmra.mrb[0].mxu0 %v693
  %v2788 = vpop.f32.mrb[0].mxu0
  %v2789 = vadd.f32 0.0, %v2788
  %v2790 = vpop.f32.mrb[0].mxu0
  %v2791 = vadd.f32 0.0, %v2790
  %v2792 = vpop.f32.mrb[0].mxu0
  %v2793 = vpop.f32.mrb[0].mxu0
  %2794 = vdwg.mxu0
  %2795 = vmatprep.subr.bf16.mxu0 %v2104
  %2796 = vmatpush1.bf16.msra.mxu0 %v2103
  %2797 = vmatprep.subr.bf16.mxu0 %v2132
  %2798 = vmatpush1.bf16.msra.mxu0 %v2131
  %2799 = vmatprep.subr.bf16.mxu0 %v2160
  %2800 = vmatpush1.bf16.msra.mxu0 %v2159
  %2801 = vmatprep.subr.bf16.mxu0 %v2188
  %2802 = vmatpush1.bf16.msra.mxu0 %v2187
  %2803 = vmatprep.subr.bf16.mxu0 0
  %2804 = vmatpush1.bf16.msra.mxu0 0
  %2805 = vmatprep.subr.bf16.mxu0 0
  %2806 = vmatpush1.bf16.msra.mxu0 0
  %2807 = vmatprep.subr.bf16.mxu0 0
  %2808 = vmatpush1.bf16.msra.mxu0 0
  %2809 = vmatprep.subr.bf16.mxu0 0
  %2810 = vmatpush1.bf16.msra.mxu0 0
  %2811 = vmatprep.subr.bf16.mxu0 0
  %2812 = vmatpush1.bf16.msra.mxu0 0
  %2813 = vmatprep.subr.bf16.mxu0 0
  %2814 = vmatpush1.bf16.msra.mxu0 0
  %2815 = vmatprep.subr.bf16.mxu0 0
  %2816 = vmatpush1.bf16.msra.mxu0 0
  %2817 = vmatprep.subr.bf16.mxu0 0
  %2818 = vmatpush1.bf16.msra.mxu0 0
  %2819 = vmatprep.subr.bf16.mxu0 0
  %2820 = vmatpush1.bf16.msra.mxu0 0
  %2821 = vmatprep.subr.bf16.mxu0 0
  %2822 = vmatpush1.bf16.msra.mxu0 0
  %2823 = vmatprep.subr.bf16.mxu0 0
  %2824 = vmatpush1.bf16.msra.mxu0 0
  %2825 = vmatprep.subr.bf16.mxu0 0
  %2826 = vmatpush1.bf16.msra.mxu0 0
  %2827 = vmatprep.mubr.bf16.mxu0 0
  %2828 = vmatmul.mubr.bf16.gmra.mrb[0].mxu0 %v693
  %v2829 = vpop.f32.mrb[0].mxu0
  %v2830 = vadd.f32 0.0, %v2829
  %v2831 = vpop.f32.mrb[0].mxu0
  %v2832 = vadd.f32 0.0, %v2831
  %v2833 = vpop.f32.mrb[0].mxu0
  %v2834 = vpop.f32.mrb[0].mxu0
  %2835 = vdwg.mxu0
  %2836 = vmatprep.subr.bf16.mxu0 %v2106
  %2837 = vmatpush1.bf16.msra.mxu0 %v2105
  %2838 = vmatprep.subr.bf16.mxu0 %v2134
  %2839 = vmatpush1.bf16.msra.mxu0 %v2133
  %2840 = vmatprep.subr.bf16.mxu0 %v2162
  %2841 = vmatpush1.bf16.msra.mxu0 %v2161
  %2842 = vmatprep.subr.bf16.mxu0 %v2190
  %2843 = vmatpush1.bf16.msra.mxu0 %v2189
  %2844 = vmatprep.subr.bf16.mxu0 0
  %2845 = vmatpush1.bf16.msra.mxu0 0
  %2846 = vmatprep.subr.bf16.mxu0 0
  %2847 = vmatpush1.bf16.msra.mxu0 0
  %2848 = vmatprep.subr.bf16.mxu0 0
  %2849 = vmatpush1.bf16.msra.mxu0 0
  %2850 = vmatprep.subr.bf16.mxu0 0
  %2851 = vmatpush1.bf16.msra.mxu0 0
  %2852 = vmatprep.subr.bf16.mxu0 0
  %2853 = vmatpush1.bf16.msra.mxu0 0
  %2854 = vmatprep.subr.bf16.mxu0 0
  %2855 = vmatpush1.bf16.msra.mxu0 0
  %2856 = vmatprep.subr.bf16.mxu0 0
  %2857 = vmatpush1.bf16.msra.mxu0 0
  %2858 = vmatprep.subr.bf16.mxu0 0
  %2859 = vmatpush1.bf16.msra.mxu0 0
  %2860 = vmatprep.subr.bf16.mxu0 0
  %2861 = vmatpush1.bf16.msra.mxu0 0
  %2862 = vmatprep.subr.bf16.mxu0 0
  %2863 = vmatpush1.bf16.msra.mxu0 0
  %2864 = vmatprep.subr.bf16.mxu0 0
  %2865 = vmatpush1.bf16.msra.mxu0 0
  %2866 = vmatprep.subr.bf16.mxu0 0
  %2867 = vmatpush1.bf16.msra.mxu0 0
  %2868 = vmatprep.mubr.bf16.mxu0 0
  %2869 = vmatmul.mubr.bf16.gmra.mrb[0].mxu0 %v693
  %v2870 = vpop.f32.mrb[0].mxu0
  %v2871 = vadd.f32 0.0, %v2870
  %v2872 = vpop.f32.mrb[0].mxu0
  %v2873 = vadd.f32 0.0, %v2872
  %v2874 = vpop.f32.mrb[0].mxu0
  %v2875 = vpop.f32.mrb[0].mxu0
  %2876 = vdwg.mxu0
  %v2877 = vmax.f32 %v2338, 0.0
  %v2878 = vmax.f32 %v2340, 0.0
  %v2879 = vmax.f32 %v2379, 0.0
  %v2880 = vmax.f32 %v2381, 0.0
  %v2881 = vmax.f32 %v2420, 0.0
  %v2882 = vmax.f32 %v2422, 0.0
  %v2883 = vmax.f32 %v2461, 0.0
  %v2884 = vmax.f32 %v2463, 0.0
  %v2885 = vmax.f32 %v2502, 0.0
  %v2886 = vmax.f32 %v2504, 0.0
  %v2887 = vmax.f32 %v2543, 0.0
  %v2888 = vmax.f32 %v2545, 0.0
  %v2889 = vmax.f32 %v2584, 0.0
  %v2890 = vmax.f32 %v2586, 0.0
  %v2891 = vmax.f32 %v2625, 0.0
  %v2892 = vmax.f32 %v2627, 0.0
  %v2893 = vmax.f32 %v2666, 0.0
  %v2894 = vmax.f32 %v2668, 0.0
  %v2895 = vmax.f32 %v2707, 0.0
  %v2896 = vmax.f32 %v2709, 0.0
  %v2897 = vmax.f32 %v2748, 0.0
  %v2898 = vmax.f32 %v2750, 0.0
  %v2899 = vmax.f32 %v2789, 0.0
  %v2900 = vmax.f32 %v2791, 0.0
  %v2901 = vmax.f32 %v2830, 0.0
  %v2902 = vmax.f32 %v2832, 0.0
  %v2903 = vmax.f32 %v2871, 0.0
  %v2904 = vmax.f32 %v2873, 0.0
  %v2933 = vcombine.low %v2877, %v2878
  %v2934 = vcombine.low %v2879, %v2880
  %v2935 = vcombine.low %v2881, %v2882
  %v2936 = vcombine.low %v2883, %v2884
  %v2938 = vunpack.c.l.s4 1966171168
  %v2939 = vunpack.c.0.s8 %v2938
  %v2940 = vlaneseq
  %v2941 = vshrl.u32 %v2940, 7
  %v2942 = vsub.s32 %v2939, %v2941
  %v2943 = vrot.slane %v2933, %v2942
  %v2945 = vunpack.c.l.s4 1966171168
  %v2946 = vunpack.c.0.s8 %v2945
  %v2947 = vlaneseq
  %v2948 = vshrl.u32 %v2947, 7
  %v2949 = vsub.s32 %v2946, %v2948
  %v2950 = vrot.slane %v2934, %v2949
  %v2952 = vunpack.c.l.s4 1966171168
  %v2953 = vunpack.c.0.s8 %v2952
  %v2954 = vlaneseq
  %v2955 = vshrl.u32 %v2954, 7
  %v2956 = vsub.s32 %v2953, %v2955
  %v2957 = vrot.slane %v2935, %v2956
  %v2959 = vunpack.c.l.s4 1966171168
  %v2960 = vunpack.c.0.s8 %v2959
  %v2961 = vlaneseq
  %v2962 = vshrl.u32 %v2961, 7
  %v2963 = vsub.s32 %v2960, %v2962
  %v2964 = vrot.slane %v2936, %v2963
  %v2965 = vcombine.low %v2943, %v2950
  %v2966 = vcombine.low %v2957, %v2964
  %v2968 = vunpack.c.l.s4 1966171168
  %v2969 = vunpack.c.0.s8 %v2968
  %v2970 = vlaneseq
  %v2971 = vshrl.u32 %v2970, 7
  %v2972 = vsub.s32 %v2969, %v2971
  %v2973 = vrot.slane %v2965, %v2972
  %v2975 = vunpack.c.l.s4 1966171168
  %v2976 = vunpack.c.0.s8 %v2975
  %v2977 = vlaneseq
  %v2978 = vshrl.u32 %v2977, 7
  %v2979 = vsub.s32 %v2976, %v2978
  %v2980 = vrot.slane %v2966, %v2979
  %v2981 = vcombine.low %v2973, %v2980
  %v2982 = vcombine.low %v2885, %v2886
  %v2983 = vcombine.low %v2887, %v2888
  %v2984 = vcombine.low %v2889, %v2890
  %v2985 = vcombine.low %v2891, %v2892
  %v2987 = vunpack.c.l.s4 1966171168
  %v2988 = vunpack.c.0.s8 %v2987
  %v2989 = vlaneseq
  %v2990 = vshrl.u32 %v2989, 7
  %v2991 = vsub.s32 %v2988, %v2990
  %v2992 = vrot.slane %v2982, %v2991
  %v2994 = vunpack.c.l.s4 1966171168
  %v2995 = vunpack.c.0.s8 %v2994
  %v2996 = vlaneseq
  %v2997 = vshrl.u32 %v2996, 7
  %v2998 = vsub.s32 %v2995, %v2997
  %v2999 = vrot.slane %v2983, %v2998
  %v3001 = vunpack.c.l.s4 1966171168
  %v3002 = vunpack.c.0.s8 %v3001
  %v3003 = vlaneseq
  %v3004 = vshrl.u32 %v3003, 7
  %v3005 = vsub.s32 %v3002, %v3004
  %v3006 = vrot.slane %v2984, %v3005
  %v3008 = vunpack.c.l.s4 1966171168
  %v3009 = vunpack.c.0.s8 %v3008
  %v3010 = vlaneseq
  %v3011 = vshrl.u32 %v3010, 7
  %v3012 = vsub.s32 %v3009, %v3011
  %v3013 = vrot.slane %v2985, %v3012
  %v3014 = vcombine.low %v2992, %v2999
  %v3015 = vcombine.low %v3006, %v3013
  %v3017 = vunpack.c.l.s4 1966171168
  %v3018 = vunpack.c.0.s8 %v3017
  %v3019 = vlaneseq
  %v3020 = vshrl.u32 %v3019, 7
  %v3021 = vsub.s32 %v3018, %v3020
  %v3022 = vrot.slane %v3014, %v3021
  %v3024 = vunpack.c.l.s4 1966171168
  %v3025 = vunpack.c.0.s8 %v3024
  %v3026 = vlaneseq
  %v3027 = vshrl.u32 %v3026, 7
  %v3028 = vsub.s32 %v3025, %v3027
  %v3029 = vrot.slane %v3015, %v3028
  %v3030 = vcombine.low %v3022, %v3029
  %v3031 = vcombine.low %v2893, %v2894
  %v3032 = vcombine.low %v2895, %v2896
  %v3033 = vcombine.low %v2897, %v2898
  %v3034 = vcombine.low %v2899, %v2900
  %v3036 = vunpack.c.l.s4 1966171168
  %v3037 = vunpack.c.0.s8 %v3036
  %v3038 = vlaneseq
  %v3039 = vshrl.u32 %v3038, 7
  %v3040 = vsub.s32 %v3037, %v3039
  %v3041 = vrot.slane %v3031, %v3040
  %v3043 = vunpack.c.l.s4 1966171168
  %v3044 = vunpack.c.0.s8 %v3043
  %v3045 = vlaneseq
  %v3046 = vshrl.u32 %v3045, 7
  %v3047 = vsub.s32 %v3044, %v3046
  %v3048 = vrot.slane %v3032, %v3047
  %v3050 = vunpack.c.l.s4 1966171168
  %v3051 = vunpack.c.0.s8 %v3050
  %v3052 = vlaneseq
  %v3053 = vshrl.u32 %v3052, 7
  %v3054 = vsub.s32 %v3051, %v3053
  %v3055 = vrot.slane %v3033, %v3054
  %v3057 = vunpack.c.l.s4 1966171168
  %v3058 = vunpack.c.0.s8 %v3057
  %v3059 = vlaneseq
  %v3060 = vshrl.u32 %v3059, 7
  %v3061 = vsub.s32 %v3058, %v3060
  %v3062 = vrot.slane %v3034, %v3061
  %v3063 = vcombine.low %v3041, %v3048
  %v3064 = vcombine.low %v3055, %v3062
  %v3066 = vunpack.c.l.s4 1966171168
  %v3067 = vunpack.c.0.s8 %v3066
  %v3068 = vlaneseq
  %v3069 = vshrl.u32 %v3068, 7
  %v3070 = vsub.s32 %v3067, %v3069
  %v3071 = vrot.slane %v3063, %v3070
  %v3073 = vunpack.c.l.s4 1966171168
  %v3074 = vunpack.c.0.s8 %v3073
  %v3075 = vlaneseq
  %v3076 = vshrl.u32 %v3075, 7
  %v3077 = vsub.s32 %v3074, %v3076
  %v3078 = vrot.slane %v3064, %v3077
  %v3079 = vcombine.low %v3071, %v3078
  %v3080 = vcombine.low %v2901, %v2902
  %v3081 = vcombine.low %v2903, %v2904
  %v3083 = vunpack.c.l.s4 1966171168
  %v3084 = vunpack.c.0.s8 %v3083
  %v3085 = vlaneseq
  %v3086 = vshrl.u32 %v3085, 7
  %v3087 = vsub.s32 %v3084, %v3086
  %v3088 = vrot.slane %v3080, %v3087
  %v3090 = vunpack.c.l.s4 1966171168
  %v3091 = vunpack.c.0.s8 %v3090
  %v3092 = vlaneseq
  %v3093 = vshrl.u32 %v3092, 7
  %v3094 = vsub.s32 %v3091, %v3093
  %v3095 = vrot.slane %v3081, %v3094
  %v3096 = vcombine.low %v3088, %v3095
  %v3098 = vunpack.c.l.s4 1966171168
  %v3099 = vunpack.c.0.s8 %v3098
  %v3100 = vlaneseq
  %v3101 = vshrl.u32 %v3100, 7
  %v3102 = vsub.s32 %v3099, %v3101
  %v3103 = vrot.slane %v3096, %v3102
  %s3108 = scalar_lea.vmem [#allocation2], 1
  %3109 = vst [vmem:[%s3108] ss:$8 sm:$0xf] %v2981
  %3110 = vst [vmem:[%s3108] ss:$8 sm:$0xf0] %v2981
  %s3111 = scalar_lea.vmem [#allocation2], 65
  %3112 = vst [vmem:[%s3111] ss:$8 sm:$0xf] %v3030
  %3113 = vst [vmem:[%s3111] ss:$8 sm:$0xf0] %v3030
  %s3114 = scalar_lea.vmem [#allocation2], 129
  %3115 = vst [vmem:[%s3114] ss:$8 sm:$0xf] %v3079
  %3116 = vst [vmem:[%s3114] ss:$8 sm:$0xf0] %v3079
  %s3117 = scalar_lea.vmem [#allocation2], 193
  %3118 = vst.msk [vmem:[%s3117] ss:$8 sm:$0xf] %vm1511, %v3103
  %3119 = vst.msk [vmem:[%s3117] ss:$8 sm:$0x0] %vm1511, %v3103
  %v3120 = vcombine.high %v2943, %v2950
  %v3121 = vcombine.high %v2957, %v2964
  %v3123 = vunpack.c.l.s4 1966171168
  %v3124 = vunpack.c.0.s8 %v3123
  %v3125 = vlaneseq
  %v3126 = vshrl.u32 %v3125, 7
  %v3127 = vsub.s32 %v3124, %v3126
  %v3128 = vrot.slane %v3120, %v3127
  %v3130 = vunpack.c.l.s4 1966171168
  %v3131 = vunpack.c.0.s8 %v3130
  %v3132 = vlaneseq
  %v3133 = vshrl.u32 %v3132, 7
  %v3134 = vsub.s32 %v3131, %v3133
  %v3135 = vrot.slane %v3121, %v3134
  %v3136 = vcombine.low %v3128, %v3135
  %v3137 = vcombine.high %v2992, %v2999
  %v3138 = vcombine.high %v3006, %v3013
  %v3140 = vunpack.c.l.s4 1966171168
  %v3141 = vunpack.c.0.s8 %v3140
  %v3142 = vlaneseq
  %v3143 = vshrl.u32 %v3142, 7
  %v3144 = vsub.s32 %v3141, %v3143
  %v3145 = vrot.slane %v3137, %v3144
  %v3147 = vunpack.c.l.s4 1966171168
  %v3148 = vunpack.c.0.s8 %v3147
  %v3149 = vlaneseq
  %v3150 = vshrl.u32 %v3149, 7
  %v3151 = vsub.s32 %v3148, %v3150
  %v3152 = vrot.slane %v3138, %v3151
  %v3153 = vcombine.low %v3145, %v3152
  %v3154 = vcombine.high %v3041, %v3048
  %v3155 = vcombine.high %v3055, %v3062
  %v3157 = vunpack.c.l.s4 1966171168
  %v3158 = vunpack.c.0.s8 %v3157
  %v3159 = vlaneseq
  %v3160 = vshrl.u32 %v3159, 7
  %v3161 = vsub.s32 %v3158, %v3160
  %v3162 = vrot.slane %v3154, %v3161
  %v3164 = vunpack.c.l.s4 1966171168
  %v3165 = vunpack.c.0.s8 %v3164
  %v3166 = vlaneseq
  %v3167 = vshrl.u32 %v3166, 7
  %v3168 = vsub.s32 %v3165, %v3167
  %v3169 = vrot.slane %v3155, %v3168
  %v3170 = vcombine.low %v3162, %v3169
  %v3171 = vcombine.high %v3088, %v3095
  %v3173 = vunpack.c.l.s4 1966171168
  %v3174 = vunpack.c.0.s8 %v3173
  %v3175 = vlaneseq
  %v3176 = vshrl.u32 %v3175, 7
  %v3177 = vsub.s32 %v3174, %v3176
  %v3178 = vrot.slane %v3171, %v3177
  %s3183 = scalar_lea.vmem [#allocation2], 225
  %3184 = vst [vmem:[%s3183] ss:$8 sm:$0xf] %v3136
  %3185 = vst [vmem:[%s3183] ss:$8 sm:$0xf0] %v3136
  %s3186 = scalar_lea.vmem [#allocation2], 289
  %3187 = vst [vmem:[%s3186] ss:$8 sm:$0xf] %v3153
  %3188 = vst [vmem:[%s3186] ss:$8 sm:$0xf0] %v3153
  %s3189 = scalar_lea.vmem [#allocation2], 353
  %3190 = vst [vmem:[%s3189] ss:$8 sm:$0xf] %v3170
  %3191 = vst [vmem:[%s3189] ss:$8 sm:$0xf0] %v3170
  %s3192 = scalar_lea.vmem [#allocation2], 417
  %3193 = vst.msk [vmem:[%s3192] ss:$8 sm:$0xf] %vm1511, %v3178
  %3194 = vst.msk [vmem:[%s3192] ss:$8 sm:$0x0] %vm1511, %v3178
  %v3195 = vcombine.high %v2973, %v2980
  %v3196 = vcombine.high %v3022, %v3029
  %v3197 = vcombine.high %v3071, %v3078
  %v3198 = vcombine.high %v3103, %v3103
  %s3203 = scalar_lea.vmem [#allocation2], 449
  %3204 = vst [vmem:[%s3203] ss:$8 sm:$0xf] %v3195
  %3205 = vst [vmem:[%s3203] ss:$8 sm:$0xf0] %v3195
  %s3206 = scalar_lea.vmem [#allocation2], 513
  %3207 = vst [vmem:[%s3206] ss:$8 sm:$0xf] %v3196
  %3208 = vst [vmem:[%s3206] ss:$8 sm:$0xf0] %v3196
  %s3209 = scalar_lea.vmem [#allocation2], 577
  %3210 = vst [vmem:[%s3209] ss:$8 sm:$0xf] %v3197
  %3211 = vst [vmem:[%s3209] ss:$8 sm:$0xf0] %v3197
  %s3212 = scalar_lea.vmem [#allocation2], 641
  %3213 = vst.msk [vmem:[%s3212] ss:$8 sm:$0xf] %vm1511, %v3198
  %3214 = vst.msk [vmem:[%s3212] ss:$8 sm:$0x0] %vm1511, %v3198
  %v3215 = vcombine.high %v3128, %v3135
  %v3216 = vcombine.high %v3145, %v3152
  %v3217 = vcombine.high %v3162, %v3169
  %v3218 = vcombine.high %v3178, %v3178
  %s3223 = scalar_lea.vmem [#allocation2], 673
  %3224 = vst [vmem:[%s3223] ss:$8 sm:$0xf] %v3215
  %3225 = vst [vmem:[%s3223] ss:$8 sm:$0xf0] %v3215
  %s3226 = scalar_lea.vmem [#allocation2], 737
  %3227 = vst [vmem:[%s3226] ss:$8 sm:$0xf] %v3216
  %3228 = vst [vmem:[%s3226] ss:$8 sm:$0xf0] %v3216
  %s3229 = scalar_lea.vmem [#allocation2], 801
  %3230 = vst [vmem:[%s3229] ss:$8 sm:$0xf] %v3217
  %3231 = vst [vmem:[%s3229] ss:$8 sm:$0xf0] %v3217
  %s3232 = scalar_lea.vmem [#allocation2], 865
  %3233 = vst.msk [vmem:[%s3232] ss:$8 sm:$0xf] %vm1511, %v3218
  %3234 = vst.msk [vmem:[%s3232] ss:$8 sm:$0x0] %vm1511, %v3218
  %v3235 = vld [vmem:[#allocation2] sm:$0xff]
  %v3236 = vld [vmem:[#allocation2 + $0x8] sm:$0xff]
  %v3237 = vld [vmem:[#allocation2 + $0x10] sm:$0xff]
  %v3238 = vld [vmem:[#allocation2 + $0x18] sm:$0xff]
  %v3239 = vld [vmem:[#allocation2 + $0x20] sm:$0xff]
  %v3240 = vld [vmem:[#allocation2 + $0x28] sm:$0xff]
  %v3241 = vld [vmem:[#allocation2 + $0x30] sm:$0xff]
  %v3242 = vld [vmem:[#allocation2 + $0x38] sm:$0xff]
  %v3243 = vld [vmem:[#allocation2 + $0x40] sm:$0xff]
  %v3244 = vld [vmem:[#allocation2 + $0x48] sm:$0xff]
  %v3245 = vld [vmem:[#allocation2 + $0x50] sm:$0xff]
  %v3246 = vld [vmem:[#allocation2 + $0x58] sm:$0xff]
  %v3247 = vld [vmem:[#allocation2 + $0x60] sm:$0xff]
  %v3248 = vld [vmem:[#allocation2 + $0x68] sm:$0xff]
  %v3249 = vld [vmem:[#allocation2 + $0x70] sm:$0xff]
  %v3250 = vld [vmem:[#allocation2 + $0x78] sm:$0xff]
  %v3251 = vld [vmem:[#allocation2 + $0x80] sm:$0xff]
  %v3252 = vld [vmem:[#allocation2 + $0x88] sm:$0xff]
  %v3253 = vld [vmem:[#allocation2 + $0x90] sm:$0xff]
  %v3254 = vld [vmem:[#allocation2 + $0x98] sm:$0xff]
  %v3255 = vld [vmem:[#allocation2 + $0xa0] sm:$0xff]
  %v3256 = vld [vmem:[#allocation2 + $0xa8] sm:$0xff]
  %v3257 = vld [vmem:[#allocation2 + $0xb0] sm:$0xff]
  %v3258 = vld [vmem:[#allocation2 + $0xb8] sm:$0xff]
  %v3259 = vld [vmem:[#allocation2 + $0xc0] sm:$0xff]
  %v3260 = vld [vmem:[#allocation2 + $0xc8] sm:$0xff]
  %v3261 = vld [vmem:[#allocation2 + $0xd0] sm:$0xff]
  %v3262 = vld [vmem:[#allocation2 + $0xd8] sm:$0xff]
  %v3263 = vpack.c.bf16 %v3235, %v3235
  %v3264 = vpack.c.bf16 %v3236, %v3236
  %v3265 = vpack.c.bf16 %v3237, %v3237
  %v3266 = vpack.c.bf16 %v3238, %v3238
  %v3267 = vpack.c.bf16 %v3239, %v3239
  %v3268 = vpack.c.bf16 %v3240, %v3240
  %v3269 = vpack.c.bf16 %v3241, %v3241
  %v3270 = vpack.c.bf16 %v3242, %v3242
  %v3271 = vpack.c.bf16 %v3243, %v3243
  %v3272 = vpack.c.bf16 %v3244, %v3244
  %v3273 = vpack.c.bf16 %v3245, %v3245
  %v3274 = vpack.c.bf16 %v3246, %v3246
  %v3275 = vpack.c.bf16 %v3247, %v3247
  %v3276 = vpack.c.bf16 %v3248, %v3248
  %v3277 = vpack.c.bf16 %v3249, %v3249
  %v3278 = vpack.c.bf16 %v3250, %v3250
  %v3279 = vpack.c.bf16 %v3251, %v3251
  %v3280 = vpack.c.bf16 %v3252, %v3252
  %v3281 = vpack.c.bf16 %v3253, %v3253
  %v3282 = vpack.c.bf16 %v3254, %v3254
  %v3283 = vpack.c.bf16 %v3255, %v3255
  %v3284 = vpack.c.bf16 %v3256, %v3256
  %v3285 = vpack.c.bf16 %v3257, %v3257
  %v3286 = vpack.c.bf16 %v3258, %v3258
  %v3287 = vpack.c.bf16 %v3259, %v3259
  %v3288 = vpack.c.bf16 %v3260, %v3260
  %v3289 = vpack.c.bf16 %v3261, %v3261
  %v3290 = vpack.c.bf16 %v3262, %v3262
  %v3291 = vld [vmem:[%s2] sm:$0xff]
  %v3292 = vld [vmem:[%s2 + $0x8] sm:$0xff]
  %v3293 = vld [vmem:[%s2 + $0x10] sm:$0xff]
  %v3294 = vld [vmem:[%s2 + $0x18] sm:$0xff]
  %v3295 = vld [vmem:[%s2 + $0x20] sm:$0xff]
  %v3296 = vld [vmem:[%s2 + $0x28] sm:$0xff]
  %v3297 = vld [vmem:[%s2 + $0x30] sm:$0xff]
  %v3298 = vld [vmem:[%s2 + $0x38] sm:$0xff]
  %v3299 = vld [vmem:[%s2 + $0x40] sm:$0xff]
  %v3300 = vld [vmem:[%s2 + $0x48] sm:$0xff]
  %v3301 = vld [vmem:[%s2 + $0x50] sm:$0xff]
  %v3302 = vld [vmem:[%s2 + $0x58] sm:$0xff]
  %v3303 = vld [vmem:[%s2 + $0x60] sm:$0xff]
  %v3304 = vld [vmem:[%s2 + $0x68] sm:$0xff]
  %v3305 = vld [vmem:[#allocation2 + $0xe0] sm:$0xff]
  %v3306 = vld [vmem:[#allocation2 + $0xe8] sm:$0xff]
  %v3307 = vld [vmem:[#allocation2 + $0xf0] sm:$0xff]
  %v3308 = vld [vmem:[#allocation2 + $0xf8] sm:$0xff]
  %v3309 = vld [vmem:[#allocation2 + $0x100] sm:$0xff]
  %v3310 = vld [vmem:[#allocation2 + $0x108] sm:$0xff]
  %v3311 = vld [vmem:[#allocation2 + $0x110] sm:$0xff]
  %v3312 = vld [vmem:[#allocation2 + $0x118] sm:$0xff]
  %v3313 = vld [vmem:[#allocation2 + $0x120] sm:$0xff]
  %v3314 = vld [vmem:[#allocation2 + $0x128] sm:$0xff]
  %v3315 = vld [vmem:[#allocation2 + $0x130] sm:$0xff]
  %v3316 = vld [vmem:[#allocation2 + $0x138] sm:$0xff]
  %v3317 = vld [vmem:[#allocation2 + $0x140] sm:$0xff]
  %v3318 = vld [vmem:[#allocation2 + $0x148] sm:$0xff]
  %v3319 = vld [vmem:[#allocation2 + $0x150] sm:$0xff]
  %v3320 = vld [vmem:[#allocation2 + $0x158] sm:$0xff]
  %v3321 = vld [vmem:[#allocation2 + $0x160] sm:$0xff]
  %v3322 = vld [vmem:[#allocation2 + $0x168] sm:$0xff]
  %v3323 = vld [vmem:[#allocation2 + $0x170] sm:$0xff]
  %v3324 = vld [vmem:[#allocation2 + $0x178] sm:$0xff]
  %v3325 = vld [vmem:[#allocation2 + $0x180] sm:$0xff]
  %v3326 = vld [vmem:[#allocation2 + $0x188] sm:$0xff]
  %v3327 = vld [vmem:[#allocation2 + $0x190] sm:$0xff]
  %v3328 = vld [vmem:[#allocation2 + $0x198] sm:$0xff]
  %v3329 = vld [vmem:[#allocation2 + $0x1a0] sm:$0xff]
  %v3330 = vld [vmem:[#allocation2 + $0x1a8] sm:$0xff]
  %v3331 = vld [vmem:[#allocation2 + $0x1b0] sm:$0xff]
  %v3332 = vld [vmem:[#allocation2 + $0x1b8] sm:$0xff]
  %v3333 = vpack.c.bf16 %v3305, %v3305
  %v3334 = vpack.c.bf16 %v3306, %v3306
  %v3335 = vpack.c.bf16 %v3307, %v3307
  %v3336 = vpack.c.bf16 %v3308, %v3308
  %v3337 = vpack.c.bf16 %v3309, %v3309
  %v3338 = vpack.c.bf16 %v3310, %v3310
  %v3339 = vpack.c.bf16 %v3311, %v3311
  %v3340 = vpack.c.bf16 %v3312, %v3312
  %v3341 = vpack.c.bf16 %v3313, %v3313
  %v3342 = vpack.c.bf16 %v3314, %v3314
  %v3343 = vpack.c.bf16 %v3315, %v3315
  %v3344 = vpack.c.bf16 %v3316, %v3316
  %v3345 = vpack.c.bf16 %v3317, %v3317
  %v3346 = vpack.c.bf16 %v3318, %v3318
  %v3347 = vpack.c.bf16 %v3319, %v3319
  %v3348 = vpack.c.bf16 %v3320, %v3320
  %v3349 = vpack.c.bf16 %v3321, %v3321
  %v3350 = vpack.c.bf16 %v3322, %v3322
  %v3351 = vpack.c.bf16 %v3323, %v3323
  %v3352 = vpack.c.bf16 %v3324, %v3324
  %v3353 = vpack.c.bf16 %v3325, %v3325
  %v3354 = vpack.c.bf16 %v3326, %v3326
  %v3355 = vpack.c.bf16 %v3327, %v3327
  %v3356 = vpack.c.bf16 %v3328, %v3328
  %v3357 = vpack.c.bf16 %v3329, %v3329
  %v3358 = vpack.c.bf16 %v3330, %v3330
  %v3359 = vpack.c.bf16 %v3331, %v3331
  %v3360 = vpack.c.bf16 %v3332, %v3332
  %v3361 = vld [vmem:[%s2 + $0x70] sm:$0xff]
  %v3362 = vld [vmem:[%s2 + $0x78] sm:$0xff]
  %v3363 = vld [vmem:[%s2 + $0x80] sm:$0xff]
  %v3364 = vld [vmem:[%s2 + $0x88] sm:$0xff]
  %v3365 = vld [vmem:[%s2 + $0x90] sm:$0xff]
  %v3366 = vld [vmem:[%s2 + $0x98] sm:$0xff]
  %v3367 = vld [vmem:[%s2 + $0xa0] sm:$0xff]
  %v3368 = vld [vmem:[%s2 + $0xa8] sm:$0xff]
  %v3369 = vld [vmem:[%s2 + $0xb0] sm:$0xff]
  %v3370 = vld [vmem:[%s2 + $0xb8] sm:$0xff]
  %v3371 = vld [vmem:[%s2 + $0xc0] sm:$0xff]
  %v3372 = vld [vmem:[%s2 + $0xc8] sm:$0xff]
  %v3373 = vld [vmem:[%s2 + $0xd0] sm:$0xff]
  %v3374 = vld [vmem:[%s2 + $0xd8] sm:$0xff]
  %v3389 = vunpack.c.l.b16 %v3361
  %v3390 = vunpack.c.h.b16 %v3361
  %v3391 = vunpack.c.l.b16 %v3362
  %v3392 = vunpack.c.h.b16 %v3362
  %v3393 = vunpack.c.l.b16 %v3363
  %v3394 = vunpack.c.h.b16 %v3363
  %v3395 = vunpack.c.l.b16 %v3364
  %v3396 = vunpack.c.h.b16 %v3364
  %v3397 = vunpack.c.l.b16 %v3365
  %v3398 = vunpack.c.h.b16 %v3365
  %v3399 = vunpack.c.l.b16 %v3366
  %v3400 = vunpack.c.h.b16 %v3366
  %v3401 = vunpack.c.l.b16 %v3367
  %v3402 = vunpack.c.h.b16 %v3367
  %v3403 = vunpack.c.l.b16 %v3368
  %v3404 = vunpack.c.h.b16 %v3368
  %v3405 = vunpack.c.l.b16 %v3369
  %v3406 = vunpack.c.h.b16 %v3369
  %v3407 = vunpack.c.l.b16 %v3370
  %v3408 = vunpack.c.h.b16 %v3370
  %v3409 = vunpack.c.l.b16 %v3371
  %v3410 = vunpack.c.h.b16 %v3371
  %v3411 = vunpack.c.l.b16 %v3372
  %v3412 = vunpack.c.h.b16 %v3372
  %v3413 = vunpack.c.l.b16 %v3373
  %v3414 = vunpack.c.h.b16 %v3373
  %v3415 = vunpack.c.l.b16 %v3374
  %v3416 = vunpack.c.h.b16 %v3374
  %v3417 = vpack.c.b16 %v3389, %v3389
  %v3418 = vpack.c.b16 %v3390, %v3390
  %v3419 = vpack.c.b16 %v3391, %v3391
  %v3420 = vpack.c.b16 %v3392, %v3392
  %v3421 = vpack.c.b16 %v3393, %v3393
  %v3422 = vpack.c.b16 %v3394, %v3394
  %v3423 = vpack.c.b16 %v3395, %v3395
  %v3424 = vpack.c.b16 %v3396, %v3396
  %v3425 = vpack.c.b16 %v3397, %v3397
  %v3426 = vpack.c.b16 %v3398, %v3398
  %v3427 = vpack.c.b16 %v3399, %v3399
  %v3428 = vpack.c.b16 %v3400, %v3400
  %v3429 = vpack.c.b16 %v3401, %v3401
  %v3430 = vpack.c.b16 %v3402, %v3402
  %v3431 = vpack.c.b16 %v3403, %v3403
  %v3432 = vpack.c.b16 %v3404, %v3404
  %v3433 = vpack.c.b16 %v3405, %v3405
  %v3434 = vpack.c.b16 %v3406, %v3406
  %v3435 = vpack.c.b16 %v3407, %v3407
  %v3436 = vpack.c.b16 %v3408, %v3408
  %v3437 = vpack.c.b16 %v3409, %v3409
  %v3438 = vpack.c.b16 %v3410, %v3410
  %v3439 = vpack.c.b16 %v3411, %v3411
  %v3440 = vpack.c.b16 %v3412, %v3412
  %v3441 = vpack.c.b16 %v3413, %v3413
  %v3442 = vpack.c.b16 %v3414, %v3414
  %v3443 = vpack.c.b16 %v3415, %v3415
  %v3444 = vpack.c.b16 %v3416, %v3416
  %3473 = vmatprep.subr.bf16.mxu0 %v3418
  %3474 = vmatpush1.bf16.xpose.msra.mxu0 %v3417
  %3475 = vmatprep.subr.bf16.mxu0 0
  %3476 = vmatpush1.bf16.xpose.msra.mxu0 0
  %3477 = vmatprep.subr.bf16.mxu0 0
  %3478 = vmatpush1.bf16.xpose.msra.mxu0 0
  %3479 = vmatprep.subr.bf16.mxu0 0
  %3480 = vmatpush1.bf16.xpose.msra.mxu0 0
  %3481 = vmatprep.subr.bf16.mxu0 0
  %3482 = vmatpush1.bf16.xpose.msra.mxu0 0
  %3483 = vmatprep.subr.bf16.mxu0 0
  %3484 = vmatpush1.bf16.xpose.msra.mxu0 0
  %3485 = vmatprep.subr.bf16.mxu0 0
  %3486 = vmatpush1.bf16.xpose.msra.mxu0 0
  %3487 = vmatprep.subr.bf16.mxu0 0
  %3488 = vmatpush1.bf16.xpose.msra.mxu0 0
  %3489 = vmatprep.subr.bf16.mxu0 0
  %3490 = vmatpush1.bf16.xpose.msra.mxu0 0
  %3491 = vmatprep.subr.bf16.mxu0 0
  %3492 = vmatpush1.bf16.xpose.msra.mxu0 0
  %3493 = vmatprep.subr.bf16.mxu0 0
  %3494 = vmatpush1.bf16.xpose.msra.mxu0 0
  %3495 = vmatprep.subr.bf16.mxu0 0
  %3496 = vmatpush1.bf16.xpose.msra.mxu0 0
  %3497 = vmatprep.subr.bf16.mxu0 0
  %3498 = vmatpush1.bf16.xpose.msra.mxu0 0
  %3499 = vmatprep.subr.bf16.mxu0 0
  %3500 = vmatpush1.bf16.xpose.msra.mxu0 0
  %3501 = vmatprep.subr.bf16.mxu0 0
  %3502 = vmatpush1.bf16.xpose.msra.mxu0 0
  %3503 = vmatprep.subr.bf16.mxu0 0
  %3504 = vmatpush1.bf16.xpose.msra.mxu0 0
  %3505 = vmatprep.mubr.bf16.mxu0 %v3334
  %3506 = vmatmul.mubr.bf16.gmra.mrb[0].mxu0 %v3333
  %v3507 = vpop.f32.mrb[0].mxu0
  %v3508 = vadd.f32 0.0, %v3507
  %v3509 = vpop.f32.mrb[0].mxu0
  %v3510 = vpop.f32.mrb[0].mxu0
  %v3511 = vpop.f32.mrb[0].mxu0
  %3512 = vdwg.mxu0
  %3513 = vmatprep.subr.bf16.mxu0 %v3420
  %3514 = vmatpush1.bf16.xpose.msra.mxu0 %v3419
  %3515 = vmatprep.subr.bf16.mxu0 0
  %3516 = vmatpush1.bf16.xpose.msra.mxu0 0
  %3517 = vmatprep.subr.bf16.mxu0 0
  %3518 = vmatpush1.bf16.xpose.msra.mxu0 0
  %3519 = vmatprep.subr.bf16.mxu0 0
  %3520 = vmatpush1.bf16.xpose.msra.mxu0 0
  %3521 = vmatprep.subr.bf16.mxu0 0
  %3522 = vmatpush1.bf16.xpose.msra.mxu0 0
  %3523 = vmatprep.subr.bf16.mxu0 0
  %3524 = vmatpush1.bf16.xpose.msra.mxu0 0
  %3525 = vmatprep.subr.bf16.mxu0 0
  %3526 = vmatpush1.bf16.xpose.msra.mxu0 0
  %3527 = vmatprep.subr.bf16.mxu0 0
  %3528 = vmatpush1.bf16.xpose.msra.mxu0 0
  %3529 = vmatprep.subr.bf16.mxu0 0
  %3530 = vmatpush1.bf16.xpose.msra.mxu0 0
  %3531 = vmatprep.subr.bf16.mxu0 0
  %3532 = vmatpush1.bf16.xpose.msra.mxu0 0
  %3533 = vmatprep.subr.bf16.mxu0 0
  %3534 = vmatpush1.bf16.xpose.msra.mxu0 0
  %3535 = vmatprep.subr.bf16.mxu0 0
  %3536 = vmatpush1.bf16.xpose.msra.mxu0 0
  %3537 = vmatprep.subr.bf16.mxu0 0
  %3538 = vmatpush1.bf16.xpose.msra.mxu0 0
  %3539 = vmatprep.subr.bf16.mxu0 0
  %3540 = vmatpush1.bf16.xpose.msra.mxu0 0
  %3541 = vmatprep.subr.bf16.mxu0 0
  %3542 = vmatpush1.bf16.xpose.msra.mxu0 0
  %3543 = vmatprep.subr.bf16.mxu0 0
  %3544 = vmatpush1.bf16.xpose.msra.mxu0 0
  %3545 = vmatprep.mubr.bf16.mxu0 %v3336
  %3546 = vmatmul.mubr.bf16.gmra.mrb[0].mxu0 %v3335
  %v3547 = vpop.f32.mrb[0].mxu0
  %v3548 = vadd.f32 %v3508, %v3547
  %v3549 = vpop.f32.mrb[0].mxu0
  %v3550 = vpop.f32.mrb[0].mxu0
  %v3551 = vpop.f32.mrb[0].mxu0
  %3552 = vdwg.mxu0
  %3553 = vmatprep.subr.bf16.mxu0 %v3422
  %3554 = vmatpush1.bf16.xpose.msra.mxu0 %v3421
  %3555 = vmatprep.subr.bf16.mxu0 0
  %3556 = vmatpush1.bf16.xpose.msra.mxu0 0
  %3557 = vmatprep.subr.bf16.mxu0 0
  %3558 = vmatpush1.bf16.xpose.msra.mxu0 0
  %3559 = vmatprep.subr.bf16.mxu0 0
  %3560 = vmatpush1.bf16.xpose.msra.mxu0 0
  %3561 = vmatprep.subr.bf16.mxu0 0
  %3562 = vmatpush1.bf16.xpose.msra.mxu0 0
  %3563 = vmatprep.subr.bf16.mxu0 0
  %3564 = vmatpush1.bf16.xpose.msra.mxu0 0
  %3565 = vmatprep.subr.bf16.mxu0 0
  %3566 = vmatpush1.bf16.xpose.msra.mxu0 0
  %3567 = vmatprep.subr.bf16.mxu0 0
  %3568 = vmatpush1.bf16.xpose.msra.mxu0 0
  %3569 = vmatprep.subr.bf16.mxu0 0
  %3570 = vmatpush1.bf16.xpose.msra.mxu0 0
  %3571 = vmatprep.subr.bf16.mxu0 0
  %3572 = vmatpush1.bf16.xpose.msra.mxu0 0
  %3573 = vmatprep.subr.bf16.mxu0 0
  %3574 = vmatpush1.bf16.xpose.msra.mxu0 0
  %3575 = vmatprep.subr.bf16.mxu0 0
  %3576 = vmatpush1.bf16.xpose.msra.mxu0 0
  %3577 = vmatprep.subr.bf16.mxu0 0
  %3578 = vmatpush1.bf16.xpose.msra.mxu0 0
  %3579 = vmatprep.subr.bf16.mxu0 0
  %3580 = vmatpush1.bf16.xpose.msra.mxu0 0
  %3581 = vmatprep.subr.bf16.mxu0 0
  %3582 = vmatpush1.bf16.xpose.msra.mxu0 0
  %3583 = vmatprep.subr.bf16.mxu0 0
  %3584 = vmatpush1.bf16.xpose.msra.mxu0 0
  %3585 = vmatprep.mubr.bf16.mxu0 %v3338
  %3586 = vmatmul.mubr.bf16.gmra.mrb[0].mxu0 %v3337
  %v3587 = vpop.f32.mrb[0].mxu0
  %v3588 = vadd.f32 %v3548, %v3587
  %v3589 = vpop.f32.mrb[0].mxu0
  %v3590 = vpop.f32.mrb[0].mxu0
  %v3591 = vpop.f32.mrb[0].mxu0
  %3592 = vdwg.mxu0
  %3593 = vmatprep.subr.bf16.mxu0 %v3424
  %3594 = vmatpush1.bf16.xpose.msra.mxu0 %v3423
  %3595 = vmatprep.subr.bf16.mxu0 0
  %3596 = vmatpush1.bf16.xpose.msra.mxu0 0
  %3597 = vmatprep.subr.bf16.mxu0 0
  %3598 = vmatpush1.bf16.xpose.msra.mxu0 0
  %3599 = vmatprep.subr.bf16.mxu0 0
  %3600 = vmatpush1.bf16.xpose.msra.mxu0 0
  %3601 = vmatprep.subr.bf16.mxu0 0
  %3602 = vmatpush1.bf16.xpose.msra.mxu0 0
  %3603 = vmatprep.subr.bf16.mxu0 0
  %3604 = vmatpush1.bf16.xpose.msra.mxu0 0
  %3605 = vmatprep.subr.bf16.mxu0 0
  %3606 = vmatpush1.bf16.xpose.msra.mxu0 0
  %3607 = vmatprep.subr.bf16.mxu0 0
  %3608 = vmatpush1.bf16.xpose.msra.mxu0 0
  %3609 = vmatprep.subr.bf16.mxu0 0
  %3610 = vmatpush1.bf16.xpose.msra.mxu0 0
  %3611 = vmatprep.subr.bf16.mxu0 0
  %3612 = vmatpush1.bf16.xpose.msra.mxu0 0
  %3613 = vmatprep.subr.bf16.mxu0 0
  %3614 = vmatpush1.bf16.xpose.msra.mxu0 0
  %3615 = vmatprep.subr.bf16.mxu0 0
  %3616 = vmatpush1.bf16.xpose.msra.mxu0 0
  %3617 = vmatprep.subr.bf16.mxu0 0
  %3618 = vmatpush1.bf16.xpose.msra.mxu0 0
  %3619 = vmatprep.subr.bf16.mxu0 0
  %3620 = vmatpush1.bf16.xpose.msra.mxu0 0
  %3621 = vmatprep.subr.bf16.mxu0 0
  %3622 = vmatpush1.bf16.xpose.msra.mxu0 0
  %3623 = vmatprep.subr.bf16.mxu0 0
  %3624 = vmatpush1.bf16.xpose.msra.mxu0 0
  %3625 = vmatprep.mubr.bf16.mxu0 %v3340
  %3626 = vmatmul.mubr.bf16.gmra.mrb[0].mxu0 %v3339
  %v3627 = vpop.f32.mrb[0].mxu0
  %v3628 = vadd.f32 %v3588, %v3627
  %v3629 = vpop.f32.mrb[0].mxu0
  %v3630 = vpop.f32.mrb[0].mxu0
  %v3631 = vpop.f32.mrb[0].mxu0
  %3632 = vdwg.mxu0
  %3633 = vmatprep.subr.bf16.mxu0 %v3426
  %3634 = vmatpush1.bf16.xpose.msra.mxu0 %v3425
  %3635 = vmatprep.subr.bf16.mxu0 0
  %3636 = vmatpush1.bf16.xpose.msra.mxu0 0
  %3637 = vmatprep.subr.bf16.mxu0 0
  %3638 = vmatpush1.bf16.xpose.msra.mxu0 0
  %3639 = vmatprep.subr.bf16.mxu0 0
  %3640 = vmatpush1.bf16.xpose.msra.mxu0 0
  %3641 = vmatprep.subr.bf16.mxu0 0
  %3642 = vmatpush1.bf16.xpose.msra.mxu0 0
  %3643 = vmatprep.subr.bf16.mxu0 0
  %3644 = vmatpush1.bf16.xpose.msra.mxu0 0
  %3645 = vmatprep.subr.bf16.mxu0 0
  %3646 = vmatpush1.bf16.xpose.msra.mxu0 0
  %3647 = vmatprep.subr.bf16.mxu0 0
  %3648 = vmatpush1.bf16.xpose.msra.mxu0 0
  %3649 = vmatprep.subr.bf16.mxu0 0
  %3650 = vmatpush1.bf16.xpose.msra.mxu0 0
  %3651 = vmatprep.subr.bf16.mxu0 0
  %3652 = vmatpush1.bf16.xpose.msra.mxu0 0
  %3653 = vmatprep.subr.bf16.mxu0 0
  %3654 = vmatpush1.bf16.xpose.msra.mxu0 0
  %3655 = vmatprep.subr.bf16.mxu0 0
  %3656 = vmatpush1.bf16.xpose.msra.mxu0 0
  %3657 = vmatprep.subr.bf16.mxu0 0
  %3658 = vmatpush1.bf16.xpose.msra.mxu0 0
  %3659 = vmatprep.subr.bf16.mxu0 0
  %3660 = vmatpush1.bf16.xpose.msra.mxu0 0
  %3661 = vmatprep.subr.bf16.mxu0 0
  %3662 = vmatpush1.bf16.xpose.msra.mxu0 0
  %3663 = vmatprep.subr.bf16.mxu0 0
  %3664 = vmatpush1.bf16.xpose.msra.mxu0 0
  %3665 = vmatprep.mubr.bf16.mxu0 %v3342
  %3666 = vmatmul.mubr.bf16.gmra.mrb[0].mxu0 %v3341
  %v3667 = vpop.f32.mrb[0].mxu0
  %v3668 = vadd.f32 %v3628, %v3667
  %v3669 = vpop.f32.mrb[0].mxu0
  %v3670 = vpop.f32.mrb[0].mxu0
  %v3671 = vpop.f32.mrb[0].mxu0
  %3672 = vdwg.mxu0
  %3673 = vmatprep.subr.bf16.mxu0 %v3428
  %3674 = vmatpush1.bf16.xpose.msra.mxu0 %v3427
  %3675 = vmatprep.subr.bf16.mxu0 0
  %3676 = vmatpush1.bf16.xpose.msra.mxu0 0
  %3677 = vmatprep.subr.bf16.mxu0 0
  %3678 = vmatpush1.bf16.xpose.msra.mxu0 0
  %3679 = vmatprep.subr.bf16.mxu0 0
  %3680 = vmatpush1.bf16.xpose.msra.mxu0 0
  %3681 = vmatprep.subr.bf16.mxu0 0
  %3682 = vmatpush1.bf16.xpose.msra.mxu0 0
  %3683 = vmatprep.subr.bf16.mxu0 0
  %3684 = vmatpush1.bf16.xpose.msra.mxu0 0
  %3685 = vmatprep.subr.bf16.mxu0 0
  %3686 = vmatpush1.bf16.xpose.msra.mxu0 0
  %3687 = vmatprep.subr.bf16.mxu0 0
  %3688 = vmatpush1.bf16.xpose.msra.mxu0 0
  %3689 = vmatprep.subr.bf16.mxu0 0
  %3690 = vmatpush1.bf16.xpose.msra.mxu0 0
  %3691 = vmatprep.subr.bf16.mxu0 0
  %3692 = vmatpush1.bf16.xpose.msra.mxu0 0
  %3693 = vmatprep.subr.bf16.mxu0 0
  %3694 = vmatpush1.bf16.xpose.msra.mxu0 0
  %3695 = vmatprep.subr.bf16.mxu0 0
  %3696 = vmatpush1.bf16.xpose.msra.mxu0 0
  %3697 = vmatprep.subr.bf16.mxu0 0
  %3698 = vmatpush1.bf16.xpose.msra.mxu0 0
  %3699 = vmatprep.subr.bf16.mxu0 0
  %3700 = vmatpush1.bf16.xpose.msra.mxu0 0
  %3701 = vmatprep.subr.bf16.mxu0 0
  %3702 = vmatpush1.bf16.xpose.msra.mxu0 0
  %3703 = vmatprep.subr.bf16.mxu0 0
  %3704 = vmatpush1.bf16.xpose.msra.mxu0 0
  %3705 = vmatprep.mubr.bf16.mxu0 %v3344
  %3706 = vmatmul.mubr.bf16.gmra.mrb[0].mxu0 %v3343
  %v3707 = vpop.f32.mrb[0].mxu0
  %v3708 = vadd.f32 %v3668, %v3707
  %v3709 = vpop.f32.mrb[0].mxu0
  %v3710 = vpop.f32.mrb[0].mxu0
  %v3711 = vpop.f32.mrb[0].mxu0
  %3712 = vdwg.mxu0
  %3713 = vmatprep.subr.bf16.mxu0 %v3430
  %3714 = vmatpush1.bf16.xpose.msra.mxu0 %v3429
  %3715 = vmatprep.subr.bf16.mxu0 0
  %3716 = vmatpush1.bf16.xpose.msra.mxu0 0
  %3717 = vmatprep.subr.bf16.mxu0 0
  %3718 = vmatpush1.bf16.xpose.msra.mxu0 0
  %3719 = vmatprep.subr.bf16.mxu0 0
  %3720 = vmatpush1.bf16.xpose.msra.mxu0 0
  %3721 = vmatprep.subr.bf16.mxu0 0
  %3722 = vmatpush1.bf16.xpose.msra.mxu0 0
  %3723 = vmatprep.subr.bf16.mxu0 0
  %3724 = vmatpush1.bf16.xpose.msra.mxu0 0
  %3725 = vmatprep.subr.bf16.mxu0 0
  %3726 = vmatpush1.bf16.xpose.msra.mxu0 0
  %3727 = vmatprep.subr.bf16.mxu0 0
  %3728 = vmatpush1.bf16.xpose.msra.mxu0 0
  %3729 = vmatprep.subr.bf16.mxu0 0
  %3730 = vmatpush1.bf16.xpose.msra.mxu0 0
  %3731 = vmatprep.subr.bf16.mxu0 0
  %3732 = vmatpush1.bf16.xpose.msra.mxu0 0
  %3733 = vmatprep.subr.bf16.mxu0 0
  %3734 = vmatpush1.bf16.xpose.msra.mxu0 0
  %3735 = vmatprep.subr.bf16.mxu0 0
  %3736 = vmatpush1.bf16.xpose.msra.mxu0 0
  %3737 = vmatprep.subr.bf16.mxu0 0
  %3738 = vmatpush1.bf16.xpose.msra.mxu0 0
  %3739 = vmatprep.subr.bf16.mxu0 0
  %3740 = vmatpush1.bf16.xpose.msra.mxu0 0
  %3741 = vmatprep.subr.bf16.mxu0 0
  %3742 = vmatpush1.bf16.xpose.msra.mxu0 0
  %3743 = vmatprep.subr.bf16.mxu0 0
  %3744 = vmatpush1.bf16.xpose.msra.mxu0 0
  %3745 = vmatprep.mubr.bf16.mxu0 %v3346
  %3746 = vmatmul.mubr.bf16.gmra.mrb[0].mxu0 %v3345
  %v3747 = vpop.f32.mrb[0].mxu0
  %v3748 = vadd.f32 %v3708, %v3747
  %v3749 = vpop.f32.mrb[0].mxu0
  %v3750 = vpop.f32.mrb[0].mxu0
  %v3751 = vpop.f32.mrb[0].mxu0
  %3752 = vdwg.mxu0
  %3753 = vmatprep.subr.bf16.mxu0 %v3432
  %3754 = vmatpush1.bf16.xpose.msra.mxu0 %v3431
  %3755 = vmatprep.subr.bf16.mxu0 0
  %3756 = vmatpush1.bf16.xpose.msra.mxu0 0
  %3757 = vmatprep.subr.bf16.mxu0 0
  %3758 = vmatpush1.bf16.xpose.msra.mxu0 0
  %3759 = vmatprep.subr.bf16.mxu0 0
  %3760 = vmatpush1.bf16.xpose.msra.mxu0 0
  %3761 = vmatprep.subr.bf16.mxu0 0
  %3762 = vmatpush1.bf16.xpose.msra.mxu0 0
  %3763 = vmatprep.subr.bf16.mxu0 0
  %3764 = vmatpush1.bf16.xpose.msra.mxu0 0
  %3765 = vmatprep.subr.bf16.mxu0 0
  %3766 = vmatpush1.bf16.xpose.msra.mxu0 0
  %3767 = vmatprep.subr.bf16.mxu0 0
  %3768 = vmatpush1.bf16.xpose.msra.mxu0 0
  %3769 = vmatprep.subr.bf16.mxu0 0
  %3770 = vmatpush1.bf16.xpose.msra.mxu0 0
  %3771 = vmatprep.subr.bf16.mxu0 0
  %3772 = vmatpush1.bf16.xpose.msra.mxu0 0
  %3773 = vmatprep.subr.bf16.mxu0 0
  %3774 = vmatpush1.bf16.xpose.msra.mxu0 0
  %3775 = vmatprep.subr.bf16.mxu0 0
  %3776 = vmatpush1.bf16.xpose.msra.mxu0 0
  %3777 = vmatprep.subr.bf16.mxu0 0
  %3778 = vmatpush1.bf16.xpose.msra.mxu0 0
  %3779 = vmatprep.subr.bf16.mxu0 0
  %3780 = vmatpush1.bf16.xpose.msra.mxu0 0
  %3781 = vmatprep.subr.bf16.mxu0 0
  %3782 = vmatpush1.bf16.xpose.msra.mxu0 0
  %3783 = vmatprep.subr.bf16.mxu0 0
  %3784 = vmatpush1.bf16.xpose.msra.mxu0 0
  %3785 = vmatprep.mubr.bf16.mxu0 %v3348
  %3786 = vmatmul.mubr.bf16.gmra.mrb[0].mxu0 %v3347
  %v3787 = vpop.f32.mrb[0].mxu0
  %v3788 = vadd.f32 %v3748, %v3787
  %v3789 = vpop.f32.mrb[0].mxu0
  %v3790 = vpop.f32.mrb[0].mxu0
  %v3791 = vpop.f32.mrb[0].mxu0
  %3792 = vdwg.mxu0
  %3793 = vmatprep.subr.bf16.mxu0 %v3434
  %3794 = vmatpush1.bf16.xpose.msra.mxu0 %v3433
  %3795 = vmatprep.subr.bf16.mxu0 0
  %3796 = vmatpush1.bf16.xpose.msra.mxu0 0
  %3797 = vmatprep.subr.bf16.mxu0 0
  %3798 = vmatpush1.bf16.xpose.msra.mxu0 0
  %3799 = vmatprep.subr.bf16.mxu0 0
  %3800 = vmatpush1.bf16.xpose.msra.mxu0 0
  %3801 = vmatprep.subr.bf16.mxu0 0
  %3802 = vmatpush1.bf16.xpose.msra.mxu0 0
  %3803 = vmatprep.subr.bf16.mxu0 0
  %3804 = vmatpush1.bf16.xpose.msra.mxu0 0
  %3805 = vmatprep.subr.bf16.mxu0 0
  %3806 = vmatpush1.bf16.xpose.msra.mxu0 0
  %3807 = vmatprep.subr.bf16.mxu0 0
  %3808 = vmatpush1.bf16.xpose.msra.mxu0 0
  %3809 = vmatprep.subr.bf16.mxu0 0
  %3810 = vmatpush1.bf16.xpose.msra.mxu0 0
  %3811 = vmatprep.subr.bf16.mxu0 0
  %3812 = vmatpush1.bf16.xpose.msra.mxu0 0
  %3813 = vmatprep.subr.bf16.mxu0 0
  %3814 = vmatpush1.bf16.xpose.msra.mxu0 0
  %3815 = vmatprep.subr.bf16.mxu0 0
  %3816 = vmatpush1.bf16.xpose.msra.mxu0 0
  %3817 = vmatprep.subr.bf16.mxu0 0
  %3818 = vmatpush1.bf16.xpose.msra.mxu0 0
  %3819 = vmatprep.subr.bf16.mxu0 0
  %3820 = vmatpush1.bf16.xpose.msra.mxu0 0
  %3821 = vmatprep.subr.bf16.mxu0 0
  %3822 = vmatpush1.bf16.xpose.msra.mxu0 0
  %3823 = vmatprep.subr.bf16.mxu0 0
  %3824 = vmatpush1.bf16.xpose.msra.mxu0 0
  %3825 = vmatprep.mubr.bf16.mxu0 %v3350
  %3826 = vmatmul.mubr.bf16.gmra.mrb[0].mxu0 %v3349
  %v3827 = vpop.f32.mrb[0].mxu0
  %v3828 = vadd.f32 %v3788, %v3827
  %v3829 = vpop.f32.mrb[0].mxu0
  %v3830 = vpop.f32.mrb[0].mxu0
  %v3831 = vpop.f32.mrb[0].mxu0
  %3832 = vdwg.mxu0
  %3833 = vmatprep.subr.bf16.mxu0 %v3436
  %3834 = vmatpush1.bf16.xpose.msra.mxu0 %v3435
  %3835 = vmatprep.subr.bf16.mxu0 0
  %3836 = vmatpush1.bf16.xpose.msra.mxu0 0
  %3837 = vmatprep.subr.bf16.mxu0 0
  %3838 = vmatpush1.bf16.xpose.msra.mxu0 0
  %3839 = vmatprep.subr.bf16.mxu0 0
  %3840 = vmatpush1.bf16.xpose.msra.mxu0 0
  %3841 = vmatprep.subr.bf16.mxu0 0
  %3842 = vmatpush1.bf16.xpose.msra.mxu0 0
  %3843 = vmatprep.subr.bf16.mxu0 0
  %3844 = vmatpush1.bf16.xpose.msra.mxu0 0
  %3845 = vmatprep.subr.bf16.mxu0 0
  %3846 = vmatpush1.bf16.xpose.msra.mxu0 0
  %3847 = vmatprep.subr.bf16.mxu0 0
  %3848 = vmatpush1.bf16.xpose.msra.mxu0 0
  %3849 = vmatprep.subr.bf16.mxu0 0
  %3850 = vmatpush1.bf16.xpose.msra.mxu0 0
  %3851 = vmatprep.subr.bf16.mxu0 0
  %3852 = vmatpush1.bf16.xpose.msra.mxu0 0
  %3853 = vmatprep.subr.bf16.mxu0 0
  %3854 = vmatpush1.bf16.xpose.msra.mxu0 0
  %3855 = vmatprep.subr.bf16.mxu0 0
  %3856 = vmatpush1.bf16.xpose.msra.mxu0 0
  %3857 = vmatprep.subr.bf16.mxu0 0
  %3858 = vmatpush1.bf16.xpose.msra.mxu0 0
  %3859 = vmatprep.subr.bf16.mxu0 0
  %3860 = vmatpush1.bf16.xpose.msra.mxu0 0
  %3861 = vmatprep.subr.bf16.mxu0 0
  %3862 = vmatpush1.bf16.xpose.msra.mxu0 0
  %3863 = vmatprep.subr.bf16.mxu0 0
  %3864 = vmatpush1.bf16.xpose.msra.mxu0 0
  %3865 = vmatprep.mubr.bf16.mxu0 %v3352
  %3866 = vmatmul.mubr.bf16.gmra.mrb[0].mxu0 %v3351
  %v3867 = vpop.f32.mrb[0].mxu0
  %v3868 = vadd.f32 %v3828, %v3867
  %v3869 = vpop.f32.mrb[0].mxu0
  %v3870 = vpop.f32.mrb[0].mxu0
  %v3871 = vpop.f32.mrb[0].mxu0
  %3872 = vdwg.mxu0
  %3873 = vmatprep.subr.bf16.mxu0 %v3438
  %3874 = vmatpush1.bf16.xpose.msra.mxu0 %v3437
  %3875 = vmatprep.subr.bf16.mxu0 0
  %3876 = vmatpush1.bf16.xpose.msra.mxu0 0
  %3877 = vmatprep.subr.bf16.mxu0 0
  %3878 = vmatpush1.bf16.xpose.msra.mxu0 0
  %3879 = vmatprep.subr.bf16.mxu0 0
  %3880 = vmatpush1.bf16.xpose.msra.mxu0 0
  %3881 = vmatprep.subr.bf16.mxu0 0
  %3882 = vmatpush1.bf16.xpose.msra.mxu0 0
  %3883 = vmatprep.subr.bf16.mxu0 0
  %3884 = vmatpush1.bf16.xpose.msra.mxu0 0
  %3885 = vmatprep.subr.bf16.mxu0 0
  %3886 = vmatpush1.bf16.xpose.msra.mxu0 0
  %3887 = vmatprep.subr.bf16.mxu0 0
  %3888 = vmatpush1.bf16.xpose.msra.mxu0 0
  %3889 = vmatprep.subr.bf16.mxu0 0
  %3890 = vmatpush1.bf16.xpose.msra.mxu0 0
  %3891 = vmatprep.subr.bf16.mxu0 0
  %3892 = vmatpush1.bf16.xpose.msra.mxu0 0
  %3893 = vmatprep.subr.bf16.mxu0 0
  %3894 = vmatpush1.bf16.xpose.msra.mxu0 0
  %3895 = vmatprep.subr.bf16.mxu0 0
  %3896 = vmatpush1.bf16.xpose.msra.mxu0 0
  %3897 = vmatprep.subr.bf16.mxu0 0
  %3898 = vmatpush1.bf16.xpose.msra.mxu0 0
  %3899 = vmatprep.subr.bf16.mxu0 0
  %3900 = vmatpush1.bf16.xpose.msra.mxu0 0
  %3901 = vmatprep.subr.bf16.mxu0 0
  %3902 = vmatpush1.bf16.xpose.msra.mxu0 0
  %3903 = vmatprep.subr.bf16.mxu0 0
  %3904 = vmatpush1.bf16.xpose.msra.mxu0 0
  %3905 = vmatprep.mubr.bf16.mxu0 %v3354
  %3906 = vmatmul.mubr.bf16.gmra.mrb[0].mxu0 %v3353
  %v3907 = vpop.f32.mrb[0].mxu0
  %v3908 = vadd.f32 %v3868, %v3907
  %v3909 = vpop.f32.mrb[0].mxu0
  %v3910 = vpop.f32.mrb[0].mxu0
  %v3911 = vpop.f32.mrb[0].mxu0
  %3912 = vdwg.mxu0
  %3913 = vmatprep.subr.bf16.mxu0 %v3440
  %3914 = vmatpush1.bf16.xpose.msra.mxu0 %v3439
  %3915 = vmatprep.subr.bf16.mxu0 0
  %3916 = vmatpush1.bf16.xpose.msra.mxu0 0
  %3917 = vmatprep.subr.bf16.mxu0 0
  %3918 = vmatpush1.bf16.xpose.msra.mxu0 0
  %3919 = vmatprep.subr.bf16.mxu0 0
  %3920 = vmatpush1.bf16.xpose.msra.mxu0 0
  %3921 = vmatprep.subr.bf16.mxu0 0
  %3922 = vmatpush1.bf16.xpose.msra.mxu0 0
  %3923 = vmatprep.subr.bf16.mxu0 0
  %3924 = vmatpush1.bf16.xpose.msra.mxu0 0
  %3925 = vmatprep.subr.bf16.mxu0 0
  %3926 = vmatpush1.bf16.xpose.msra.mxu0 0
  %3927 = vmatprep.subr.bf16.mxu0 0
  %3928 = vmatpush1.bf16.xpose.msra.mxu0 0
  %3929 = vmatprep.subr.bf16.mxu0 0
  %3930 = vmatpush1.bf16.xpose.msra.mxu0 0
  %3931 = vmatprep.subr.bf16.mxu0 0
  %3932 = vmatpush1.bf16.xpose.msra.mxu0 0
  %3933 = vmatprep.subr.bf16.mxu0 0
  %3934 = vmatpush1.bf16.xpose.msra.mxu0 0
  %3935 = vmatprep.subr.bf16.mxu0 0
  %3936 = vmatpush1.bf16.xpose.msra.mxu0 0
  %3937 = vmatprep.subr.bf16.mxu0 0
  %3938 = vmatpush1.bf16.xpose.msra.mxu0 0
  %3939 = vmatprep.subr.bf16.mxu0 0
  %3940 = vmatpush1.bf16.xpose.msra.mxu0 0
  %3941 = vmatprep.subr.bf16.mxu0 0
  %3942 = vmatpush1.bf16.xpose.msra.mxu0 0
  %3943 = vmatprep.subr.bf16.mxu0 0
  %3944 = vmatpush1.bf16.xpose.msra.mxu0 0
  %3945 = vmatprep.mubr.bf16.mxu0 %v3356
  %3946 = vmatmul.mubr.bf16.gmra.mrb[0].mxu0 %v3355
  %v3947 = vpop.f32.mrb[0].mxu0
  %v3948 = vadd.f32 %v3908, %v3947
  %v3949 = vpop.f32.mrb[0].mxu0
  %v3950 = vpop.f32.mrb[0].mxu0
  %v3951 = vpop.f32.mrb[0].mxu0
  %3952 = vdwg.mxu0
  %3953 = vmatprep.subr.bf16.mxu0 %v3442
  %3954 = vmatpush1.bf16.xpose.msra.mxu0 %v3441
  %3955 = vmatprep.subr.bf16.mxu0 0
  %3956 = vmatpush1.bf16.xpose.msra.mxu0 0
  %3957 = vmatprep.subr.bf16.mxu0 0
  %3958 = vmatpush1.bf16.xpose.msra.mxu0 0
  %3959 = vmatprep.subr.bf16.mxu0 0
  %3960 = vmatpush1.bf16.xpose.msra.mxu0 0
  %3961 = vmatprep.subr.bf16.mxu0 0
  %3962 = vmatpush1.bf16.xpose.msra.mxu0 0
  %3963 = vmatprep.subr.bf16.mxu0 0
  %3964 = vmatpush1.bf16.xpose.msra.mxu0 0
  %3965 = vmatprep.subr.bf16.mxu0 0
  %3966 = vmatpush1.bf16.xpose.msra.mxu0 0
  %3967 = vmatprep.subr.bf16.mxu0 0
  %3968 = vmatpush1.bf16.xpose.msra.mxu0 0
  %3969 = vmatprep.subr.bf16.mxu0 0
  %3970 = vmatpush1.bf16.xpose.msra.mxu0 0
  %3971 = vmatprep.subr.bf16.mxu0 0
  %3972 = vmatpush1.bf16.xpose.msra.mxu0 0
  %3973 = vmatprep.subr.bf16.mxu0 0
  %3974 = vmatpush1.bf16.xpose.msra.mxu0 0
  %3975 = vmatprep.subr.bf16.mxu0 0
  %3976 = vmatpush1.bf16.xpose.msra.mxu0 0
  %3977 = vmatprep.subr.bf16.mxu0 0
  %3978 = vmatpush1.bf16.xpose.msra.mxu0 0
  %3979 = vmatprep.subr.bf16.mxu0 0
  %3980 = vmatpush1.bf16.xpose.msra.mxu0 0
  %3981 = vmatprep.subr.bf16.mxu0 0
  %3982 = vmatpush1.bf16.xpose.msra.mxu0 0
  %3983 = vmatprep.subr.bf16.mxu0 0
  %3984 = vmatpush1.bf16.xpose.msra.mxu0 0
  %3985 = vmatprep.mubr.bf16.mxu0 %v3358
  %3986 = vmatmul.mubr.bf16.gmra.mrb[0].mxu0 %v3357
  %v3987 = vpop.f32.mrb[0].mxu0
  %v3988 = vadd.f32 %v3948, %v3987
  %v3989 = vpop.f32.mrb[0].mxu0
  %v3990 = vpop.f32.mrb[0].mxu0
  %v3991 = vpop.f32.mrb[0].mxu0
  %3992 = vdwg.mxu0
  %3993 = vmatprep.subr.bf16.mxu0 %v3444
  %3994 = vmatpush1.bf16.xpose.msra.mxu0 %v3443
  %3995 = vmatprep.subr.bf16.mxu0 0
  %3996 = vmatpush1.bf16.xpose.msra.mxu0 0
  %3997 = vmatprep.subr.bf16.mxu0 0
  %3998 = vmatpush1.bf16.xpose.msra.mxu0 0
  %3999 = vmatprep.subr.bf16.mxu0 0
  %4000 = vmatpush1.bf16.xpose.msra.mxu0 0
  %4001 = vmatprep.subr.bf16.mxu0 0
  %4002 = vmatpush1.bf16.xpose.msra.mxu0 0
  %4003 = vmatprep.subr.bf16.mxu0 0
  %4004 = vmatpush1.bf16.xpose.msra.mxu0 0
  %4005 = vmatprep.subr.bf16.mxu0 0
  %4006 = vmatpush1.bf16.xpose.msra.mxu0 0
  %4007 = vmatprep.subr.bf16.mxu0 0
  %4008 = vmatpush1.bf16.xpose.msra.mxu0 0
  %4009 = vmatprep.subr.bf16.mxu0 0
  %4010 = vmatpush1.bf16.xpose.msra.mxu0 0
  %4011 = vmatprep.subr.bf16.mxu0 0
  %4012 = vmatpush1.bf16.xpose.msra.mxu0 0
  %4013 = vmatprep.subr.bf16.mxu0 0
  %4014 = vmatpush1.bf16.xpose.msra.mxu0 0
  %4015 = vmatprep.subr.bf16.mxu0 0
  %4016 = vmatpush1.bf16.xpose.msra.mxu0 0
  %4017 = vmatprep.subr.bf16.mxu0 0
  %4018 = vmatpush1.bf16.xpose.msra.mxu0 0
  %4019 = vmatprep.subr.bf16.mxu0 0
  %4020 = vmatpush1.bf16.xpose.msra.mxu0 0
  %4021 = vmatprep.subr.bf16.mxu0 0
  %4022 = vmatpush1.bf16.xpose.msra.mxu0 0
  %4023 = vmatprep.subr.bf16.mxu0 0
  %4024 = vmatpush1.bf16.xpose.msra.mxu0 0
  %4025 = vmatprep.mubr.bf16.mxu0 %v3360
  %4026 = vmatmul.mubr.bf16.gmra.mrb[0].mxu0 %v3359
  %v4027 = vpop.f32.mrb[0].mxu0
  %v4028 = vadd.f32 %v3988, %v4027
  %v4029 = vpop.f32.mrb[0].mxu0
  %v4030 = vpop.f32.mrb[0].mxu0
  %v4031 = vpop.f32.mrb[0].mxu0
  %4032 = vdwg.mxu0
  %v4047 = vunpack.c.l.b16 %v3291
  %v4048 = vunpack.c.h.b16 %v3291
  %v4049 = vunpack.c.l.b16 %v3292
  %v4050 = vunpack.c.h.b16 %v3292
  %v4051 = vunpack.c.l.b16 %v3293
  %v4052 = vunpack.c.h.b16 %v3293
  %v4053 = vunpack.c.l.b16 %v3294
  %v4054 = vunpack.c.h.b16 %v3294
  %v4055 = vunpack.c.l.b16 %v3295
  %v4056 = vunpack.c.h.b16 %v3295
  %v4057 = vunpack.c.l.b16 %v3296
  %v4058 = vunpack.c.h.b16 %v3296
  %v4059 = vunpack.c.l.b16 %v3297
  %v4060 = vunpack.c.h.b16 %v3297
  %v4061 = vunpack.c.l.b16 %v3298
  %v4062 = vunpack.c.h.b16 %v3298
  %v4063 = vunpack.c.l.b16 %v3299
  %v4064 = vunpack.c.h.b16 %v3299
  %v4065 = vunpack.c.l.b16 %v3300
  %v4066 = vunpack.c.h.b16 %v3300
  %v4067 = vunpack.c.l.b16 %v3301
  %v4068 = vunpack.c.h.b16 %v3301
  %v4069 = vunpack.c.l.b16 %v3302
  %v4070 = vunpack.c.h.b16 %v3302
  %v4071 = vunpack.c.l.b16 %v3303
  %v4072 = vunpack.c.h.b16 %v3303
  %v4073 = vunpack.c.l.b16 %v3304
  %v4074 = vunpack.c.h.b16 %v3304
  %v4075 = vpack.c.b16 %v4047, %v4047
  %v4076 = vpack.c.b16 %v4048, %v4048
  %v4077 = vpack.c.b16 %v4049, %v4049
  %v4078 = vpack.c.b16 %v4050, %v4050
  %v4079 = vpack.c.b16 %v4051, %v4051
  %v4080 = vpack.c.b16 %v4052, %v4052
  %v4081 = vpack.c.b16 %v4053, %v4053
  %v4082 = vpack.c.b16 %v4054, %v4054
  %v4083 = vpack.c.b16 %v4055, %v4055
  %v4084 = vpack.c.b16 %v4056, %v4056
  %v4085 = vpack.c.b16 %v4057, %v4057
  %v4086 = vpack.c.b16 %v4058, %v4058
  %v4087 = vpack.c.b16 %v4059, %v4059
  %v4088 = vpack.c.b16 %v4060, %v4060
  %v4089 = vpack.c.b16 %v4061, %v4061
  %v4090 = vpack.c.b16 %v4062, %v4062
  %v4091 = vpack.c.b16 %v4063, %v4063
  %v4092 = vpack.c.b16 %v4064, %v4064
  %v4093 = vpack.c.b16 %v4065, %v4065
  %v4094 = vpack.c.b16 %v4066, %v4066
  %v4095 = vpack.c.b16 %v4067, %v4067
  %v4096 = vpack.c.b16 %v4068, %v4068
  %v4097 = vpack.c.b16 %v4069, %v4069
  %v4098 = vpack.c.b16 %v4070, %v4070
  %v4099 = vpack.c.b16 %v4071, %v4071
  %v4100 = vpack.c.b16 %v4072, %v4072
  %v4101 = vpack.c.b16 %v4073, %v4073
  %v4102 = vpack.c.b16 %v4074, %v4074
  %4131 = vmatprep.subr.bf16.mxu0 %v4076
  %4132 = vmatpush1.bf16.xpose.msra.mxu0 %v4075
  %4133 = vmatprep.subr.bf16.mxu0 0
  %4134 = vmatpush1.bf16.xpose.msra.mxu0 0
  %4135 = vmatprep.subr.bf16.mxu0 0
  %4136 = vmatpush1.bf16.xpose.msra.mxu0 0
  %4137 = vmatprep.subr.bf16.mxu0 0
  %4138 = vmatpush1.bf16.xpose.msra.mxu0 0
  %4139 = vmatprep.subr.bf16.mxu0 0
  %4140 = vmatpush1.bf16.xpose.msra.mxu0 0
  %4141 = vmatprep.subr.bf16.mxu0 0
  %4142 = vmatpush1.bf16.xpose.msra.mxu0 0
  %4143 = vmatprep.subr.bf16.mxu0 0
  %4144 = vmatpush1.bf16.xpose.msra.mxu0 0
  %4145 = vmatprep.subr.bf16.mxu0 0
  %4146 = vmatpush1.bf16.xpose.msra.mxu0 0
  %4147 = vmatprep.subr.bf16.mxu0 0
  %4148 = vmatpush1.bf16.xpose.msra.mxu0 0
  %4149 = vmatprep.subr.bf16.mxu0 0
  %4150 = vmatpush1.bf16.xpose.msra.mxu0 0
  %4151 = vmatprep.subr.bf16.mxu0 0
  %4152 = vmatpush1.bf16.xpose.msra.mxu0 0
  %4153 = vmatprep.subr.bf16.mxu0 0
  %4154 = vmatpush1.bf16.xpose.msra.mxu0 0
  %4155 = vmatprep.subr.bf16.mxu0 0
  %4156 = vmatpush1.bf16.xpose.msra.mxu0 0
  %4157 = vmatprep.subr.bf16.mxu0 0
  %4158 = vmatpush1.bf16.xpose.msra.mxu0 0
  %4159 = vmatprep.subr.bf16.mxu0 0
  %4160 = vmatpush1.bf16.xpose.msra.mxu0 0
  %4161 = vmatprep.subr.bf16.mxu0 0
  %4162 = vmatpush1.bf16.xpose.msra.mxu0 0
  %4163 = vmatprep.mubr.bf16.mxu0 %v3264
  %4164 = vmatmul.mubr.bf16.gmra.mrb[0].mxu0 %v3263
  %v4165 = vpop.f32.mrb[0].mxu0
  %v4166 = vadd.f32 %v4028, %v4165
  %v4167 = vpop.f32.mrb[0].mxu0
  %v4168 = vpop.f32.mrb[0].mxu0
  %v4169 = vpop.f32.mrb[0].mxu0
  %4170 = vdwg.mxu0
  %4171 = vmatprep.subr.bf16.mxu0 %v4078
  %4172 = vmatpush1.bf16.xpose.msra.mxu0 %v4077
  %4173 = vmatprep.subr.bf16.mxu0 0
  %4174 = vmatpush1.bf16.xpose.msra.mxu0 0
  %4175 = vmatprep.subr.bf16.mxu0 0
  %4176 = vmatpush1.bf16.xpose.msra.mxu0 0
  %4177 = vmatprep.subr.bf16.mxu0 0
  %4178 = vmatpush1.bf16.xpose.msra.mxu0 0
  %4179 = vmatprep.subr.bf16.mxu0 0
  %4180 = vmatpush1.bf16.xpose.msra.mxu0 0
  %4181 = vmatprep.subr.bf16.mxu0 0
  %4182 = vmatpush1.bf16.xpose.msra.mxu0 0
  %4183 = vmatprep.subr.bf16.mxu0 0
  %4184 = vmatpush1.bf16.xpose.msra.mxu0 0
  %4185 = vmatprep.subr.bf16.mxu0 0
  %4186 = vmatpush1.bf16.xpose.msra.mxu0 0
  %4187 = vmatprep.subr.bf16.mxu0 0
  %4188 = vmatpush1.bf16.xpose.msra.mxu0 0
  %4189 = vmatprep.subr.bf16.mxu0 0
  %4190 = vmatpush1.bf16.xpose.msra.mxu0 0
  %4191 = vmatprep.subr.bf16.mxu0 0
  %4192 = vmatpush1.bf16.xpose.msra.mxu0 0
  %4193 = vmatprep.subr.bf16.mxu0 0
  %4194 = vmatpush1.bf16.xpose.msra.mxu0 0
  %4195 = vmatprep.subr.bf16.mxu0 0
  %4196 = vmatpush1.bf16.xpose.msra.mxu0 0
  %4197 = vmatprep.subr.bf16.mxu0 0
  %4198 = vmatpush1.bf16.xpose.msra.mxu0 0
  %4199 = vmatprep.subr.bf16.mxu0 0
  %4200 = vmatpush1.bf16.xpose.msra.mxu0 0
  %4201 = vmatprep.subr.bf16.mxu0 0
  %4202 = vmatpush1.bf16.xpose.msra.mxu0 0
  %4203 = vmatprep.mubr.bf16.mxu0 %v3266
  %4204 = vmatmul.mubr.bf16.gmra.mrb[0].mxu0 %v3265
  %v4205 = vpop.f32.mrb[0].mxu0
  %v4206 = vadd.f32 %v4166, %v4205
  %v4207 = vpop.f32.mrb[0].mxu0
  %v4208 = vpop.f32.mrb[0].mxu0
  %v4209 = vpop.f32.mrb[0].mxu0
  %4210 = vdwg.mxu0
  %4211 = vmatprep.subr.bf16.mxu0 %v4080
  %4212 = vmatpush1.bf16.xpose.msra.mxu0 %v4079
  %4213 = vmatprep.subr.bf16.mxu0 0
  %4214 = vmatpush1.bf16.xpose.msra.mxu0 0
  %4215 = vmatprep.subr.bf16.mxu0 0
  %4216 = vmatpush1.bf16.xpose.msra.mxu0 0
  %4217 = vmatprep.subr.bf16.mxu0 0
  %4218 = vmatpush1.bf16.xpose.msra.mxu0 0
  %4219 = vmatprep.subr.bf16.mxu0 0
  %4220 = vmatpush1.bf16.xpose.msra.mxu0 0
  %4221 = vmatprep.subr.bf16.mxu0 0
  %4222 = vmatpush1.bf16.xpose.msra.mxu0 0
  %4223 = vmatprep.subr.bf16.mxu0 0
  %4224 = vmatpush1.bf16.xpose.msra.mxu0 0
  %4225 = vmatprep.subr.bf16.mxu0 0
  %4226 = vmatpush1.bf16.xpose.msra.mxu0 0
  %4227 = vmatprep.subr.bf16.mxu0 0
  %4228 = vmatpush1.bf16.xpose.msra.mxu0 0
  %4229 = vmatprep.subr.bf16.mxu0 0
  %4230 = vmatpush1.bf16.xpose.msra.mxu0 0
  %4231 = vmatprep.subr.bf16.mxu0 0
  %4232 = vmatpush1.bf16.xpose.msra.mxu0 0
  %4233 = vmatprep.subr.bf16.mxu0 0
  %4234 = vmatpush1.bf16.xpose.msra.mxu0 0
  %4235 = vmatprep.subr.bf16.mxu0 0
  %4236 = vmatpush1.bf16.xpose.msra.mxu0 0
  %4237 = vmatprep.subr.bf16.mxu0 0
  %4238 = vmatpush1.bf16.xpose.msra.mxu0 0
  %4239 = vmatprep.subr.bf16.mxu0 0
  %4240 = vmatpush1.bf16.xpose.msra.mxu0 0
  %4241 = vmatprep.subr.bf16.mxu0 0
  %4242 = vmatpush1.bf16.xpose.msra.mxu0 0
  %4243 = vmatprep.mubr.bf16.mxu0 %v3268
  %4244 = vmatmul.mubr.bf16.gmra.mrb[0].mxu0 %v3267
  %v4245 = vpop.f32.mrb[0].mxu0
  %v4246 = vadd.f32 %v4206, %v4245
  %v4247 = vpop.f32.mrb[0].mxu0
  %v4248 = vpop.f32.mrb[0].mxu0
  %v4249 = vpop.f32.mrb[0].mxu0
  %4250 = vdwg.mxu0
  %4251 = vmatprep.subr.bf16.mxu0 %v4082
  %4252 = vmatpush1.bf16.xpose.msra.mxu0 %v4081
  %4253 = vmatprep.subr.bf16.mxu0 0
  %4254 = vmatpush1.bf16.xpose.msra.mxu0 0
  %4255 = vmatprep.subr.bf16.mxu0 0
  %4256 = vmatpush1.bf16.xpose.msra.mxu0 0
  %4257 = vmatprep.subr.bf16.mxu0 0
  %4258 = vmatpush1.bf16.xpose.msra.mxu0 0
  %4259 = vmatprep.subr.bf16.mxu0 0
  %4260 = vmatpush1.bf16.xpose.msra.mxu0 0
  %4261 = vmatprep.subr.bf16.mxu0 0
  %4262 = vmatpush1.bf16.xpose.msra.mxu0 0
  %4263 = vmatprep.subr.bf16.mxu0 0
  %4264 = vmatpush1.bf16.xpose.msra.mxu0 0
  %4265 = vmatprep.subr.bf16.mxu0 0
  %4266 = vmatpush1.bf16.xpose.msra.mxu0 0
  %4267 = vmatprep.subr.bf16.mxu0 0
  %4268 = vmatpush1.bf16.xpose.msra.mxu0 0
  %4269 = vmatprep.subr.bf16.mxu0 0
  %4270 = vmatpush1.bf16.xpose.msra.mxu0 0
  %4271 = vmatprep.subr.bf16.mxu0 0
  %4272 = vmatpush1.bf16.xpose.msra.mxu0 0
  %4273 = vmatprep.subr.bf16.mxu0 0
  %4274 = vmatpush1.bf16.xpose.msra.mxu0 0
  %4275 = vmatprep.subr.bf16.mxu0 0
  %4276 = vmatpush1.bf16.xpose.msra.mxu0 0
  %4277 = vmatprep.subr.bf16.mxu0 0
  %4278 = vmatpush1.bf16.xpose.msra.mxu0 0
  %4279 = vmatprep.subr.bf16.mxu0 0
  %4280 = vmatpush1.bf16.xpose.msra.mxu0 0
  %4281 = vmatprep.subr.bf16.mxu0 0
  %4282 = vmatpush1.bf16.xpose.msra.mxu0 0
  %4283 = vmatprep.mubr.bf16.mxu0 %v3270
  %4284 = vmatmul.mubr.bf16.gmra.mrb[0].mxu0 %v3269
  %v4285 = vpop.f32.mrb[0].mxu0
  %v4286 = vadd.f32 %v4246, %v4285
  %v4287 = vpop.f32.mrb[0].mxu0
  %v4288 = vpop.f32.mrb[0].mxu0
  %v4289 = vpop.f32.mrb[0].mxu0
  %4290 = vdwg.mxu0
  %4291 = vmatprep.subr.bf16.mxu0 %v4084
  %4292 = vmatpush1.bf16.xpose.msra.mxu0 %v4083
  %4293 = vmatprep.subr.bf16.mxu0 0
  %4294 = vmatpush1.bf16.xpose.msra.mxu0 0
  %4295 = vmatprep.subr.bf16.mxu0 0
  %4296 = vmatpush1.bf16.xpose.msra.mxu0 0
  %4297 = vmatprep.subr.bf16.mxu0 0
  %4298 = vmatpush1.bf16.xpose.msra.mxu0 0
  %4299 = vmatprep.subr.bf16.mxu0 0
  %4300 = vmatpush1.bf16.xpose.msra.mxu0 0
  %4301 = vmatprep.subr.bf16.mxu0 0
  %4302 = vmatpush1.bf16.xpose.msra.mxu0 0
  %4303 = vmatprep.subr.bf16.mxu0 0
  %4304 = vmatpush1.bf16.xpose.msra.mxu0 0
  %4305 = vmatprep.subr.bf16.mxu0 0
  %4306 = vmatpush1.bf16.xpose.msra.mxu0 0
  %4307 = vmatprep.subr.bf16.mxu0 0
  %4308 = vmatpush1.bf16.xpose.msra.mxu0 0
  %4309 = vmatprep.subr.bf16.mxu0 0
  %4310 = vmatpush1.bf16.xpose.msra.mxu0 0
  %4311 = vmatprep.subr.bf16.mxu0 0
  %4312 = vmatpush1.bf16.xpose.msra.mxu0 0
  %4313 = vmatprep.subr.bf16.mxu0 0
  %4314 = vmatpush1.bf16.xpose.msra.mxu0 0
  %4315 = vmatprep.subr.bf16.mxu0 0
  %4316 = vmatpush1.bf16.xpose.msra.mxu0 0
  %4317 = vmatprep.subr.bf16.mxu0 0
  %4318 = vmatpush1.bf16.xpose.msra.mxu0 0
  %4319 = vmatprep.subr.bf16.mxu0 0
  %4320 = vmatpush1.bf16.xpose.msra.mxu0 0
  %4321 = vmatprep.subr.bf16.mxu0 0
  %4322 = vmatpush1.bf16.xpose.msra.mxu0 0
  %4323 = vmatprep.mubr.bf16.mxu0 %v3272
  %4324 = vmatmul.mubr.bf16.gmra.mrb[0].mxu0 %v3271
  %v4325 = vpop.f32.mrb[0].mxu0
  %v4326 = vadd.f32 %v4286, %v4325
  %v4327 = vpop.f32.mrb[0].mxu0
  %v4328 = vpop.f32.mrb[0].mxu0
  %v4329 = vpop.f32.mrb[0].mxu0
  %4330 = vdwg.mxu0
  %4331 = vmatprep.subr.bf16.mxu0 %v4086
  %4332 = vmatpush1.bf16.xpose.msra.mxu0 %v4085
  %4333 = vmatprep.subr.bf16.mxu0 0
  %4334 = vmatpush1.bf16.xpose.msra.mxu0 0
  %4335 = vmatprep.subr.bf16.mxu0 0
  %4336 = vmatpush1.bf16.xpose.msra.mxu0 0
  %4337 = vmatprep.subr.bf16.mxu0 0
  %4338 = vmatpush1.bf16.xpose.msra.mxu0 0
  %4339 = vmatprep.subr.bf16.mxu0 0
  %4340 = vmatpush1.bf16.xpose.msra.mxu0 0
  %4341 = vmatprep.subr.bf16.mxu0 0
  %4342 = vmatpush1.bf16.xpose.msra.mxu0 0
  %4343 = vmatprep.subr.bf16.mxu0 0
  %4344 = vmatpush1.bf16.xpose.msra.mxu0 0
  %4345 = vmatprep.subr.bf16.mxu0 0
  %4346 = vmatpush1.bf16.xpose.msra.mxu0 0
  %4347 = vmatprep.subr.bf16.mxu0 0
  %4348 = vmatpush1.bf16.xpose.msra.mxu0 0
  %4349 = vmatprep.subr.bf16.mxu0 0
  %4350 = vmatpush1.bf16.xpose.msra.mxu0 0
  %4351 = vmatprep.subr.bf16.mxu0 0
  %4352 = vmatpush1.bf16.xpose.msra.mxu0 0
  %4353 = vmatprep.subr.bf16.mxu0 0
  %4354 = vmatpush1.bf16.xpose.msra.mxu0 0
  %4355 = vmatprep.subr.bf16.mxu0 0
  %4356 = vmatpush1.bf16.xpose.msra.mxu0 0
  %4357 = vmatprep.subr.bf16.mxu0 0
  %4358 = vmatpush1.bf16.xpose.msra.mxu0 0
  %4359 = vmatprep.subr.bf16.mxu0 0
  %4360 = vmatpush1.bf16.xpose.msra.mxu0 0
  %4361 = vmatprep.subr.bf16.mxu0 0
  %4362 = vmatpush1.bf16.xpose.msra.mxu0 0
  %4363 = vmatprep.mubr.bf16.mxu0 %v3274
  %4364 = vmatmul.mubr.bf16.gmra.mrb[0].mxu0 %v3273
  %v4365 = vpop.f32.mrb[0].mxu0
  %v4366 = vadd.f32 %v4326, %v4365
  %v4367 = vpop.f32.mrb[0].mxu0
  %v4368 = vpop.f32.mrb[0].mxu0
  %v4369 = vpop.f32.mrb[0].mxu0
  %4370 = vdwg.mxu0
  %4371 = vmatprep.subr.bf16.mxu0 %v4088
  %4372 = vmatpush1.bf16.xpose.msra.mxu0 %v4087
  %4373 = vmatprep.subr.bf16.mxu0 0
  %4374 = vmatpush1.bf16.xpose.msra.mxu0 0
  %4375 = vmatprep.subr.bf16.mxu0 0
  %4376 = vmatpush1.bf16.xpose.msra.mxu0 0
  %4377 = vmatprep.subr.bf16.mxu0 0
  %4378 = vmatpush1.bf16.xpose.msra.mxu0 0
  %4379 = vmatprep.subr.bf16.mxu0 0
  %4380 = vmatpush1.bf16.xpose.msra.mxu0 0
  %4381 = vmatprep.subr.bf16.mxu0 0
  %4382 = vmatpush1.bf16.xpose.msra.mxu0 0
  %4383 = vmatprep.subr.bf16.mxu0 0
  %4384 = vmatpush1.bf16.xpose.msra.mxu0 0
  %4385 = vmatprep.subr.bf16.mxu0 0
  %4386 = vmatpush1.bf16.xpose.msra.mxu0 0
  %4387 = vmatprep.subr.bf16.mxu0 0
  %4388 = vmatpush1.bf16.xpose.msra.mxu0 0
  %4389 = vmatprep.subr.bf16.mxu0 0
  %4390 = vmatpush1.bf16.xpose.msra.mxu0 0
  %4391 = vmatprep.subr.bf16.mxu0 0
  %4392 = vmatpush1.bf16.xpose.msra.mxu0 0
  %4393 = vmatprep.subr.bf16.mxu0 0
  %4394 = vmatpush1.bf16.xpose.msra.mxu0 0
  %4395 = vmatprep.subr.bf16.mxu0 0
  %4396 = vmatpush1.bf16.xpose.msra.mxu0 0
  %4397 = vmatprep.subr.bf16.mxu0 0
  %4398 = vmatpush1.bf16.xpose.msra.mxu0 0
  %4399 = vmatprep.subr.bf16.mxu0 0
  %4400 = vmatpush1.bf16.xpose.msra.mxu0 0
  %4401 = vmatprep.subr.bf16.mxu0 0
  %4402 = vmatpush1.bf16.xpose.msra.mxu0 0
  %4403 = vmatprep.mubr.bf16.mxu0 %v3276
  %4404 = vmatmul.mubr.bf16.gmra.mrb[0].mxu0 %v3275
  %v4405 = vpop.f32.mrb[0].mxu0
  %v4406 = vadd.f32 %v4366, %v4405
  %v4407 = vpop.f32.mrb[0].mxu0
  %v4408 = vpop.f32.mrb[0].mxu0
  %v4409 = vpop.f32.mrb[0].mxu0
  %4410 = vdwg.mxu0
  %4411 = vmatprep.subr.bf16.mxu0 %v4090
  %4412 = vmatpush1.bf16.xpose.msra.mxu0 %v4089
  %4413 = vmatprep.subr.bf16.mxu0 0
  %4414 = vmatpush1.bf16.xpose.msra.mxu0 0
  %4415 = vmatprep.subr.bf16.mxu0 0
  %4416 = vmatpush1.bf16.xpose.msra.mxu0 0
  %4417 = vmatprep.subr.bf16.mxu0 0
  %4418 = vmatpush1.bf16.xpose.msra.mxu0 0
  %4419 = vmatprep.subr.bf16.mxu0 0
  %4420 = vmatpush1.bf16.xpose.msra.mxu0 0
  %4421 = vmatprep.subr.bf16.mxu0 0
  %4422 = vmatpush1.bf16.xpose.msra.mxu0 0
  %4423 = vmatprep.subr.bf16.mxu0 0
  %4424 = vmatpush1.bf16.xpose.msra.mxu0 0
  %4425 = vmatprep.subr.bf16.mxu0 0
  %4426 = vmatpush1.bf16.xpose.msra.mxu0 0
  %4427 = vmatprep.subr.bf16.mxu0 0
  %4428 = vmatpush1.bf16.xpose.msra.mxu0 0
  %4429 = vmatprep.subr.bf16.mxu0 0
  %4430 = vmatpush1.bf16.xpose.msra.mxu0 0
  %4431 = vmatprep.subr.bf16.mxu0 0
  %4432 = vmatpush1.bf16.xpose.msra.mxu0 0
  %4433 = vmatprep.subr.bf16.mxu0 0
  %4434 = vmatpush1.bf16.xpose.msra.mxu0 0
  %4435 = vmatprep.subr.bf16.mxu0 0
  %4436 = vmatpush1.bf16.xpose.msra.mxu0 0
  %4437 = vmatprep.subr.bf16.mxu0 0
  %4438 = vmatpush1.bf16.xpose.msra.mxu0 0
  %4439 = vmatprep.subr.bf16.mxu0 0
  %4440 = vmatpush1.bf16.xpose.msra.mxu0 0
  %4441 = vmatprep.subr.bf16.mxu0 0
  %4442 = vmatpush1.bf16.xpose.msra.mxu0 0
  %4443 = vmatprep.mubr.bf16.mxu0 %v3278
  %4444 = vmatmul.mubr.bf16.gmra.mrb[0].mxu0 %v3277
  %v4445 = vpop.f32.mrb[0].mxu0
  %v4446 = vadd.f32 %v4406, %v4445
  %v4447 = vpop.f32.mrb[0].mxu0
  %v4448 = vpop.f32.mrb[0].mxu0
  %v4449 = vpop.f32.mrb[0].mxu0
  %4450 = vdwg.mxu0
  %4451 = vmatprep.subr.bf16.mxu0 %v4092
  %4452 = vmatpush1.bf16.xpose.msra.mxu0 %v4091
  %4453 = vmatprep.subr.bf16.mxu0 0
  %4454 = vmatpush1.bf16.xpose.msra.mxu0 0
  %4455 = vmatprep.subr.bf16.mxu0 0
  %4456 = vmatpush1.bf16.xpose.msra.mxu0 0
  %4457 = vmatprep.subr.bf16.mxu0 0
  %4458 = vmatpush1.bf16.xpose.msra.mxu0 0
  %4459 = vmatprep.subr.bf16.mxu0 0
  %4460 = vmatpush1.bf16.xpose.msra.mxu0 0
  %4461 = vmatprep.subr.bf16.mxu0 0
  %4462 = vmatpush1.bf16.xpose.msra.mxu0 0
  %4463 = vmatprep.subr.bf16.mxu0 0
  %4464 = vmatpush1.bf16.xpose.msra.mxu0 0
  %4465 = vmatprep.subr.bf16.mxu0 0
  %4466 = vmatpush1.bf16.xpose.msra.mxu0 0
  %4467 = vmatprep.subr.bf16.mxu0 0
  %4468 = vmatpush1.bf16.xpose.msra.mxu0 0
  %4469 = vmatprep.subr.bf16.mxu0 0
  %4470 = vmatpush1.bf16.xpose.msra.mxu0 0
  %4471 = vmatprep.subr.bf16.mxu0 0
  %4472 = vmatpush1.bf16.xpose.msra.mxu0 0
  %4473 = vmatprep.subr.bf16.mxu0 0
  %4474 = vmatpush1.bf16.xpose.msra.mxu0 0
  %4475 = vmatprep.subr.bf16.mxu0 0
  %4476 = vmatpush1.bf16.xpose.msra.mxu0 0
  %4477 = vmatprep.subr.bf16.mxu0 0
  %4478 = vmatpush1.bf16.xpose.msra.mxu0 0
  %4479 = vmatprep.subr.bf16.mxu0 0
  %4480 = vmatpush1.bf16.xpose.msra.mxu0 0
  %4481 = vmatprep.subr.bf16.mxu0 0
  %4482 = vmatpush1.bf16.xpose.msra.mxu0 0
  %4483 = vmatprep.mubr.bf16.mxu0 %v3280
  %4484 = vmatmul.mubr.bf16.gmra.mrb[0].mxu0 %v3279
  %v4485 = vpop.f32.mrb[0].mxu0
  %v4486 = vadd.f32 %v4446, %v4485
  %v4487 = vpop.f32.mrb[0].mxu0
  %v4488 = vpop.f32.mrb[0].mxu0
  %v4489 = vpop.f32.mrb[0].mxu0
  %4490 = vdwg.mxu0
  %4491 = vmatprep.subr.bf16.mxu0 %v4094
  %4492 = vmatpush1.bf16.xpose.msra.mxu0 %v4093
  %4493 = vmatprep.subr.bf16.mxu0 0
  %4494 = vmatpush1.bf16.xpose.msra.mxu0 0
  %4495 = vmatprep.subr.bf16.mxu0 0
  %4496 = vmatpush1.bf16.xpose.msra.mxu0 0
  %4497 = vmatprep.subr.bf16.mxu0 0
  %4498 = vmatpush1.bf16.xpose.msra.mxu0 0
  %4499 = vmatprep.subr.bf16.mxu0 0
  %4500 = vmatpush1.bf16.xpose.msra.mxu0 0
  %4501 = vmatprep.subr.bf16.mxu0 0
  %4502 = vmatpush1.bf16.xpose.msra.mxu0 0
  %4503 = vmatprep.subr.bf16.mxu0 0
  %4504 = vmatpush1.bf16.xpose.msra.mxu0 0
  %4505 = vmatprep.subr.bf16.mxu0 0
  %4506 = vmatpush1.bf16.xpose.msra.mxu0 0
  %4507 = vmatprep.subr.bf16.mxu0 0
  %4508 = vmatpush1.bf16.xpose.msra.mxu0 0
  %4509 = vmatprep.subr.bf16.mxu0 0
  %4510 = vmatpush1.bf16.xpose.msra.mxu0 0
  %4511 = vmatprep.subr.bf16.mxu0 0
  %4512 = vmatpush1.bf16.xpose.msra.mxu0 0
  %4513 = vmatprep.subr.bf16.mxu0 0
  %4514 = vmatpush1.bf16.xpose.msra.mxu0 0
  %4515 = vmatprep.subr.bf16.mxu0 0
  %4516 = vmatpush1.bf16.xpose.msra.mxu0 0
  %4517 = vmatprep.subr.bf16.mxu0 0
  %4518 = vmatpush1.bf16.xpose.msra.mxu0 0
  %4519 = vmatprep.subr.bf16.mxu0 0
  %4520 = vmatpush1.bf16.xpose.msra.mxu0 0
  %4521 = vmatprep.subr.bf16.mxu0 0
  %4522 = vmatpush1.bf16.xpose.msra.mxu0 0
  %4523 = vmatprep.mubr.bf16.mxu0 %v3282
  %4524 = vmatmul.mubr.bf16.gmra.mrb[0].mxu0 %v3281
  %v4525 = vpop.f32.mrb[0].mxu0
  %v4526 = vadd.f32 %v4486, %v4525
  %v4527 = vpop.f32.mrb[0].mxu0
  %v4528 = vpop.f32.mrb[0].mxu0
  %v4529 = vpop.f32.mrb[0].mxu0
  %4530 = vdwg.mxu0
  %4531 = vmatprep.subr.bf16.mxu0 %v4096
  %4532 = vmatpush1.bf16.xpose.msra.mxu0 %v4095
  %4533 = vmatprep.subr.bf16.mxu0 0
  %4534 = vmatpush1.bf16.xpose.msra.mxu0 0
  %4535 = vmatprep.subr.bf16.mxu0 0
  %4536 = vmatpush1.bf16.xpose.msra.mxu0 0
  %4537 = vmatprep.subr.bf16.mxu0 0
  %4538 = vmatpush1.bf16.xpose.msra.mxu0 0
  %4539 = vmatprep.subr.bf16.mxu0 0
  %4540 = vmatpush1.bf16.xpose.msra.mxu0 0
  %4541 = vmatprep.subr.bf16.mxu0 0
  %4542 = vmatpush1.bf16.xpose.msra.mxu0 0
  %4543 = vmatprep.subr.bf16.mxu0 0
  %4544 = vmatpush1.bf16.xpose.msra.mxu0 0
  %4545 = vmatprep.subr.bf16.mxu0 0
  %4546 = vmatpush1.bf16.xpose.msra.mxu0 0
  %4547 = vmatprep.subr.bf16.mxu0 0
  %4548 = vmatpush1.bf16.xpose.msra.mxu0 0
  %4549 = vmatprep.subr.bf16.mxu0 0
  %4550 = vmatpush1.bf16.xpose.msra.mxu0 0
  %4551 = vmatprep.subr.bf16.mxu0 0
  %4552 = vmatpush1.bf16.xpose.msra.mxu0 0
  %4553 = vmatprep.subr.bf16.mxu0 0
  %4554 = vmatpush1.bf16.xpose.msra.mxu0 0
  %4555 = vmatprep.subr.bf16.mxu0 0
  %4556 = vmatpush1.bf16.xpose.msra.mxu0 0
  %4557 = vmatprep.subr.bf16.mxu0 0
  %4558 = vmatpush1.bf16.xpose.msra.mxu0 0
  %4559 = vmatprep.subr.bf16.mxu0 0
  %4560 = vmatpush1.bf16.xpose.msra.mxu0 0
  %4561 = vmatprep.subr.bf16.mxu0 0
  %4562 = vmatpush1.bf16.xpose.msra.mxu0 0
  %4563 = vmatprep.mubr.bf16.mxu0 %v3284
  %4564 = vmatmul.mubr.bf16.gmra.mrb[0].mxu0 %v3283
  %v4565 = vpop.f32.mrb[0].mxu0
  %v4566 = vadd.f32 %v4526, %v4565
  %v4567 = vpop.f32.mrb[0].mxu0
  %v4568 = vpop.f32.mrb[0].mxu0
  %v4569 = vpop.f32.mrb[0].mxu0
  %4570 = vdwg.mxu0
  %4571 = vmatprep.subr.bf16.mxu0 %v4098
  %4572 = vmatpush1.bf16.xpose.msra.mxu0 %v4097
  %4573 = vmatprep.subr.bf16.mxu0 0
  %4574 = vmatpush1.bf16.xpose.msra.mxu0 0
  %4575 = vmatprep.subr.bf16.mxu0 0
  %4576 = vmatpush1.bf16.xpose.msra.mxu0 0
  %4577 = vmatprep.subr.bf16.mxu0 0
  %4578 = vmatpush1.bf16.xpose.msra.mxu0 0
  %4579 = vmatprep.subr.bf16.mxu0 0
  %4580 = vmatpush1.bf16.xpose.msra.mxu0 0
  %4581 = vmatprep.subr.bf16.mxu0 0
  %4582 = vmatpush1.bf16.xpose.msra.mxu0 0
  %4583 = vmatprep.subr.bf16.mxu0 0
  %4584 = vmatpush1.bf16.xpose.msra.mxu0 0
  %4585 = vmatprep.subr.bf16.mxu0 0
  %4586 = vmatpush1.bf16.xpose.msra.mxu0 0
  %4587 = vmatprep.subr.bf16.mxu0 0
  %4588 = vmatpush1.bf16.xpose.msra.mxu0 0
  %4589 = vmatprep.subr.bf16.mxu0 0
  %4590 = vmatpush1.bf16.xpose.msra.mxu0 0
  %4591 = vmatprep.subr.bf16.mxu0 0
  %4592 = vmatpush1.bf16.xpose.msra.mxu0 0
  %4593 = vmatprep.subr.bf16.mxu0 0
  %4594 = vmatpush1.bf16.xpose.msra.mxu0 0
  %4595 = vmatprep.subr.bf16.mxu0 0
  %4596 = vmatpush1.bf16.xpose.msra.mxu0 0
  %4597 = vmatprep.subr.bf16.mxu0 0
  %4598 = vmatpush1.bf16.xpose.msra.mxu0 0
  %4599 = vmatprep.subr.bf16.mxu0 0
  %4600 = vmatpush1.bf16.xpose.msra.mxu0 0
  %4601 = vmatprep.subr.bf16.mxu0 0
  %4602 = vmatpush1.bf16.xpose.msra.mxu0 0
  %4603 = vmatprep.mubr.bf16.mxu0 %v3286
  %4604 = vmatmul.mubr.bf16.gmra.mrb[0].mxu0 %v3285
  %v4605 = vpop.f32.mrb[0].mxu0
  %v4606 = vadd.f32 %v4566, %v4605
  %v4607 = vpop.f32.mrb[0].mxu0
  %v4608 = vpop.f32.mrb[0].mxu0
  %v4609 = vpop.f32.mrb[0].mxu0
  %4610 = vdwg.mxu0
  %4611 = vmatprep.subr.bf16.mxu0 %v4100
  %4612 = vmatpush1.bf16.xpose.msra.mxu0 %v4099
  %4613 = vmatprep.subr.bf16.mxu0 0
  %4614 = vmatpush1.bf16.xpose.msra.mxu0 0
  %4615 = vmatprep.subr.bf16.mxu0 0
  %4616 = vmatpush1.bf16.xpose.msra.mxu0 0
  %4617 = vmatprep.subr.bf16.mxu0 0
  %4618 = vmatpush1.bf16.xpose.msra.mxu0 0
  %4619 = vmatprep.subr.bf16.mxu0 0
  %4620 = vmatpush1.bf16.xpose.msra.mxu0 0
  %4621 = vmatprep.subr.bf16.mxu0 0
  %4622 = vmatpush1.bf16.xpose.msra.mxu0 0
  %4623 = vmatprep.subr.bf16.mxu0 0
  %4624 = vmatpush1.bf16.xpose.msra.mxu0 0
  %4625 = vmatprep.subr.bf16.mxu0 0
  %4626 = vmatpush1.bf16.xpose.msra.mxu0 0
  %4627 = vmatprep.subr.bf16.mxu0 0
  %4628 = vmatpush1.bf16.xpose.msra.mxu0 0
  %4629 = vmatprep.subr.bf16.mxu0 0
  %4630 = vmatpush1.bf16.xpose.msra.mxu0 0
  %4631 = vmatprep.subr.bf16.mxu0 0
  %4632 = vmatpush1.bf16.xpose.msra.mxu0 0
  %4633 = vmatprep.subr.bf16.mxu0 0
  %4634 = vmatpush1.bf16.xpose.msra.mxu0 0
  %4635 = vmatprep.subr.bf16.mxu0 0
  %4636 = vmatpush1.bf16.xpose.msra.mxu0 0
  %4637 = vmatprep.subr.bf16.mxu0 0
  %4638 = vmatpush1.bf16.xpose.msra.mxu0 0
  %4639 = vmatprep.subr.bf16.mxu0 0
  %4640 = vmatpush1.bf16.xpose.msra.mxu0 0
  %4641 = vmatprep.subr.bf16.mxu0 0
  %4642 = vmatpush1.bf16.xpose.msra.mxu0 0
  %4643 = vmatprep.mubr.bf16.mxu0 %v3288
  %4644 = vmatmul.mubr.bf16.gmra.mrb[0].mxu0 %v3287
  %v4645 = vpop.f32.mrb[0].mxu0
  %v4646 = vadd.f32 %v4606, %v4645
  %v4647 = vpop.f32.mrb[0].mxu0
  %v4648 = vpop.f32.mrb[0].mxu0
  %v4649 = vpop.f32.mrb[0].mxu0
  %4650 = vdwg.mxu0
  %4651 = vmatprep.subr.bf16.mxu0 %v4102
  %4652 = vmatpush1.bf16.xpose.msra.mxu0 %v4101
  %4653 = vmatprep.subr.bf16.mxu0 0
  %4654 = vmatpush1.bf16.xpose.msra.mxu0 0
  %4655 = vmatprep.subr.bf16.mxu0 0
  %4656 = vmatpush1.bf16.xpose.msra.mxu0 0
  %4657 = vmatprep.subr.bf16.mxu0 0
  %4658 = vmatpush1.bf16.xpose.msra.mxu0 0
  %4659 = vmatprep.subr.bf16.mxu0 0
  %4660 = vmatpush1.bf16.xpose.msra.mxu0 0
  %4661 = vmatprep.subr.bf16.mxu0 0
  %4662 = vmatpush1.bf16.xpose.msra.mxu0 0
  %4663 = vmatprep.subr.bf16.mxu0 0
  %4664 = vmatpush1.bf16.xpose.msra.mxu0 0
  %4665 = vmatprep.subr.bf16.mxu0 0
  %4666 = vmatpush1.bf16.xpose.msra.mxu0 0
  %4667 = vmatprep.subr.bf16.mxu0 0
  %4668 = vmatpush1.bf16.xpose.msra.mxu0 0
  %4669 = vmatprep.subr.bf16.mxu0 0
  %4670 = vmatpush1.bf16.xpose.msra.mxu0 0
  %4671 = vmatprep.subr.bf16.mxu0 0
  %4672 = vmatpush1.bf16.xpose.msra.mxu0 0
  %4673 = vmatprep.subr.bf16.mxu0 0
  %4674 = vmatpush1.bf16.xpose.msra.mxu0 0
  %4675 = vmatprep.subr.bf16.mxu0 0
  %4676 = vmatpush1.bf16.xpose.msra.mxu0 0
  %4677 = vmatprep.subr.bf16.mxu0 0
  %4678 = vmatpush1.bf16.xpose.msra.mxu0 0
  %4679 = vmatprep.subr.bf16.mxu0 0
  %4680 = vmatpush1.bf16.xpose.msra.mxu0 0
  %4681 = vmatprep.subr.bf16.mxu0 0
  %4682 = vmatpush1.bf16.xpose.msra.mxu0 0
  %4683 = vmatprep.mubr.bf16.mxu0 %v3290
  %4684 = vmatmul.mubr.bf16.gmra.mrb[0].mxu0 %v3289
  %v4685 = vpop.f32.mrb[0].mxu0
  %v4686 = vadd.f32 %v4646, %v4685
  %v4687 = vpop.f32.mrb[0].mxu0
  %v4688 = vpop.f32.mrb[0].mxu0
  %v4689 = vpop.f32.mrb[0].mxu0
  %4690 = vdwg.mxu0
  %v4691 = vld [vmem:[#allocation2 + $0x1c0] sm:$0xff]
  %v4692 = vld [vmem:[#allocation2 + $0x1c8] sm:$0xff]
  %v4693 = vld [vmem:[#allocation2 + $0x1d0] sm:$0xff]
  %v4694 = vld [vmem:[#allocation2 + $0x1d8] sm:$0xff]
  %v4695 = vld [vmem:[#allocation2 + $0x1e0] sm:$0xff]
  %v4696 = vld [vmem:[#allocation2 + $0x1e8] sm:$0xff]
  %v4697 = vld [vmem:[#allocation2 + $0x1f0] sm:$0xff]
  %v4698 = vld [vmem:[#allocation2 + $0x1f8] sm:$0xff]
  %v4699 = vld [vmem:[#allocation2 + $0x200] sm:$0xff]
  %v4700 = vld [vmem:[#allocation2 + $0x208] sm:$0xff]
  %v4701 = vld [vmem:[#allocation2 + $0x210] sm:$0xff]
  %v4702 = vld [vmem:[#allocation2 + $0x218] sm:$0xff]
  %v4703 = vld [vmem:[#allocation2 + $0x220] sm:$0xff]
  %v4704 = vld [vmem:[#allocation2 + $0x228] sm:$0xff]
  %v4705 = vld [vmem:[#allocation2 + $0x230] sm:$0xff]
  %v4706 = vld [vmem:[#allocation2 + $0x238] sm:$0xff]
  %v4707 = vld [vmem:[#allocation2 + $0x240] sm:$0xff]
  %v4708 = vld [vmem:[#allocation2 + $0x248] sm:$0xff]
  %v4709 = vld [vmem:[#allocation2 + $0x250] sm:$0xff]
  %v4710 = vld [vmem:[#allocation2 + $0x258] sm:$0xff]
  %v4711 = vld [vmem:[#allocation2 + $0x260] sm:$0xff]
  %v4712 = vld [vmem:[#allocation2 + $0x268] sm:$0xff]
  %v4713 = vld [vmem:[#allocation2 + $0x270] sm:$0xff]
  %v4714 = vld [vmem:[#allocation2 + $0x278] sm:$0xff]
  %v4715 = vld [vmem:[#allocation2 + $0x280] sm:$0xff]
  %v4716 = vld [vmem:[#allocation2 + $0x288] sm:$0xff]
  %v4717 = vld [vmem:[#allocation2 + $0x290] sm:$0xff]
  %v4718 = vld [vmem:[#allocation2 + $0x298] sm:$0xff]
  %v4719 = vpack.c.bf16 %v4691, %v4691
  %v4720 = vpack.c.bf16 %v4692, %v4692
  %v4721 = vpack.c.bf16 %v4693, %v4693
  %v4722 = vpack.c.bf16 %v4694, %v4694
  %v4723 = vpack.c.bf16 %v4695, %v4695
  %v4724 = vpack.c.bf16 %v4696, %v4696
  %v4725 = vpack.c.bf16 %v4697, %v4697
  %v4726 = vpack.c.bf16 %v4698, %v4698
  %v4727 = vpack.c.bf16 %v4699, %v4699
  %v4728 = vpack.c.bf16 %v4700, %v4700
  %v4729 = vpack.c.bf16 %v4701, %v4701
  %v4730 = vpack.c.bf16 %v4702, %v4702
  %v4731 = vpack.c.bf16 %v4703, %v4703
  %v4732 = vpack.c.bf16 %v4704, %v4704
  %v4733 = vpack.c.bf16 %v4705, %v4705
  %v4734 = vpack.c.bf16 %v4706, %v4706
  %v4735 = vpack.c.bf16 %v4707, %v4707
  %v4736 = vpack.c.bf16 %v4708, %v4708
  %v4737 = vpack.c.bf16 %v4709, %v4709
  %v4738 = vpack.c.bf16 %v4710, %v4710
  %v4739 = vpack.c.bf16 %v4711, %v4711
  %v4740 = vpack.c.bf16 %v4712, %v4712
  %v4741 = vpack.c.bf16 %v4713, %v4713
  %v4742 = vpack.c.bf16 %v4714, %v4714
  %v4743 = vpack.c.bf16 %v4715, %v4715
  %v4744 = vpack.c.bf16 %v4716, %v4716
  %v4745 = vpack.c.bf16 %v4717, %v4717
  %v4746 = vpack.c.bf16 %v4718, %v4718
  %v4747 = vld [vmem:[%s2 + $0xe0] sm:$0xff]
  %v4748 = vld [vmem:[%s2 + $0xe8] sm:$0xff]
  %v4749 = vld [vmem:[%s2 + $0xf0] sm:$0xff]
  %v4750 = vld [vmem:[%s2 + $0xf8] sm:$0xff]
  %v4751 = vld [vmem:[%s2 + $0x100] sm:$0xff]
  %v4752 = vld [vmem:[%s2 + $0x108] sm:$0xff]
  %v4753 = vld [vmem:[%s2 + $0x110] sm:$0xff]
  %v4754 = vld [vmem:[%s2 + $0x118] sm:$0xff]
  %v4755 = vld [vmem:[%s2 + $0x120] sm:$0xff]
  %v4756 = vld [vmem:[%s2 + $0x128] sm:$0xff]
  %v4757 = vld [vmem:[%s2 + $0x130] sm:$0xff]
  %v4758 = vld [vmem:[%s2 + $0x138] sm:$0xff]
  %v4759 = vld [vmem:[%s2 + $0x140] sm:$0xff]
  %v4760 = vld [vmem:[%s2 + $0x148] sm:$0xff]
  %v4775 = vunpack.c.l.b16 %v4747
  %v4776 = vunpack.c.h.b16 %v4747
  %v4777 = vunpack.c.l.b16 %v4748
  %v4778 = vunpack.c.h.b16 %v4748
  %v4779 = vunpack.c.l.b16 %v4749
  %v4780 = vunpack.c.h.b16 %v4749
  %v4781 = vunpack.c.l.b16 %v4750
  %v4782 = vunpack.c.h.b16 %v4750
  %v4783 = vunpack.c.l.b16 %v4751
  %v4784 = vunpack.c.h.b16 %v4751
  %v4785 = vunpack.c.l.b16 %v4752
  %v4786 = vunpack.c.h.b16 %v4752
  %v4787 = vunpack.c.l.b16 %v4753
  %v4788 = vunpack.c.h.b16 %v4753
  %v4789 = vunpack.c.l.b16 %v4754
  %v4790 = vunpack.c.h.b16 %v4754
  %v4791 = vunpack.c.l.b16 %v4755
  %v4792 = vunpack.c.h.b16 %v4755
  %v4793 = vunpack.c.l.b16 %v4756
  %v4794 = vunpack.c.h.b16 %v4756
  %v4795 = vunpack.c.l.b16 %v4757
  %v4796 = vunpack.c.h.b16 %v4757
  %v4797 = vunpack.c.l.b16 %v4758
  %v4798 = vunpack.c.h.b16 %v4758
  %v4799 = vunpack.c.l.b16 %v4759
  %v4800 = vunpack.c.h.b16 %v4759
  %v4801 = vunpack.c.l.b16 %v4760
  %v4802 = vunpack.c.h.b16 %v4760
  %v4803 = vpack.c.b16 %v4775, %v4775
  %v4804 = vpack.c.b16 %v4776, %v4776
  %v4805 = vpack.c.b16 %v4777, %v4777
  %v4806 = vpack.c.b16 %v4778, %v4778
  %v4807 = vpack.c.b16 %v4779, %v4779
  %v4808 = vpack.c.b16 %v4780, %v4780
  %v4809 = vpack.c.b16 %v4781, %v4781
  %v4810 = vpack.c.b16 %v4782, %v4782
  %v4811 = vpack.c.b16 %v4783, %v4783
  %v4812 = vpack.c.b16 %v4784, %v4784
  %v4813 = vpack.c.b16 %v4785, %v4785
  %v4814 = vpack.c.b16 %v4786, %v4786
  %v4815 = vpack.c.b16 %v4787, %v4787
  %v4816 = vpack.c.b16 %v4788, %v4788
  %v4817 = vpack.c.b16 %v4789, %v4789
  %v4818 = vpack.c.b16 %v4790, %v4790
  %v4819 = vpack.c.b16 %v4791, %v4791
  %v4820 = vpack.c.b16 %v4792, %v4792
  %v4821 = vpack.c.b16 %v4793, %v4793
  %v4822 = vpack.c.b16 %v4794, %v4794
  %v4823 = vpack.c.b16 %v4795, %v4795
  %v4824 = vpack.c.b16 %v4796, %v4796
  %v4825 = vpack.c.b16 %v4797, %v4797
  %v4826 = vpack.c.b16 %v4798, %v4798
  %v4827 = vpack.c.b16 %v4799, %v4799
  %v4828 = vpack.c.b16 %v4800, %v4800
  %v4829 = vpack.c.b16 %v4801, %v4801
  %v4830 = vpack.c.b16 %v4802, %v4802
  %4859 = vmatprep.subr.bf16.mxu0 %v4804
  %4860 = vmatpush1.bf16.xpose.msra.mxu0 %v4803
  %4861 = vmatprep.subr.bf16.mxu0 0
  %4862 = vmatpush1.bf16.xpose.msra.mxu0 0
  %4863 = vmatprep.subr.bf16.mxu0 0
  %4864 = vmatpush1.bf16.xpose.msra.mxu0 0
  %4865 = vmatprep.subr.bf16.mxu0 0
  %4866 = vmatpush1.bf16.xpose.msra.mxu0 0
  %4867 = vmatprep.subr.bf16.mxu0 0
  %4868 = vmatpush1.bf16.xpose.msra.mxu0 0
  %4869 = vmatprep.subr.bf16.mxu0 0
  %4870 = vmatpush1.bf16.xpose.msra.mxu0 0
  %4871 = vmatprep.subr.bf16.mxu0 0
  %4872 = vmatpush1.bf16.xpose.msra.mxu0 0
  %4873 = vmatprep.subr.bf16.mxu0 0
  %4874 = vmatpush1.bf16.xpose.msra.mxu0 0
  %4875 = vmatprep.subr.bf16.mxu0 0
  %4876 = vmatpush1.bf16.xpose.msra.mxu0 0
  %4877 = vmatprep.subr.bf16.mxu0 0
  %4878 = vmatpush1.bf16.xpose.msra.mxu0 0
  %4879 = vmatprep.subr.bf16.mxu0 0
  %4880 = vmatpush1.bf16.xpose.msra.mxu0 0
  %4881 = vmatprep.subr.bf16.mxu0 0
  %4882 = vmatpush1.bf16.xpose.msra.mxu0 0
  %4883 = vmatprep.subr.bf16.mxu0 0
  %4884 = vmatpush1.bf16.xpose.msra.mxu0 0
  %4885 = vmatprep.subr.bf16.mxu0 0
  %4886 = vmatpush1.bf16.xpose.msra.mxu0 0
  %4887 = vmatprep.subr.bf16.mxu0 0
  %4888 = vmatpush1.bf16.xpose.msra.mxu0 0
  %4889 = vmatprep.subr.bf16.mxu0 0
  %4890 = vmatpush1.bf16.xpose.msra.mxu0 0
  %4891 = vmatprep.mubr.bf16.mxu0 %v4720
  %4892 = vmatmul.mubr.bf16.gmra.mrb[0].mxu0 %v4719
  %v4893 = vpop.f32.mrb[0].mxu0
  %v4894 = vadd.f32 0.0, %v4893
  %v4895 = vpop.f32.mrb[0].mxu0
  %v4896 = vpop.f32.mrb[0].mxu0
  %v4897 = vpop.f32.mrb[0].mxu0
  %4898 = vdwg.mxu0
  %4899 = vmatprep.subr.bf16.mxu0 %v4806
  %4900 = vmatpush1.bf16.xpose.msra.mxu0 %v4805
  %4901 = vmatprep.subr.bf16.mxu0 0
  %4902 = vmatpush1.bf16.xpose.msra.mxu0 0
  %4903 = vmatprep.subr.bf16.mxu0 0
  %4904 = vmatpush1.bf16.xpose.msra.mxu0 0
  %4905 = vmatprep.subr.bf16.mxu0 0
  %4906 = vmatpush1.bf16.xpose.msra.mxu0 0
  %4907 = vmatprep.subr.bf16.mxu0 0
  %4908 = vmatpush1.bf16.xpose.msra.mxu0 0
  %4909 = vmatprep.subr.bf16.mxu0 0
  %4910 = vmatpush1.bf16.xpose.msra.mxu0 0
  %4911 = vmatprep.subr.bf16.mxu0 0
  %4912 = vmatpush1.bf16.xpose.msra.mxu0 0
  %4913 = vmatprep.subr.bf16.mxu0 0
  %4914 = vmatpush1.bf16.xpose.msra.mxu0 0
  %4915 = vmatprep.subr.bf16.mxu0 0
  %4916 = vmatpush1.bf16.xpose.msra.mxu0 0
  %4917 = vmatprep.subr.bf16.mxu0 0
  %4918 = vmatpush1.bf16.xpose.msra.mxu0 0
  %4919 = vmatprep.subr.bf16.mxu0 0
  %4920 = vmatpush1.bf16.xpose.msra.mxu0 0
  %4921 = vmatprep.subr.bf16.mxu0 0
  %4922 = vmatpush1.bf16.xpose.msra.mxu0 0
  %4923 = vmatprep.subr.bf16.mxu0 0
  %4924 = vmatpush1.bf16.xpose.msra.mxu0 0
  %4925 = vmatprep.subr.bf16.mxu0 0
  %4926 = vmatpush1.bf16.xpose.msra.mxu0 0
  %4927 = vmatprep.subr.bf16.mxu0 0
  %4928 = vmatpush1.bf16.xpose.msra.mxu0 0
  %4929 = vmatprep.subr.bf16.mxu0 0
  %4930 = vmatpush1.bf16.xpose.msra.mxu0 0
  %4931 = vmatprep.mubr.bf16.mxu0 %v4722
  %4932 = vmatmul.mubr.bf16.gmra.mrb[0].mxu0 %v4721
  %v4933 = vpop.f32.mrb[0].mxu0
  %v4934 = vadd.f32 %v4894, %v4933
  %v4935 = vpop.f32.mrb[0].mxu0
  %v4936 = vpop.f32.mrb[0].mxu0
  %v4937 = vpop.f32.mrb[0].mxu0
  %4938 = vdwg.mxu0
  %4939 = vmatprep.subr.bf16.mxu0 %v4808
  %4940 = vmatpush1.bf16.xpose.msra.mxu0 %v4807
  %4941 = vmatprep.subr.bf16.mxu0 0
  %4942 = vmatpush1.bf16.xpose.msra.mxu0 0
  %4943 = vmatprep.subr.bf16.mxu0 0
  %4944 = vmatpush1.bf16.xpose.msra.mxu0 0
  %4945 = vmatprep.subr.bf16.mxu0 0
  %4946 = vmatpush1.bf16.xpose.msra.mxu0 0
  %4947 = vmatprep.subr.bf16.mxu0 0
  %4948 = vmatpush1.bf16.xpose.msra.mxu0 0
  %4949 = vmatprep.subr.bf16.mxu0 0
  %4950 = vmatpush1.bf16.xpose.msra.mxu0 0
  %4951 = vmatprep.subr.bf16.mxu0 0
  %4952 = vmatpush1.bf16.xpose.msra.mxu0 0
  %4953 = vmatprep.subr.bf16.mxu0 0
  %4954 = vmatpush1.bf16.xpose.msra.mxu0 0
  %4955 = vmatprep.subr.bf16.mxu0 0
  %4956 = vmatpush1.bf16.xpose.msra.mxu0 0
  %4957 = vmatprep.subr.bf16.mxu0 0
  %4958 = vmatpush1.bf16.xpose.msra.mxu0 0
  %4959 = vmatprep.subr.bf16.mxu0 0
  %4960 = vmatpush1.bf16.xpose.msra.mxu0 0
  %4961 = vmatprep.subr.bf16.mxu0 0
  %4962 = vmatpush1.bf16.xpose.msra.mxu0 0
  %4963 = vmatprep.subr.bf16.mxu0 0
  %4964 = vmatpush1.bf16.xpose.msra.mxu0 0
  %4965 = vmatprep.subr.bf16.mxu0 0
  %4966 = vmatpush1.bf16.xpose.msra.mxu0 0
  %4967 = vmatprep.subr.bf16.mxu0 0
  %4968 = vmatpush1.bf16.xpose.msra.mxu0 0
  %4969 = vmatprep.subr.bf16.mxu0 0
  %4970 = vmatpush1.bf16.xpose.msra.mxu0 0
  %4971 = vmatprep.mubr.bf16.mxu0 %v4724
  %4972 = vmatmul.mubr.bf16.gmra.mrb[0].mxu0 %v4723
  %v4973 = vpop.f32.mrb[0].mxu0
  %v4974 = vadd.f32 %v4934, %v4973
  %v4975 = vpop.f32.mrb[0].mxu0
  %v4976 = vpop.f32.mrb[0].mxu0
  %v4977 = vpop.f32.mrb[0].mxu0
  %4978 = vdwg.mxu0
  %4979 = vmatprep.subr.bf16.mxu0 %v4810
  %4980 = vmatpush1.bf16.xpose.msra.mxu0 %v4809
  %4981 = vmatprep.subr.bf16.mxu0 0
  %4982 = vmatpush1.bf16.xpose.msra.mxu0 0
  %4983 = vmatprep.subr.bf16.mxu0 0
  %4984 = vmatpush1.bf16.xpose.msra.mxu0 0
  %4985 = vmatprep.subr.bf16.mxu0 0
  %4986 = vmatpush1.bf16.xpose.msra.mxu0 0
  %4987 = vmatprep.subr.bf16.mxu0 0
  %4988 = vmatpush1.bf16.xpose.msra.mxu0 0
  %4989 = vmatprep.subr.bf16.mxu0 0
  %4990 = vmatpush1.bf16.xpose.msra.mxu0 0
  %4991 = vmatprep.subr.bf16.mxu0 0
  %4992 = vmatpush1.bf16.xpose.msra.mxu0 0
  %4993 = vmatprep.subr.bf16.mxu0 0
  %4994 = vmatpush1.bf16.xpose.msra.mxu0 0
  %4995 = vmatprep.subr.bf16.mxu0 0
  %4996 = vmatpush1.bf16.xpose.msra.mxu0 0
  %4997 = vmatprep.subr.bf16.mxu0 0
  %4998 = vmatpush1.bf16.xpose.msra.mxu0 0
  %4999 = vmatprep.subr.bf16.mxu0 0
  %5000 = vmatpush1.bf16.xpose.msra.mxu0 0
  %5001 = vmatprep.subr.bf16.mxu0 0
  %5002 = vmatpush1.bf16.xpose.msra.mxu0 0
  %5003 = vmatprep.subr.bf16.mxu0 0
  %5004 = vmatpush1.bf16.xpose.msra.mxu0 0
  %5005 = vmatprep.subr.bf16.mxu0 0
  %5006 = vmatpush1.bf16.xpose.msra.mxu0 0
  %5007 = vmatprep.subr.bf16.mxu0 0
  %5008 = vmatpush1.bf16.xpose.msra.mxu0 0
  %5009 = vmatprep.subr.bf16.mxu0 0
  %5010 = vmatpush1.bf16.xpose.msra.mxu0 0
  %5011 = vmatprep.mubr.bf16.mxu0 %v4726
  %5012 = vmatmul.mubr.bf16.gmra.mrb[0].mxu0 %v4725
  %v5013 = vpop.f32.mrb[0].mxu0
  %v5014 = vadd.f32 %v4974, %v5013
  %v5015 = vpop.f32.mrb[0].mxu0
  %v5016 = vpop.f32.mrb[0].mxu0
  %v5017 = vpop.f32.mrb[0].mxu0
  %5018 = vdwg.mxu0
  %5019 = vmatprep.subr.bf16.mxu0 %v4812
  %5020 = vmatpush1.bf16.xpose.msra.mxu0 %v4811
  %5021 = vmatprep.subr.bf16.mxu0 0
  %5022 = vmatpush1.bf16.xpose.msra.mxu0 0
  %5023 = vmatprep.subr.bf16.mxu0 0
  %5024 = vmatpush1.bf16.xpose.msra.mxu0 0
  %5025 = vmatprep.subr.bf16.mxu0 0
  %5026 = vmatpush1.bf16.xpose.msra.mxu0 0
  %5027 = vmatprep.subr.bf16.mxu0 0
  %5028 = vmatpush1.bf16.xpose.msra.mxu0 0
  %5029 = vmatprep.subr.bf16.mxu0 0
  %5030 = vmatpush1.bf16.xpose.msra.mxu0 0
  %5031 = vmatprep.subr.bf16.mxu0 0
  %5032 = vmatpush1.bf16.xpose.msra.mxu0 0
  %5033 = vmatprep.subr.bf16.mxu0 0
  %5034 = vmatpush1.bf16.xpose.msra.mxu0 0
  %5035 = vmatprep.subr.bf16.mxu0 0
  %5036 = vmatpush1.bf16.xpose.msra.mxu0 0
  %5037 = vmatprep.subr.bf16.mxu0 0
  %5038 = vmatpush1.bf16.xpose.msra.mxu0 0
  %5039 = vmatprep.subr.bf16.mxu0 0
  %5040 = vmatpush1.bf16.xpose.msra.mxu0 0
  %5041 = vmatprep.subr.bf16.mxu0 0
  %5042 = vmatpush1.bf16.xpose.msra.mxu0 0
  %5043 = vmatprep.subr.bf16.mxu0 0
  %5044 = vmatpush1.bf16.xpose.msra.mxu0 0
  %5045 = vmatprep.subr.bf16.mxu0 0
  %5046 = vmatpush1.bf16.xpose.msra.mxu0 0
  %5047 = vmatprep.subr.bf16.mxu0 0
  %5048 = vmatpush1.bf16.xpose.msra.mxu0 0
  %5049 = vmatprep.subr.bf16.mxu0 0
  %5050 = vmatpush1.bf16.xpose.msra.mxu0 0
  %5051 = vmatprep.mubr.bf16.mxu0 %v4728
  %5052 = vmatmul.mubr.bf16.gmra.mrb[0].mxu0 %v4727
  %v5053 = vpop.f32.mrb[0].mxu0
  %v5054 = vadd.f32 %v5014, %v5053
  %v5055 = vpop.f32.mrb[0].mxu0
  %v5056 = vpop.f32.mrb[0].mxu0
  %v5057 = vpop.f32.mrb[0].mxu0
  %5058 = vdwg.mxu0
  %5059 = vmatprep.subr.bf16.mxu0 %v4814
  %5060 = vmatpush1.bf16.xpose.msra.mxu0 %v4813
  %5061 = vmatprep.subr.bf16.mxu0 0
  %5062 = vmatpush1.bf16.xpose.msra.mxu0 0
  %5063 = vmatprep.subr.bf16.mxu0 0
  %5064 = vmatpush1.bf16.xpose.msra.mxu0 0
  %5065 = vmatprep.subr.bf16.mxu0 0
  %5066 = vmatpush1.bf16.xpose.msra.mxu0 0
  %5067 = vmatprep.subr.bf16.mxu0 0
  %5068 = vmatpush1.bf16.xpose.msra.mxu0 0
  %5069 = vmatprep.subr.bf16.mxu0 0
  %5070 = vmatpush1.bf16.xpose.msra.mxu0 0
  %5071 = vmatprep.subr.bf16.mxu0 0
  %5072 = vmatpush1.bf16.xpose.msra.mxu0 0
  %5073 = vmatprep.subr.bf16.mxu0 0
  %5074 = vmatpush1.bf16.xpose.msra.mxu0 0
  %5075 = vmatprep.subr.bf16.mxu0 0
  %5076 = vmatpush1.bf16.xpose.msra.mxu0 0
  %5077 = vmatprep.subr.bf16.mxu0 0
  %5078 = vmatpush1.bf16.xpose.msra.mxu0 0
  %5079 = vmatprep.subr.bf16.mxu0 0
  %5080 = vmatpush1.bf16.xpose.msra.mxu0 0
  %5081 = vmatprep.subr.bf16.mxu0 0
  %5082 = vmatpush1.bf16.xpose.msra.mxu0 0
  %5083 = vmatprep.subr.bf16.mxu0 0
  %5084 = vmatpush1.bf16.xpose.msra.mxu0 0
  %5085 = vmatprep.subr.bf16.mxu0 0
  %5086 = vmatpush1.bf16.xpose.msra.mxu0 0
  %5087 = vmatprep.subr.bf16.mxu0 0
  %5088 = vmatpush1.bf16.xpose.msra.mxu0 0
  %5089 = vmatprep.subr.bf16.mxu0 0
  %5090 = vmatpush1.bf16.xpose.msra.mxu0 0
  %5091 = vmatprep.mubr.bf16.mxu0 %v4730
  %5092 = vmatmul.mubr.bf16.gmra.mrb[0].mxu0 %v4729
  %v5093 = vpop.f32.mrb[0].mxu0
  %v5094 = vadd.f32 %v5054, %v5093
  %v5095 = vpop.f32.mrb[0].mxu0
  %v5096 = vpop.f32.mrb[0].mxu0
  %v5097 = vpop.f32.mrb[0].mxu0
  %5098 = vdwg.mxu0
  %5099 = vmatprep.subr.bf16.mxu0 %v4816
  %5100 = vmatpush1.bf16.xpose.msra.mxu0 %v4815
  %5101 = vmatprep.subr.bf16.mxu0 0
  %5102 = vmatpush1.bf16.xpose.msra.mxu0 0
  %5103 = vmatprep.subr.bf16.mxu0 0
  %5104 = vmatpush1.bf16.xpose.msra.mxu0 0
  %5105 = vmatprep.subr.bf16.mxu0 0
  %5106 = vmatpush1.bf16.xpose.msra.mxu0 0
  %5107 = vmatprep.subr.bf16.mxu0 0
  %5108 = vmatpush1.bf16.xpose.msra.mxu0 0
  %5109 = vmatprep.subr.bf16.mxu0 0
  %5110 = vmatpush1.bf16.xpose.msra.mxu0 0
  %5111 = vmatprep.subr.bf16.mxu0 0
  %5112 = vmatpush1.bf16.xpose.msra.mxu0 0
  %5113 = vmatprep.subr.bf16.mxu0 0
  %5114 = vmatpush1.bf16.xpose.msra.mxu0 0
  %5115 = vmatprep.subr.bf16.mxu0 0
  %5116 = vmatpush1.bf16.xpose.msra.mxu0 0
  %5117 = vmatprep.subr.bf16.mxu0 0
  %5118 = vmatpush1.bf16.xpose.msra.mxu0 0
  %5119 = vmatprep.subr.bf16.mxu0 0
  %5120 = vmatpush1.bf16.xpose.msra.mxu0 0
  %5121 = vmatprep.subr.bf16.mxu0 0
  %5122 = vmatpush1.bf16.xpose.msra.mxu0 0
  %5123 = vmatprep.subr.bf16.mxu0 0
  %5124 = vmatpush1.bf16.xpose.msra.mxu0 0
  %5125 = vmatprep.subr.bf16.mxu0 0
  %5126 = vmatpush1.bf16.xpose.msra.mxu0 0
  %5127 = vmatprep.subr.bf16.mxu0 0
  %5128 = vmatpush1.bf16.xpose.msra.mxu0 0
  %5129 = vmatprep.subr.bf16.mxu0 0
  %5130 = vmatpush1.bf16.xpose.msra.mxu0 0
  %5131 = vmatprep.mubr.bf16.mxu0 %v4732
  %5132 = vmatmul.mubr.bf16.gmra.mrb[0].mxu0 %v4731
  %v5133 = vpop.f32.mrb[0].mxu0
  %v5134 = vadd.f32 %v5094, %v5133
  %v5135 = vpop.f32.mrb[0].mxu0
  %v5136 = vpop.f32.mrb[0].mxu0
  %v5137 = vpop.f32.mrb[0].mxu0
  %5138 = vdwg.mxu0
  %5139 = vmatprep.subr.bf16.mxu0 %v4818
  %5140 = vmatpush1.bf16.xpose.msra.mxu0 %v4817
  %5141 = vmatprep.subr.bf16.mxu0 0
  %5142 = vmatpush1.bf16.xpose.msra.mxu0 0
  %5143 = vmatprep.subr.bf16.mxu0 0
  %5144 = vmatpush1.bf16.xpose.msra.mxu0 0
  %5145 = vmatprep.subr.bf16.mxu0 0
  %5146 = vmatpush1.bf16.xpose.msra.mxu0 0
  %5147 = vmatprep.subr.bf16.mxu0 0
  %5148 = vmatpush1.bf16.xpose.msra.mxu0 0
  %5149 = vmatprep.subr.bf16.mxu0 0
  %5150 = vmatpush1.bf16.xpose.msra.mxu0 0
  %5151 = vmatprep.subr.bf16.mxu0 0
  %5152 = vmatpush1.bf16.xpose.msra.mxu0 0
  %5153 = vmatprep.subr.bf16.mxu0 0
  %5154 = vmatpush1.bf16.xpose.msra.mxu0 0
  %5155 = vmatprep.subr.bf16.mxu0 0
  %5156 = vmatpush1.bf16.xpose.msra.mxu0 0
  %5157 = vmatprep.subr.bf16.mxu0 0
  %5158 = vmatpush1.bf16.xpose.msra.mxu0 0
  %5159 = vmatprep.subr.bf16.mxu0 0
  %5160 = vmatpush1.bf16.xpose.msra.mxu0 0
  %5161 = vmatprep.subr.bf16.mxu0 0
  %5162 = vmatpush1.bf16.xpose.msra.mxu0 0
  %5163 = vmatprep.subr.bf16.mxu0 0
  %5164 = vmatpush1.bf16.xpose.msra.mxu0 0
  %5165 = vmatprep.subr.bf16.mxu0 0
  %5166 = vmatpush1.bf16.xpose.msra.mxu0 0
  %5167 = vmatprep.subr.bf16.mxu0 0
  %5168 = vmatpush1.bf16.xpose.msra.mxu0 0
  %5169 = vmatprep.subr.bf16.mxu0 0
  %5170 = vmatpush1.bf16.xpose.msra.mxu0 0
  %5171 = vmatprep.mubr.bf16.mxu0 %v4734
  %5172 = vmatmul.mubr.bf16.gmra.mrb[0].mxu0 %v4733
  %v5173 = vpop.f32.mrb[0].mxu0
  %v5174 = vadd.f32 %v5134, %v5173
  %v5175 = vpop.f32.mrb[0].mxu0
  %v5176 = vpop.f32.mrb[0].mxu0
  %v5177 = vpop.f32.mrb[0].mxu0
  %5178 = vdwg.mxu0
  %5179 = vmatprep.subr.bf16.mxu0 %v4820
  %5180 = vmatpush1.bf16.xpose.msra.mxu0 %v4819
  %5181 = vmatprep.subr.bf16.mxu0 0
  %5182 = vmatpush1.bf16.xpose.msra.mxu0 0
  %5183 = vmatprep.subr.bf16.mxu0 0
  %5184 = vmatpush1.bf16.xpose.msra.mxu0 0
  %5185 = vmatprep.subr.bf16.mxu0 0
  %5186 = vmatpush1.bf16.xpose.msra.mxu0 0
  %5187 = vmatprep.subr.bf16.mxu0 0
  %5188 = vmatpush1.bf16.xpose.msra.mxu0 0
  %5189 = vmatprep.subr.bf16.mxu0 0
  %5190 = vmatpush1.bf16.xpose.msra.mxu0 0
  %5191 = vmatprep.subr.bf16.mxu0 0
  %5192 = vmatpush1.bf16.xpose.msra.mxu0 0
  %5193 = vmatprep.subr.bf16.mxu0 0
  %5194 = vmatpush1.bf16.xpose.msra.mxu0 0
  %5195 = vmatprep.subr.bf16.mxu0 0
  %5196 = vmatpush1.bf16.xpose.msra.mxu0 0
  %5197 = vmatprep.subr.bf16.mxu0 0
  %5198 = vmatpush1.bf16.xpose.msra.mxu0 0
  %5199 = vmatprep.subr.bf16.mxu0 0
  %5200 = vmatpush1.bf16.xpose.msra.mxu0 0
  %5201 = vmatprep.subr.bf16.mxu0 0
  %5202 = vmatpush1.bf16.xpose.msra.mxu0 0
  %5203 = vmatprep.subr.bf16.mxu0 0
  %5204 = vmatpush1.bf16.xpose.msra.mxu0 0
  %5205 = vmatprep.subr.bf16.mxu0 0
  %5206 = vmatpush1.bf16.xpose.msra.mxu0 0
  %5207 = vmatprep.subr.bf16.mxu0 0
  %5208 = vmatpush1.bf16.xpose.msra.mxu0 0
  %5209 = vmatprep.subr.bf16.mxu0 0
  %5210 = vmatpush1.bf16.xpose.msra.mxu0 0
  %5211 = vmatprep.mubr.bf16.mxu0 %v4736
  %5212 = vmatmul.mubr.bf16.gmra.mrb[0].mxu0 %v4735
  %v5213 = vpop.f32.mrb[0].mxu0
  %v5214 = vadd.f32 %v5174, %v5213
  %v5215 = vpop.f32.mrb[0].mxu0
  %v5216 = vpop.f32.mrb[0].mxu0
  %v5217 = vpop.f32.mrb[0].mxu0
  %5218 = vdwg.mxu0
  %5219 = vmatprep.subr.bf16.mxu0 %v4822
  %5220 = vmatpush1.bf16.xpose.msra.mxu0 %v4821
  %5221 = vmatprep.subr.bf16.mxu0 0
  %5222 = vmatpush1.bf16.xpose.msra.mxu0 0
  %5223 = vmatprep.subr.bf16.mxu0 0
  %5224 = vmatpush1.bf16.xpose.msra.mxu0 0
  %5225 = vmatprep.subr.bf16.mxu0 0
  %5226 = vmatpush1.bf16.xpose.msra.mxu0 0
  %5227 = vmatprep.subr.bf16.mxu0 0
  %5228 = vmatpush1.bf16.xpose.msra.mxu0 0
  %5229 = vmatprep.subr.bf16.mxu0 0
  %5230 = vmatpush1.bf16.xpose.msra.mxu0 0
  %5231 = vmatprep.subr.bf16.mxu0 0
  %5232 = vmatpush1.bf16.xpose.msra.mxu0 0
  %5233 = vmatprep.subr.bf16.mxu0 0
  %5234 = vmatpush1.bf16.xpose.msra.mxu0 0
  %5235 = vmatprep.subr.bf16.mxu0 0
  %5236 = vmatpush1.bf16.xpose.msra.mxu0 0
  %5237 = vmatprep.subr.bf16.mxu0 0
  %5238 = vmatpush1.bf16.xpose.msra.mxu0 0
  %5239 = vmatprep.subr.bf16.mxu0 0
  %5240 = vmatpush1.bf16.xpose.msra.mxu0 0
  %5241 = vmatprep.subr.bf16.mxu0 0
  %5242 = vmatpush1.bf16.xpose.msra.mxu0 0
  %5243 = vmatprep.subr.bf16.mxu0 0
  %5244 = vmatpush1.bf16.xpose.msra.mxu0 0
  %5245 = vmatprep.subr.bf16.mxu0 0
  %5246 = vmatpush1.bf16.xpose.msra.mxu0 0
  %5247 = vmatprep.subr.bf16.mxu0 0
  %5248 = vmatpush1.bf16.xpose.msra.mxu0 0
  %5249 = vmatprep.subr.bf16.mxu0 0
  %5250 = vmatpush1.bf16.xpose.msra.mxu0 0
  %5251 = vmatprep.mubr.bf16.mxu0 %v4738
  %5252 = vmatmul.mubr.bf16.gmra.mrb[0].mxu0 %v4737
  %v5253 = vpop.f32.mrb[0].mxu0
  %v5254 = vadd.f32 %v5214, %v5253
  %v5255 = vpop.f32.mrb[0].mxu0
  %v5256 = vpop.f32.mrb[0].mxu0
  %v5257 = vpop.f32.mrb[0].mxu0
  %5258 = vdwg.mxu0
  %5259 = vmatprep.subr.bf16.mxu0 %v4824
  %5260 = vmatpush1.bf16.xpose.msra.mxu0 %v4823
  %5261 = vmatprep.subr.bf16.mxu0 0
  %5262 = vmatpush1.bf16.xpose.msra.mxu0 0
  %5263 = vmatprep.subr.bf16.mxu0 0
  %5264 = vmatpush1.bf16.xpose.msra.mxu0 0
  %5265 = vmatprep.subr.bf16.mxu0 0
  %5266 = vmatpush1.bf16.xpose.msra.mxu0 0
  %5267 = vmatprep.subr.bf16.mxu0 0
  %5268 = vmatpush1.bf16.xpose.msra.mxu0 0
  %5269 = vmatprep.subr.bf16.mxu0 0
  %5270 = vmatpush1.bf16.xpose.msra.mxu0 0
  %5271 = vmatprep.subr.bf16.mxu0 0
  %5272 = vmatpush1.bf16.xpose.msra.mxu0 0
  %5273 = vmatprep.subr.bf16.mxu0 0
  %5274 = vmatpush1.bf16.xpose.msra.mxu0 0
  %5275 = vmatprep.subr.bf16.mxu0 0
  %5276 = vmatpush1.bf16.xpose.msra.mxu0 0
  %5277 = vmatprep.subr.bf16.mxu0 0
  %5278 = vmatpush1.bf16.xpose.msra.mxu0 0
  %5279 = vmatprep.subr.bf16.mxu0 0
  %5280 = vmatpush1.bf16.xpose.msra.mxu0 0
  %5281 = vmatprep.subr.bf16.mxu0 0
  %5282 = vmatpush1.bf16.xpose.msra.mxu0 0
  %5283 = vmatprep.subr.bf16.mxu0 0
  %5284 = vmatpush1.bf16.xpose.msra.mxu0 0
  %5285 = vmatprep.subr.bf16.mxu0 0
  %5286 = vmatpush1.bf16.xpose.msra.mxu0 0
  %5287 = vmatprep.subr.bf16.mxu0 0
  %5288 = vmatpush1.bf16.xpose.msra.mxu0 0
  %5289 = vmatprep.subr.bf16.mxu0 0
  %5290 = vmatpush1.bf16.xpose.msra.mxu0 0
  %5291 = vmatprep.mubr.bf16.mxu0 %v4740
  %5292 = vmatmul.mubr.bf16.gmra.mrb[0].mxu0 %v4739
  %v5293 = vpop.f32.mrb[0].mxu0
  %v5294 = vadd.f32 %v5254, %v5293
  %v5295 = vpop.f32.mrb[0].mxu0
  %v5296 = vpop.f32.mrb[0].mxu0
  %v5297 = vpop.f32.mrb[0].mxu0
  %5298 = vdwg.mxu0
  %5299 = vmatprep.subr.bf16.mxu0 %v4826
  %5300 = vmatpush1.bf16.xpose.msra.mxu0 %v4825
  %5301 = vmatprep.subr.bf16.mxu0 0
  %5302 = vmatpush1.bf16.xpose.msra.mxu0 0
  %5303 = vmatprep.subr.bf16.mxu0 0
  %5304 = vmatpush1.bf16.xpose.msra.mxu0 0
  %5305 = vmatprep.subr.bf16.mxu0 0
  %5306 = vmatpush1.bf16.xpose.msra.mxu0 0
  %5307 = vmatprep.subr.bf16.mxu0 0
  %5308 = vmatpush1.bf16.xpose.msra.mxu0 0
  %5309 = vmatprep.subr.bf16.mxu0 0
  %5310 = vmatpush1.bf16.xpose.msra.mxu0 0
  %5311 = vmatprep.subr.bf16.mxu0 0
  %5312 = vmatpush1.bf16.xpose.msra.mxu0 0
  %5313 = vmatprep.subr.bf16.mxu0 0
  %5314 = vmatpush1.bf16.xpose.msra.mxu0 0
  %5315 = vmatprep.subr.bf16.mxu0 0
  %5316 = vmatpush1.bf16.xpose.msra.mxu0 0
  %5317 = vmatprep.subr.bf16.mxu0 0
  %5318 = vmatpush1.bf16.xpose.msra.mxu0 0
  %5319 = vmatprep.subr.bf16.mxu0 0
  %5320 = vmatpush1.bf16.xpose.msra.mxu0 0
  %5321 = vmatprep.subr.bf16.mxu0 0
  %5322 = vmatpush1.bf16.xpose.msra.mxu0 0
  %5323 = vmatprep.subr.bf16.mxu0 0
  %5324 = vmatpush1.bf16.xpose.msra.mxu0 0
  %5325 = vmatprep.subr.bf16.mxu0 0
  %5326 = vmatpush1.bf16.xpose.msra.mxu0 0
  %5327 = vmatprep.subr.bf16.mxu0 0
  %5328 = vmatpush1.bf16.xpose.msra.mxu0 0
  %5329 = vmatprep.subr.bf16.mxu0 0
  %5330 = vmatpush1.bf16.xpose.msra.mxu0 0
  %5331 = vmatprep.mubr.bf16.mxu0 %v4742
  %5332 = vmatmul.mubr.bf16.gmra.mrb[0].mxu0 %v4741
  %v5333 = vpop.f32.mrb[0].mxu0
  %v5334 = vadd.f32 %v5294, %v5333
  %v5335 = vpop.f32.mrb[0].mxu0
  %v5336 = vpop.f32.mrb[0].mxu0
  %v5337 = vpop.f32.mrb[0].mxu0
  %5338 = vdwg.mxu0
  %5339 = vmatprep.subr.bf16.mxu0 %v4828
  %5340 = vmatpush1.bf16.xpose.msra.mxu0 %v4827
  %5341 = vmatprep.subr.bf16.mxu0 0
  %5342 = vmatpush1.bf16.xpose.msra.mxu0 0
  %5343 = vmatprep.subr.bf16.mxu0 0
  %5344 = vmatpush1.bf16.xpose.msra.mxu0 0
  %5345 = vmatprep.subr.bf16.mxu0 0
  %5346 = vmatpush1.bf16.xpose.msra.mxu0 0
  %5347 = vmatprep.subr.bf16.mxu0 0
  %5348 = vmatpush1.bf16.xpose.msra.mxu0 0
  %5349 = vmatprep.subr.bf16.mxu0 0
  %5350 = vmatpush1.bf16.xpose.msra.mxu0 0
  %5351 = vmatprep.subr.bf16.mxu0 0
  %5352 = vmatpush1.bf16.xpose.msra.mxu0 0
  %5353 = vmatprep.subr.bf16.mxu0 0
  %5354 = vmatpush1.bf16.xpose.msra.mxu0 0
  %5355 = vmatprep.subr.bf16.mxu0 0
  %5356 = vmatpush1.bf16.xpose.msra.mxu0 0
  %5357 = vmatprep.subr.bf16.mxu0 0
  %5358 = vmatpush1.bf16.xpose.msra.mxu0 0
  %5359 = vmatprep.subr.bf16.mxu0 0
  %5360 = vmatpush1.bf16.xpose.msra.mxu0 0
  %5361 = vmatprep.subr.bf16.mxu0 0
  %5362 = vmatpush1.bf16.xpose.msra.mxu0 0
  %5363 = vmatprep.subr.bf16.mxu0 0
  %5364 = vmatpush1.bf16.xpose.msra.mxu0 0
  %5365 = vmatprep.subr.bf16.mxu0 0
  %5366 = vmatpush1.bf16.xpose.msra.mxu0 0
  %5367 = vmatprep.subr.bf16.mxu0 0
  %5368 = vmatpush1.bf16.xpose.msra.mxu0 0
  %5369 = vmatprep.subr.bf16.mxu0 0
  %5370 = vmatpush1.bf16.xpose.msra.mxu0 0
  %5371 = vmatprep.mubr.bf16.mxu0 %v4744
  %5372 = vmatmul.mubr.bf16.gmra.mrb[0].mxu0 %v4743
  %v5373 = vpop.f32.mrb[0].mxu0
  %v5374 = vadd.f32 %v5334, %v5373
  %v5375 = vpop.f32.mrb[0].mxu0
  %v5376 = vpop.f32.mrb[0].mxu0
  %v5377 = vpop.f32.mrb[0].mxu0
  %5378 = vdwg.mxu0
  %5379 = vmatprep.subr.bf16.mxu0 %v4830
  %5380 = vmatpush1.bf16.xpose.msra.mxu0 %v4829
  %5381 = vmatprep.subr.bf16.mxu0 0
  %5382 = vmatpush1.bf16.xpose.msra.mxu0 0
  %5383 = vmatprep.subr.bf16.mxu0 0
  %5384 = vmatpush1.bf16.xpose.msra.mxu0 0
  %5385 = vmatprep.subr.bf16.mxu0 0
  %5386 = vmatpush1.bf16.xpose.msra.mxu0 0
  %5387 = vmatprep.subr.bf16.mxu0 0
  %5388 = vmatpush1.bf16.xpose.msra.mxu0 0
  %5389 = vmatprep.subr.bf16.mxu0 0
  %5390 = vmatpush1.bf16.xpose.msra.mxu0 0
  %5391 = vmatprep.subr.bf16.mxu0 0
  %5392 = vmatpush1.bf16.xpose.msra.mxu0 0
  %5393 = vmatprep.subr.bf16.mxu0 0
  %5394 = vmatpush1.bf16.xpose.msra.mxu0 0
  %5395 = vmatprep.subr.bf16.mxu0 0
  %5396 = vmatpush1.bf16.xpose.msra.mxu0 0
  %5397 = vmatprep.subr.bf16.mxu0 0
  %5398 = vmatpush1.bf16.xpose.msra.mxu0 0
  %5399 = vmatprep.subr.bf16.mxu0 0
  %5400 = vmatpush1.bf16.xpose.msra.mxu0 0
  %5401 = vmatprep.subr.bf16.mxu0 0
  %5402 = vmatpush1.bf16.xpose.msra.mxu0 0
  %5403 = vmatprep.subr.bf16.mxu0 0
  %5404 = vmatpush1.bf16.xpose.msra.mxu0 0
  %5405 = vmatprep.subr.bf16.mxu0 0
  %5406 = vmatpush1.bf16.xpose.msra.mxu0 0
  %5407 = vmatprep.subr.bf16.mxu0 0
  %5408 = vmatpush1.bf16.xpose.msra.mxu0 0
  %5409 = vmatprep.subr.bf16.mxu0 0
  %5410 = vmatpush1.bf16.xpose.msra.mxu0 0
  %5411 = vmatprep.mubr.bf16.mxu0 %v4746
  %5412 = vmatmul.mubr.bf16.gmra.mrb[0].mxu0 %v4745
  %v5413 = vpop.f32.mrb[0].mxu0
  %v5414 = vadd.f32 %v5374, %v5413
  %v5415 = vpop.f32.mrb[0].mxu0
  %v5416 = vpop.f32.mrb[0].mxu0
  %v5417 = vpop.f32.mrb[0].mxu0
  %5418 = vdwg.mxu0
  %v5419 = vadd.f32 %v4686, %v5414
  %v5420 = vld [vmem:[#allocation2 + $0x2a0] sm:$0xff]
  %v5421 = vld [vmem:[#allocation2 + $0x2a8] sm:$0xff]
  %v5422 = vld [vmem:[#allocation2 + $0x2b0] sm:$0xff]
  %v5423 = vld [vmem:[#allocation2 + $0x2b8] sm:$0xff]
  %v5424 = vld [vmem:[#allocation2 + $0x2c0] sm:$0xff]
  %v5425 = vld [vmem:[#allocation2 + $0x2c8] sm:$0xff]
  %v5426 = vld [vmem:[#allocation2 + $0x2d0] sm:$0xff]
  %v5427 = vld [vmem:[#allocation2 + $0x2d8] sm:$0xff]
  %v5428 = vld [vmem:[#allocation2 + $0x2e0] sm:$0xff]
  %v5429 = vld [vmem:[#allocation2 + $0x2e8] sm:$0xff]
  %v5430 = vld [vmem:[#allocation2 + $0x2f0] sm:$0xff]
  %v5431 = vld [vmem:[#allocation2 + $0x2f8] sm:$0xff]
  %v5432 = vld [vmem:[#allocation2 + $0x300] sm:$0xff]
  %v5433 = vld [vmem:[#allocation2 + $0x308] sm:$0xff]
  %v5434 = vld [vmem:[#allocation2 + $0x310] sm:$0xff]
  %v5435 = vld [vmem:[#allocation2 + $0x318] sm:$0xff]
  %v5436 = vld [vmem:[#allocation2 + $0x320] sm:$0xff]
  %v5437 = vld [vmem:[#allocation2 + $0x328] sm:$0xff]
  %v5438 = vld [vmem:[#allocation2 + $0x330] sm:$0xff]
  %v5439 = vld [vmem:[#allocation2 + $0x338] sm:$0xff]
  %v5440 = vld [vmem:[#allocation2 + $0x340] sm:$0xff]
  %v5441 = vld [vmem:[#allocation2 + $0x348] sm:$0xff]
  %v5442 = vld [vmem:[#allocation2 + $0x350] sm:$0xff]
  %v5443 = vld [vmem:[#allocation2 + $0x358] sm:$0xff]
  %v5444 = vld [vmem:[#allocation2 + $0x360] sm:$0xff]
  %v5445 = vld [vmem:[#allocation2 + $0x368] sm:$0xff]
  %v5446 = vld [vmem:[#allocation2 + $0x370] sm:$0xff]
  %v5447 = vld [vmem:[#allocation2 + $0x378] sm:$0xff]
  %v5448 = vpack.c.bf16 %v5420, %v5420
  %v5449 = vpack.c.bf16 %v5421, %v5421
  %v5450 = vpack.c.bf16 %v5422, %v5422
  %v5451 = vpack.c.bf16 %v5423, %v5423
  %v5452 = vpack.c.bf16 %v5424, %v5424
  %v5453 = vpack.c.bf16 %v5425, %v5425
  %v5454 = vpack.c.bf16 %v5426, %v5426
  %v5455 = vpack.c.bf16 %v5427, %v5427
  %v5456 = vpack.c.bf16 %v5428, %v5428
  %v5457 = vpack.c.bf16 %v5429, %v5429
  %v5458 = vpack.c.bf16 %v5430, %v5430
  %v5459 = vpack.c.bf16 %v5431, %v5431
  %v5460 = vpack.c.bf16 %v5432, %v5432
  %v5461 = vpack.c.bf16 %v5433, %v5433
  %v5462 = vpack.c.bf16 %v5434, %v5434
  %v5463 = vpack.c.bf16 %v5435, %v5435
  %v5464 = vpack.c.bf16 %v5436, %v5436
  %v5465 = vpack.c.bf16 %v5437, %v5437
  %v5466 = vpack.c.bf16 %v5438, %v5438
  %v5467 = vpack.c.bf16 %v5439, %v5439
  %v5468 = vpack.c.bf16 %v5440, %v5440
  %v5469 = vpack.c.bf16 %v5441, %v5441
  %v5470 = vpack.c.bf16 %v5442, %v5442
  %v5471 = vpack.c.bf16 %v5443, %v5443
  %v5472 = vpack.c.bf16 %v5444, %v5444
  %v5473 = vpack.c.bf16 %v5445, %v5445
  %v5474 = vpack.c.bf16 %v5446, %v5446
  %v5475 = vpack.c.bf16 %v5447, %v5447
  %v5476 = vld [vmem:[%s2 + $0x150] sm:$0xff]
  %v5477 = vld [vmem:[%s2 + $0x158] sm:$0xff]
  %v5478 = vld [vmem:[%s2 + $0x160] sm:$0xff]
  %v5479 = vld [vmem:[%s2 + $0x168] sm:$0xff]
  %v5480 = vld [vmem:[%s2 + $0x170] sm:$0xff]
  %v5481 = vld [vmem:[%s2 + $0x178] sm:$0xff]
  %v5482 = vld [vmem:[%s2 + $0x180] sm:$0xff]
  %v5483 = vld [vmem:[%s2 + $0x188] sm:$0xff]
  %v5484 = vld [vmem:[%s2 + $0x190] sm:$0xff]
  %v5485 = vld [vmem:[%s2 + $0x198] sm:$0xff]
  %v5486 = vld [vmem:[%s2 + $0x1a0] sm:$0xff]
  %v5487 = vld [vmem:[%s2 + $0x1a8] sm:$0xff]
  %v5488 = vld [vmem:[%s2 + $0x1b0] sm:$0xff]
  %v5489 = vld [vmem:[%s2 + $0x1b8] sm:$0xff]
  %v5504 = vunpack.c.l.b16 %v5476
  %v5505 = vunpack.c.h.b16 %v5476
  %v5506 = vunpack.c.l.b16 %v5477
  %v5507 = vunpack.c.h.b16 %v5477
  %v5508 = vunpack.c.l.b16 %v5478
  %v5509 = vunpack.c.h.b16 %v5478
  %v5510 = vunpack.c.l.b16 %v5479
  %v5511 = vunpack.c.h.b16 %v5479
  %v5512 = vunpack.c.l.b16 %v5480
  %v5513 = vunpack.c.h.b16 %v5480
  %v5514 = vunpack.c.l.b16 %v5481
  %v5515 = vunpack.c.h.b16 %v5481
  %v5516 = vunpack.c.l.b16 %v5482
  %v5517 = vunpack.c.h.b16 %v5482
  %v5518 = vunpack.c.l.b16 %v5483
  %v5519 = vunpack.c.h.b16 %v5483
  %v5520 = vunpack.c.l.b16 %v5484
  %v5521 = vunpack.c.h.b16 %v5484
  %v5522 = vunpack.c.l.b16 %v5485
  %v5523 = vunpack.c.h.b16 %v5485
  %v5524 = vunpack.c.l.b16 %v5486
  %v5525 = vunpack.c.h.b16 %v5486
  %v5526 = vunpack.c.l.b16 %v5487
  %v5527 = vunpack.c.h.b16 %v5487
  %v5528 = vunpack.c.l.b16 %v5488
  %v5529 = vunpack.c.h.b16 %v5488
  %v5530 = vunpack.c.l.b16 %v5489
  %v5531 = vunpack.c.h.b16 %v5489
  %v5532 = vpack.c.b16 %v5504, %v5504
  %v5533 = vpack.c.b16 %v5505, %v5505
  %v5534 = vpack.c.b16 %v5506, %v5506
  %v5535 = vpack.c.b16 %v5507, %v5507
  %v5536 = vpack.c.b16 %v5508, %v5508
  %v5537 = vpack.c.b16 %v5509, %v5509
  %v5538 = vpack.c.b16 %v5510, %v5510
  %v5539 = vpack.c.b16 %v5511, %v5511
  %v5540 = vpack.c.b16 %v5512, %v5512
  %v5541 = vpack.c.b16 %v5513, %v5513
  %v5542 = vpack.c.b16 %v5514, %v5514
  %v5543 = vpack.c.b16 %v5515, %v5515
  %v5544 = vpack.c.b16 %v5516, %v5516
  %v5545 = vpack.c.b16 %v5517, %v5517
  %v5546 = vpack.c.b16 %v5518, %v5518
  %v5547 = vpack.c.b16 %v5519, %v5519
  %v5548 = vpack.c.b16 %v5520, %v5520
  %v5549 = vpack.c.b16 %v5521, %v5521
  %v5550 = vpack.c.b16 %v5522, %v5522
  %v5551 = vpack.c.b16 %v5523, %v5523
  %v5552 = vpack.c.b16 %v5524, %v5524
  %v5553 = vpack.c.b16 %v5525, %v5525
  %v5554 = vpack.c.b16 %v5526, %v5526
  %v5555 = vpack.c.b16 %v5527, %v5527
  %v5556 = vpack.c.b16 %v5528, %v5528
  %v5557 = vpack.c.b16 %v5529, %v5529
  %v5558 = vpack.c.b16 %v5530, %v5530
  %v5559 = vpack.c.b16 %v5531, %v5531
  %5588 = vmatprep.subr.bf16.mxu0 %v5533
  %5589 = vmatpush1.bf16.xpose.msra.mxu0 %v5532
  %5590 = vmatprep.subr.bf16.mxu0 0
  %5591 = vmatpush1.bf16.xpose.msra.mxu0 0
  %5592 = vmatprep.subr.bf16.mxu0 0
  %5593 = vmatpush1.bf16.xpose.msra.mxu0 0
  %5594 = vmatprep.subr.bf16.mxu0 0
  %5595 = vmatpush1.bf16.xpose.msra.mxu0 0
  %5596 = vmatprep.subr.bf16.mxu0 0
  %5597 = vmatpush1.bf16.xpose.msra.mxu0 0
  %5598 = vmatprep.subr.bf16.mxu0 0
  %5599 = vmatpush1.bf16.xpose.msra.mxu0 0
  %5600 = vmatprep.subr.bf16.mxu0 0
  %5601 = vmatpush1.bf16.xpose.msra.mxu0 0
  %5602 = vmatprep.subr.bf16.mxu0 0
  %5603 = vmatpush1.bf16.xpose.msra.mxu0 0
  %5604 = vmatprep.subr.bf16.mxu0 0
  %5605 = vmatpush1.bf16.xpose.msra.mxu0 0
  %5606 = vmatprep.subr.bf16.mxu0 0
  %5607 = vmatpush1.bf16.xpose.msra.mxu0 0
  %5608 = vmatprep.subr.bf16.mxu0 0
  %5609 = vmatpush1.bf16.xpose.msra.mxu0 0
  %5610 = vmatprep.subr.bf16.mxu0 0
  %5611 = vmatpush1.bf16.xpose.msra.mxu0 0
  %5612 = vmatprep.subr.bf16.mxu0 0
  %5613 = vmatpush1.bf16.xpose.msra.mxu0 0
  %5614 = vmatprep.subr.bf16.mxu0 0
  %5615 = vmatpush1.bf16.xpose.msra.mxu0 0
  %5616 = vmatprep.subr.bf16.mxu0 0
  %5617 = vmatpush1.bf16.xpose.msra.mxu0 0
  %5618 = vmatprep.subr.bf16.mxu0 0
  %5619 = vmatpush1.bf16.xpose.msra.mxu0 0
  %5620 = vmatprep.mubr.bf16.mxu0 %v5449
  %5621 = vmatmul.mubr.bf16.gmra.mrb[0].mxu0 %v5448
  %v5622 = vpop.f32.mrb[0].mxu0
  %v5623 = vadd.f32 0.0, %v5622
  %v5624 = vpop.f32.mrb[0].mxu0
  %v5625 = vpop.f32.mrb[0].mxu0
  %v5626 = vpop.f32.mrb[0].mxu0
  %5627 = vdwg.mxu0
  %5628 = vmatprep.subr.bf16.mxu0 %v5535
  %5629 = vmatpush1.bf16.xpose.msra.mxu0 %v5534
  %5630 = vmatprep.subr.bf16.mxu0 0
  %5631 = vmatpush1.bf16.xpose.msra.mxu0 0
  %5632 = vmatprep.subr.bf16.mxu0 0
  %5633 = vmatpush1.bf16.xpose.msra.mxu0 0
  %5634 = vmatprep.subr.bf16.mxu0 0
  %5635 = vmatpush1.bf16.xpose.msra.mxu0 0
  %5636 = vmatprep.subr.bf16.mxu0 0
  %5637 = vmatpush1.bf16.xpose.msra.mxu0 0
  %5638 = vmatprep.subr.bf16.mxu0 0
  %5639 = vmatpush1.bf16.xpose.msra.mxu0 0
  %5640 = vmatprep.subr.bf16.mxu0 0
  %5641 = vmatpush1.bf16.xpose.msra.mxu0 0
  %5642 = vmatprep.subr.bf16.mxu0 0
  %5643 = vmatpush1.bf16.xpose.msra.mxu0 0
  %5644 = vmatprep.subr.bf16.mxu0 0
  %5645 = vmatpush1.bf16.xpose.msra.mxu0 0
  %5646 = vmatprep.subr.bf16.mxu0 0
  %5647 = vmatpush1.bf16.xpose.msra.mxu0 0
  %5648 = vmatprep.subr.bf16.mxu0 0
  %5649 = vmatpush1.bf16.xpose.msra.mxu0 0
  %5650 = vmatprep.subr.bf16.mxu0 0
  %5651 = vmatpush1.bf16.xpose.msra.mxu0 0
  %5652 = vmatprep.subr.bf16.mxu0 0
  %5653 = vmatpush1.bf16.xpose.msra.mxu0 0
  %5654 = vmatprep.subr.bf16.mxu0 0
  %5655 = vmatpush1.bf16.xpose.msra.mxu0 0
  %5656 = vmatprep.subr.bf16.mxu0 0
  %5657 = vmatpush1.bf16.xpose.msra.mxu0 0
  %5658 = vmatprep.subr.bf16.mxu0 0
  %5659 = vmatpush1.bf16.xpose.msra.mxu0 0
  %5660 = vmatprep.mubr.bf16.mxu0 %v5451
  %5661 = vmatmul.mubr.bf16.gmra.mrb[0].mxu0 %v5450
  %v5662 = vpop.f32.mrb[0].mxu0
  %v5663 = vadd.f32 %v5623, %v5662
  %v5664 = vpop.f32.mrb[0].mxu0
  %v5665 = vpop.f32.mrb[0].mxu0
  %v5666 = vpop.f32.mrb[0].mxu0
  %5667 = vdwg.mxu0
  %5668 = vmatprep.subr.bf16.mxu0 %v5537
  %5669 = vmatpush1.bf16.xpose.msra.mxu0 %v5536
  %5670 = vmatprep.subr.bf16.mxu0 0
  %5671 = vmatpush1.bf16.xpose.msra.mxu0 0
  %5672 = vmatprep.subr.bf16.mxu0 0
  %5673 = vmatpush1.bf16.xpose.msra.mxu0 0
  %5674 = vmatprep.subr.bf16.mxu0 0
  %5675 = vmatpush1.bf16.xpose.msra.mxu0 0
  %5676 = vmatprep.subr.bf16.mxu0 0
  %5677 = vmatpush1.bf16.xpose.msra.mxu0 0
  %5678 = vmatprep.subr.bf16.mxu0 0
  %5679 = vmatpush1.bf16.xpose.msra.mxu0 0
  %5680 = vmatprep.subr.bf16.mxu0 0
  %5681 = vmatpush1.bf16.xpose.msra.mxu0 0
  %5682 = vmatprep.subr.bf16.mxu0 0
  %5683 = vmatpush1.bf16.xpose.msra.mxu0 0
  %5684 = vmatprep.subr.bf16.mxu0 0
  %5685 = vmatpush1.bf16.xpose.msra.mxu0 0
  %5686 = vmatprep.subr.bf16.mxu0 0
  %5687 = vmatpush1.bf16.xpose.msra.mxu0 0
  %5688 = vmatprep.subr.bf16.mxu0 0
  %5689 = vmatpush1.bf16.xpose.msra.mxu0 0
  %5690 = vmatprep.subr.bf16.mxu0 0
  %5691 = vmatpush1.bf16.xpose.msra.mxu0 0
  %5692 = vmatprep.subr.bf16.mxu0 0
  %5693 = vmatpush1.bf16.xpose.msra.mxu0 0
  %5694 = vmatprep.subr.bf16.mxu0 0
  %5695 = vmatpush1.bf16.xpose.msra.mxu0 0
  %5696 = vmatprep.subr.bf16.mxu0 0
  %5697 = vmatpush1.bf16.xpose.msra.mxu0 0
  %5698 = vmatprep.subr.bf16.mxu0 0
  %5699 = vmatpush1.bf16.xpose.msra.mxu0 0
  %5700 = vmatprep.mubr.bf16.mxu0 %v5453
  %5701 = vmatmul.mubr.bf16.gmra.mrb[0].mxu0 %v5452
  %v5702 = vpop.f32.mrb[0].mxu0
  %v5703 = vadd.f32 %v5663, %v5702
  %v5704 = vpop.f32.mrb[0].mxu0
  %v5705 = vpop.f32.mrb[0].mxu0
  %v5706 = vpop.f32.mrb[0].mxu0
  %5707 = vdwg.mxu0
  %5708 = vmatprep.subr.bf16.mxu0 %v5539
  %5709 = vmatpush1.bf16.xpose.msra.mxu0 %v5538
  %5710 = vmatprep.subr.bf16.mxu0 0
  %5711 = vmatpush1.bf16.xpose.msra.mxu0 0
  %5712 = vmatprep.subr.bf16.mxu0 0
  %5713 = vmatpush1.bf16.xpose.msra.mxu0 0
  %5714 = vmatprep.subr.bf16.mxu0 0
  %5715 = vmatpush1.bf16.xpose.msra.mxu0 0
  %5716 = vmatprep.subr.bf16.mxu0 0
  %5717 = vmatpush1.bf16.xpose.msra.mxu0 0
  %5718 = vmatprep.subr.bf16.mxu0 0
  %5719 = vmatpush1.bf16.xpose.msra.mxu0 0
  %5720 = vmatprep.subr.bf16.mxu0 0
  %5721 = vmatpush1.bf16.xpose.msra.mxu0 0
  %5722 = vmatprep.subr.bf16.mxu0 0
  %5723 = vmatpush1.bf16.xpose.msra.mxu0 0
  %5724 = vmatprep.subr.bf16.mxu0 0
  %5725 = vmatpush1.bf16.xpose.msra.mxu0 0
  %5726 = vmatprep.subr.bf16.mxu0 0
  %5727 = vmatpush1.bf16.xpose.msra.mxu0 0
  %5728 = vmatprep.subr.bf16.mxu0 0
  %5729 = vmatpush1.bf16.xpose.msra.mxu0 0
  %5730 = vmatprep.subr.bf16.mxu0 0
  %5731 = vmatpush1.bf16.xpose.msra.mxu0 0
  %5732 = vmatprep.subr.bf16.mxu0 0
  %5733 = vmatpush1.bf16.xpose.msra.mxu0 0
  %5734 = vmatprep.subr.bf16.mxu0 0
  %5735 = vmatpush1.bf16.xpose.msra.mxu0 0
  %5736 = vmatprep.subr.bf16.mxu0 0
  %5737 = vmatpush1.bf16.xpose.msra.mxu0 0
  %5738 = vmatprep.subr.bf16.mxu0 0
  %5739 = vmatpush1.bf16.xpose.msra.mxu0 0
  %5740 = vmatprep.mubr.bf16.mxu0 %v5455
  %5741 = vmatmul.mubr.bf16.gmra.mrb[0].mxu0 %v5454
  %v5742 = vpop.f32.mrb[0].mxu0
  %v5743 = vadd.f32 %v5703, %v5742
  %v5744 = vpop.f32.mrb[0].mxu0
  %v5745 = vpop.f32.mrb[0].mxu0
  %v5746 = vpop.f32.mrb[0].mxu0
  %5747 = vdwg.mxu0
  %5748 = vmatprep.subr.bf16.mxu0 %v5541
  %5749 = vmatpush1.bf16.xpose.msra.mxu0 %v5540
  %5750 = vmatprep.subr.bf16.mxu0 0
  %5751 = vmatpush1.bf16.xpose.msra.mxu0 0
  %5752 = vmatprep.subr.bf16.mxu0 0
  %5753 = vmatpush1.bf16.xpose.msra.mxu0 0
  %5754 = vmatprep.subr.bf16.mxu0 0
  %5755 = vmatpush1.bf16.xpose.msra.mxu0 0
  %5756 = vmatprep.subr.bf16.mxu0 0
  %5757 = vmatpush1.bf16.xpose.msra.mxu0 0
  %5758 = vmatprep.subr.bf16.mxu0 0
  %5759 = vmatpush1.bf16.xpose.msra.mxu0 0
  %5760 = vmatprep.subr.bf16.mxu0 0
  %5761 = vmatpush1.bf16.xpose.msra.mxu0 0
  %5762 = vmatprep.subr.bf16.mxu0 0
  %5763 = vmatpush1.bf16.xpose.msra.mxu0 0
  %5764 = vmatprep.subr.bf16.mxu0 0
  %5765 = vmatpush1.bf16.xpose.msra.mxu0 0
  %5766 = vmatprep.subr.bf16.mxu0 0
  %5767 = vmatpush1.bf16.xpose.msra.mxu0 0
  %5768 = vmatprep.subr.bf16.mxu0 0
  %5769 = vmatpush1.bf16.xpose.msra.mxu0 0
  %5770 = vmatprep.subr.bf16.mxu0 0
  %5771 = vmatpush1.bf16.xpose.msra.mxu0 0
  %5772 = vmatprep.subr.bf16.mxu0 0
  %5773 = vmatpush1.bf16.xpose.msra.mxu0 0
  %5774 = vmatprep.subr.bf16.mxu0 0
  %5775 = vmatpush1.bf16.xpose.msra.mxu0 0
  %5776 = vmatprep.subr.bf16.mxu0 0
  %5777 = vmatpush1.bf16.xpose.msra.mxu0 0
  %5778 = vmatprep.subr.bf16.mxu0 0
  %5779 = vmatpush1.bf16.xpose.msra.mxu0 0
  %5780 = vmatprep.mubr.bf16.mxu0 %v5457
  %5781 = vmatmul.mubr.bf16.gmra.mrb[0].mxu0 %v5456
  %v5782 = vpop.f32.mrb[0].mxu0
  %v5783 = vadd.f32 %v5743, %v5782
  %v5784 = vpop.f32.mrb[0].mxu0
  %v5785 = vpop.f32.mrb[0].mxu0
  %v5786 = vpop.f32.mrb[0].mxu0
  %5787 = vdwg.mxu0
  %5788 = vmatprep.subr.bf16.mxu0 %v5543
  %5789 = vmatpush1.bf16.xpose.msra.mxu0 %v5542
  %5790 = vmatprep.subr.bf16.mxu0 0
  %5791 = vmatpush1.bf16.xpose.msra.mxu0 0
  %5792 = vmatprep.subr.bf16.mxu0 0
  %5793 = vmatpush1.bf16.xpose.msra.mxu0 0
  %5794 = vmatprep.subr.bf16.mxu0 0
  %5795 = vmatpush1.bf16.xpose.msra.mxu0 0
  %5796 = vmatprep.subr.bf16.mxu0 0
  %5797 = vmatpush1.bf16.xpose.msra.mxu0 0
  %5798 = vmatprep.subr.bf16.mxu0 0
  %5799 = vmatpush1.bf16.xpose.msra.mxu0 0
  %5800 = vmatprep.subr.bf16.mxu0 0
  %5801 = vmatpush1.bf16.xpose.msra.mxu0 0
  %5802 = vmatprep.subr.bf16.mxu0 0
  %5803 = vmatpush1.bf16.xpose.msra.mxu0 0
  %5804 = vmatprep.subr.bf16.mxu0 0
  %5805 = vmatpush1.bf16.xpose.msra.mxu0 0
  %5806 = vmatprep.subr.bf16.mxu0 0
  %5807 = vmatpush1.bf16.xpose.msra.mxu0 0
  %5808 = vmatprep.subr.bf16.mxu0 0
  %5809 = vmatpush1.bf16.xpose.msra.mxu0 0
  %5810 = vmatprep.subr.bf16.mxu0 0
  %5811 = vmatpush1.bf16.xpose.msra.mxu0 0
  %5812 = vmatprep.subr.bf16.mxu0 0
  %5813 = vmatpush1.bf16.xpose.msra.mxu0 0
  %5814 = vmatprep.subr.bf16.mxu0 0
  %5815 = vmatpush1.bf16.xpose.msra.mxu0 0
  %5816 = vmatprep.subr.bf16.mxu0 0
  %5817 = vmatpush1.bf16.xpose.msra.mxu0 0
  %5818 = vmatprep.subr.bf16.mxu0 0
  %5819 = vmatpush1.bf16.xpose.msra.mxu0 0
  %5820 = vmatprep.mubr.bf16.mxu0 %v5459
  %5821 = vmatmul.mubr.bf16.gmra.mrb[0].mxu0 %v5458
  %v5822 = vpop.f32.mrb[0].mxu0
  %v5823 = vadd.f32 %v5783, %v5822
  %v5824 = vpop.f32.mrb[0].mxu0
  %v5825 = vpop.f32.mrb[0].mxu0
  %v5826 = vpop.f32.mrb[0].mxu0
  %5827 = vdwg.mxu0
  %5828 = vmatprep.subr.bf16.mxu0 %v5545
  %5829 = vmatpush1.bf16.xpose.msra.mxu0 %v5544
  %5830 = vmatprep.subr.bf16.mxu0 0
  %5831 = vmatpush1.bf16.xpose.msra.mxu0 0
  %5832 = vmatprep.subr.bf16.mxu0 0
  %5833 = vmatpush1.bf16.xpose.msra.mxu0 0
  %5834 = vmatprep.subr.bf16.mxu0 0
  %5835 = vmatpush1.bf16.xpose.msra.mxu0 0
  %5836 = vmatprep.subr.bf16.mxu0 0
  %5837 = vmatpush1.bf16.xpose.msra.mxu0 0
  %5838 = vmatprep.subr.bf16.mxu0 0
  %5839 = vmatpush1.bf16.xpose.msra.mxu0 0
  %5840 = vmatprep.subr.bf16.mxu0 0
  %5841 = vmatpush1.bf16.xpose.msra.mxu0 0
  %5842 = vmatprep.subr.bf16.mxu0 0
  %5843 = vmatpush1.bf16.xpose.msra.mxu0 0
  %5844 = vmatprep.subr.bf16.mxu0 0
  %5845 = vmatpush1.bf16.xpose.msra.mxu0 0
  %5846 = vmatprep.subr.bf16.mxu0 0
  %5847 = vmatpush1.bf16.xpose.msra.mxu0 0
  %5848 = vmatprep.subr.bf16.mxu0 0
  %5849 = vmatpush1.bf16.xpose.msra.mxu0 0
  %5850 = vmatprep.subr.bf16.mxu0 0
  %5851 = vmatpush1.bf16.xpose.msra.mxu0 0
  %5852 = vmatprep.subr.bf16.mxu0 0
  %5853 = vmatpush1.bf16.xpose.msra.mxu0 0
  %5854 = vmatprep.subr.bf16.mxu0 0
  %5855 = vmatpush1.bf16.xpose.msra.mxu0 0
  %5856 = vmatprep.subr.bf16.mxu0 0
  %5857 = vmatpush1.bf16.xpose.msra.mxu0 0
  %5858 = vmatprep.subr.bf16.mxu0 0
  %5859 = vmatpush1.bf16.xpose.msra.mxu0 0
  %5860 = vmatprep.mubr.bf16.mxu0 %v5461
  %5861 = vmatmul.mubr.bf16.gmra.mrb[0].mxu0 %v5460
  %v5862 = vpop.f32.mrb[0].mxu0
  %v5863 = vadd.f32 %v5823, %v5862
  %v5864 = vpop.f32.mrb[0].mxu0
  %v5865 = vpop.f32.mrb[0].mxu0
  %v5866 = vpop.f32.mrb[0].mxu0
  %5867 = vdwg.mxu0
  %5868 = vmatprep.subr.bf16.mxu0 %v5547
  %5869 = vmatpush1.bf16.xpose.msra.mxu0 %v5546
  %5870 = vmatprep.subr.bf16.mxu0 0
  %5871 = vmatpush1.bf16.xpose.msra.mxu0 0
  %5872 = vmatprep.subr.bf16.mxu0 0
  %5873 = vmatpush1.bf16.xpose.msra.mxu0 0
  %5874 = vmatprep.subr.bf16.mxu0 0
  %5875 = vmatpush1.bf16.xpose.msra.mxu0 0
  %5876 = vmatprep.subr.bf16.mxu0 0
  %5877 = vmatpush1.bf16.xpose.msra.mxu0 0
  %5878 = vmatprep.subr.bf16.mxu0 0
  %5879 = vmatpush1.bf16.xpose.msra.mxu0 0
  %5880 = vmatprep.subr.bf16.mxu0 0
  %5881 = vmatpush1.bf16.xpose.msra.mxu0 0
  %5882 = vmatprep.subr.bf16.mxu0 0
  %5883 = vmatpush1.bf16.xpose.msra.mxu0 0
  %5884 = vmatprep.subr.bf16.mxu0 0
  %5885 = vmatpush1.bf16.xpose.msra.mxu0 0
  %5886 = vmatprep.subr.bf16.mxu0 0
  %5887 = vmatpush1.bf16.xpose.msra.mxu0 0
  %5888 = vmatprep.subr.bf16.mxu0 0
  %5889 = vmatpush1.bf16.xpose.msra.mxu0 0
  %5890 = vmatprep.subr.bf16.mxu0 0
  %5891 = vmatpush1.bf16.xpose.msra.mxu0 0
  %5892 = vmatprep.subr.bf16.mxu0 0
  %5893 = vmatpush1.bf16.xpose.msra.mxu0 0
  %5894 = vmatprep.subr.bf16.mxu0 0
  %5895 = vmatpush1.bf16.xpose.msra.mxu0 0
  %5896 = vmatprep.subr.bf16.mxu0 0
  %5897 = vmatpush1.bf16.xpose.msra.mxu0 0
  %5898 = vmatprep.subr.bf16.mxu0 0
  %5899 = vmatpush1.bf16.xpose.msra.mxu0 0
  %5900 = vmatprep.mubr.bf16.mxu0 %v5463
  %5901 = vmatmul.mubr.bf16.gmra.mrb[0].mxu0 %v5462
  %v5902 = vpop.f32.mrb[0].mxu0
  %v5903 = vadd.f32 %v5863, %v5902
  %v5904 = vpop.f32.mrb[0].mxu0
  %v5905 = vpop.f32.mrb[0].mxu0
  %v5906 = vpop.f32.mrb[0].mxu0
  %5907 = vdwg.mxu0
  %5908 = vmatprep.subr.bf16.mxu0 %v5549
  %5909 = vmatpush1.bf16.xpose.msra.mxu0 %v5548
  %5910 = vmatprep.subr.bf16.mxu0 0
  %5911 = vmatpush1.bf16.xpose.msra.mxu0 0
  %5912 = vmatprep.subr.bf16.mxu0 0
  %5913 = vmatpush1.bf16.xpose.msra.mxu0 0
  %5914 = vmatprep.subr.bf16.mxu0 0
  %5915 = vmatpush1.bf16.xpose.msra.mxu0 0
  %5916 = vmatprep.subr.bf16.mxu0 0
  %5917 = vmatpush1.bf16.xpose.msra.mxu0 0
  %5918 = vmatprep.subr.bf16.mxu0 0
  %5919 = vmatpush1.bf16.xpose.msra.mxu0 0
  %5920 = vmatprep.subr.bf16.mxu0 0
  %5921 = vmatpush1.bf16.xpose.msra.mxu0 0
  %5922 = vmatprep.subr.bf16.mxu0 0
  %5923 = vmatpush1.bf16.xpose.msra.mxu0 0
  %5924 = vmatprep.subr.bf16.mxu0 0
  %5925 = vmatpush1.bf16.xpose.msra.mxu0 0
  %5926 = vmatprep.subr.bf16.mxu0 0
  %5927 = vmatpush1.bf16.xpose.msra.mxu0 0
  %5928 = vmatprep.subr.bf16.mxu0 0
  %5929 = vmatpush1.bf16.xpose.msra.mxu0 0
  %5930 = vmatprep.subr.bf16.mxu0 0
  %5931 = vmatpush1.bf16.xpose.msra.mxu0 0
  %5932 = vmatprep.subr.bf16.mxu0 0
  %5933 = vmatpush1.bf16.xpose.msra.mxu0 0
  %5934 = vmatprep.subr.bf16.mxu0 0
  %5935 = vmatpush1.bf16.xpose.msra.mxu0 0
  %5936 = vmatprep.subr.bf16.mxu0 0
  %5937 = vmatpush1.bf16.xpose.msra.mxu0 0
  %5938 = vmatprep.subr.bf16.mxu0 0
  %5939 = vmatpush1.bf16.xpose.msra.mxu0 0
  %5940 = vmatprep.mubr.bf16.mxu0 %v5465
  %5941 = vmatmul.mubr.bf16.gmra.mrb[0].mxu0 %v5464
  %v5942 = vpop.f32.mrb[0].mxu0
  %v5943 = vadd.f32 %v5903, %v5942
  %v5944 = vpop.f32.mrb[0].mxu0
  %v5945 = vpop.f32.mrb[0].mxu0
  %v5946 = vpop.f32.mrb[0].mxu0
  %5947 = vdwg.mxu0
  %5948 = vmatprep.subr.bf16.mxu0 %v5551
  %5949 = vmatpush1.bf16.xpose.msra.mxu0 %v5550
  %5950 = vmatprep.subr.bf16.mxu0 0
  %5951 = vmatpush1.bf16.xpose.msra.mxu0 0
  %5952 = vmatprep.subr.bf16.mxu0 0
  %5953 = vmatpush1.bf16.xpose.msra.mxu0 0
  %5954 = vmatprep.subr.bf16.mxu0 0
  %5955 = vmatpush1.bf16.xpose.msra.mxu0 0
  %5956 = vmatprep.subr.bf16.mxu0 0
  %5957 = vmatpush1.bf16.xpose.msra.mxu0 0
  %5958 = vmatprep.subr.bf16.mxu0 0
  %5959 = vmatpush1.bf16.xpose.msra.mxu0 0
  %5960 = vmatprep.subr.bf16.mxu0 0
  %5961 = vmatpush1.bf16.xpose.msra.mxu0 0
  %5962 = vmatprep.subr.bf16.mxu0 0
  %5963 = vmatpush1.bf16.xpose.msra.mxu0 0
  %5964 = vmatprep.subr.bf16.mxu0 0
  %5965 = vmatpush1.bf16.xpose.msra.mxu0 0
  %5966 = vmatprep.subr.bf16.mxu0 0
  %5967 = vmatpush1.bf16.xpose.msra.mxu0 0
  %5968 = vmatprep.subr.bf16.mxu0 0
  %5969 = vmatpush1.bf16.xpose.msra.mxu0 0
  %5970 = vmatprep.subr.bf16.mxu0 0
  %5971 = vmatpush1.bf16.xpose.msra.mxu0 0
  %5972 = vmatprep.subr.bf16.mxu0 0
  %5973 = vmatpush1.bf16.xpose.msra.mxu0 0
  %5974 = vmatprep.subr.bf16.mxu0 0
  %5975 = vmatpush1.bf16.xpose.msra.mxu0 0
  %5976 = vmatprep.subr.bf16.mxu0 0
  %5977 = vmatpush1.bf16.xpose.msra.mxu0 0
  %5978 = vmatprep.subr.bf16.mxu0 0
  %5979 = vmatpush1.bf16.xpose.msra.mxu0 0
  %5980 = vmatprep.mubr.bf16.mxu0 %v5467
  %5981 = vmatmul.mubr.bf16.gmra.mrb[0].mxu0 %v5466
  %v5982 = vpop.f32.mrb[0].mxu0
  %v5983 = vadd.f32 %v5943, %v5982
  %v5984 = vpop.f32.mrb[0].mxu0
  %v5985 = vpop.f32.mrb[0].mxu0
  %v5986 = vpop.f32.mrb[0].mxu0
  %5987 = vdwg.mxu0
  %5988 = vmatprep.subr.bf16.mxu0 %v5553
  %5989 = vmatpush1.bf16.xpose.msra.mxu0 %v5552
  %5990 = vmatprep.subr.bf16.mxu0 0
  %5991 = vmatpush1.bf16.xpose.msra.mxu0 0
  %5992 = vmatprep.subr.bf16.mxu0 0
  %5993 = vmatpush1.bf16.xpose.msra.mxu0 0
  %5994 = vmatprep.subr.bf16.mxu0 0
  %5995 = vmatpush1.bf16.xpose.msra.mxu0 0
  %5996 = vmatprep.subr.bf16.mxu0 0
  %5997 = vmatpush1.bf16.xpose.msra.mxu0 0
  %5998 = vmatprep.subr.bf16.mxu0 0
  %5999 = vmatpush1.bf16.xpose.msra.mxu0 0
  %6000 = vmatprep.subr.bf16.mxu0 0
  %6001 = vmatpush1.bf16.xpose.msra.mxu0 0
  %6002 = vmatprep.subr.bf16.mxu0 0
  %6003 = vmatpush1.bf16.xpose.msra.mxu0 0
  %6004 = vmatprep.subr.bf16.mxu0 0
  %6005 = vmatpush1.bf16.xpose.msra.mxu0 0
  %6006 = vmatprep.subr.bf16.mxu0 0
  %6007 = vmatpush1.bf16.xpose.msra.mxu0 0
  %6008 = vmatprep.subr.bf16.mxu0 0
  %6009 = vmatpush1.bf16.xpose.msra.mxu0 0
  %6010 = vmatprep.subr.bf16.mxu0 0
  %6011 = vmatpush1.bf16.xpose.msra.mxu0 0
  %6012 = vmatprep.subr.bf16.mxu0 0
  %6013 = vmatpush1.bf16.xpose.msra.mxu0 0
  %6014 = vmatprep.subr.bf16.mxu0 0
  %6015 = vmatpush1.bf16.xpose.msra.mxu0 0
  %6016 = vmatprep.subr.bf16.mxu0 0
  %6017 = vmatpush1.bf16.xpose.msra.mxu0 0
  %6018 = vmatprep.subr.bf16.mxu0 0
  %6019 = vmatpush1.bf16.xpose.msra.mxu0 0
  %6020 = vmatprep.mubr.bf16.mxu0 %v5469
  %6021 = vmatmul.mubr.bf16.gmra.mrb[0].mxu0 %v5468
  %v6022 = vpop.f32.mrb[0].mxu0
  %v6023 = vadd.f32 %v5983, %v6022
  %v6024 = vpop.f32.mrb[0].mxu0
  %v6025 = vpop.f32.mrb[0].mxu0
  %v6026 = vpop.f32.mrb[0].mxu0
  %6027 = vdwg.mxu0
  %6028 = vmatprep.subr.bf16.mxu0 %v5555
  %6029 = vmatpush1.bf16.xpose.msra.mxu0 %v5554
  %6030 = vmatprep.subr.bf16.mxu0 0
  %6031 = vmatpush1.bf16.xpose.msra.mxu0 0
  %6032 = vmatprep.subr.bf16.mxu0 0
  %6033 = vmatpush1.bf16.xpose.msra.mxu0 0
  %6034 = vmatprep.subr.bf16.mxu0 0
  %6035 = vmatpush1.bf16.xpose.msra.mxu0 0
  %6036 = vmatprep.subr.bf16.mxu0 0
  %6037 = vmatpush1.bf16.xpose.msra.mxu0 0
  %6038 = vmatprep.subr.bf16.mxu0 0
  %6039 = vmatpush1.bf16.xpose.msra.mxu0 0
  %6040 = vmatprep.subr.bf16.mxu0 0
  %6041 = vmatpush1.bf16.xpose.msra.mxu0 0
  %6042 = vmatprep.subr.bf16.mxu0 0
  %6043 = vmatpush1.bf16.xpose.msra.mxu0 0
  %6044 = vmatprep.subr.bf16.mxu0 0
  %6045 = vmatpush1.bf16.xpose.msra.mxu0 0
  %6046 = vmatprep.subr.bf16.mxu0 0
  %6047 = vmatpush1.bf16.xpose.msra.mxu0 0
  %6048 = vmatprep.subr.bf16.mxu0 0
  %6049 = vmatpush1.bf16.xpose.msra.mxu0 0
  %6050 = vmatprep.subr.bf16.mxu0 0
  %6051 = vmatpush1.bf16.xpose.msra.mxu0 0
  %6052 = vmatprep.subr.bf16.mxu0 0
  %6053 = vmatpush1.bf16.xpose.msra.mxu0 0
  %6054 = vmatprep.subr.bf16.mxu0 0
  %6055 = vmatpush1.bf16.xpose.msra.mxu0 0
  %6056 = vmatprep.subr.bf16.mxu0 0
  %6057 = vmatpush1.bf16.xpose.msra.mxu0 0
  %6058 = vmatprep.subr.bf16.mxu0 0
  %6059 = vmatpush1.bf16.xpose.msra.mxu0 0
  %6060 = vmatprep.mubr.bf16.mxu0 %v5471
  %6061 = vmatmul.mubr.bf16.gmra.mrb[0].mxu0 %v5470
  %v6062 = vpop.f32.mrb[0].mxu0
  %v6063 = vadd.f32 %v6023, %v6062
  %v6064 = vpop.f32.mrb[0].mxu0
  %v6065 = vpop.f32.mrb[0].mxu0
  %v6066 = vpop.f32.mrb[0].mxu0
  %6067 = vdwg.mxu0
  %6068 = vmatprep.subr.bf16.mxu0 %v5557
  %6069 = vmatpush1.bf16.xpose.msra.mxu0 %v5556
  %6070 = vmatprep.subr.bf16.mxu0 0
  %6071 = vmatpush1.bf16.xpose.msra.mxu0 0
  %6072 = vmatprep.subr.bf16.mxu0 0
  %6073 = vmatpush1.bf16.xpose.msra.mxu0 0
  %6074 = vmatprep.subr.bf16.mxu0 0
  %6075 = vmatpush1.bf16.xpose.msra.mxu0 0
  %6076 = vmatprep.subr.bf16.mxu0 0
  %6077 = vmatpush1.bf16.xpose.msra.mxu0 0
  %6078 = vmatprep.subr.bf16.mxu0 0
  %6079 = vmatpush1.bf16.xpose.msra.mxu0 0
  %6080 = vmatprep.subr.bf16.mxu0 0
  %6081 = vmatpush1.bf16.xpose.msra.mxu0 0
  %6082 = vmatprep.subr.bf16.mxu0 0
  %6083 = vmatpush1.bf16.xpose.msra.mxu0 0
  %6084 = vmatprep.subr.bf16.mxu0 0
  %6085 = vmatpush1.bf16.xpose.msra.mxu0 0
  %6086 = vmatprep.subr.bf16.mxu0 0
  %6087 = vmatpush1.bf16.xpose.msra.mxu0 0
  %6088 = vmatprep.subr.bf16.mxu0 0
  %6089 = vmatpush1.bf16.xpose.msra.mxu0 0
  %6090 = vmatprep.subr.bf16.mxu0 0
  %6091 = vmatpush1.bf16.xpose.msra.mxu0 0
  %6092 = vmatprep.subr.bf16.mxu0 0
  %6093 = vmatpush1.bf16.xpose.msra.mxu0 0
  %6094 = vmatprep.subr.bf16.mxu0 0
  %6095 = vmatpush1.bf16.xpose.msra.mxu0 0
  %6096 = vmatprep.subr.bf16.mxu0 0
  %6097 = vmatpush1.bf16.xpose.msra.mxu0 0
  %6098 = vmatprep.subr.bf16.mxu0 0
  %6099 = vmatpush1.bf16.xpose.msra.mxu0 0
  %6100 = vmatprep.mubr.bf16.mxu0 %v5473
  %6101 = vmatmul.mubr.bf16.gmra.mrb[0].mxu0 %v5472
  %v6102 = vpop.f32.mrb[0].mxu0
  %v6103 = vadd.f32 %v6063, %v6102
  %v6104 = vpop.f32.mrb[0].mxu0
  %v6105 = vpop.f32.mrb[0].mxu0
  %v6106 = vpop.f32.mrb[0].mxu0
  %6107 = vdwg.mxu0
  %6108 = vmatprep.subr.bf16.mxu0 %v5559
  %6109 = vmatpush1.bf16.xpose.msra.mxu0 %v5558
  %6110 = vmatprep.subr.bf16.mxu0 0
  %6111 = vmatpush1.bf16.xpose.msra.mxu0 0
  %6112 = vmatprep.subr.bf16.mxu0 0
  %6113 = vmatpush1.bf16.xpose.msra.mxu0 0
  %6114 = vmatprep.subr.bf16.mxu0 0
  %6115 = vmatpush1.bf16.xpose.msra.mxu0 0
  %6116 = vmatprep.subr.bf16.mxu0 0
  %6117 = vmatpush1.bf16.xpose.msra.mxu0 0
  %6118 = vmatprep.subr.bf16.mxu0 0
  %6119 = vmatpush1.bf16.xpose.msra.mxu0 0
  %6120 = vmatprep.subr.bf16.mxu0 0
  %6121 = vmatpush1.bf16.xpose.msra.mxu0 0
  %6122 = vmatprep.subr.bf16.mxu0 0
  %6123 = vmatpush1.bf16.xpose.msra.mxu0 0
  %6124 = vmatprep.subr.bf16.mxu0 0
  %6125 = vmatpush1.bf16.xpose.msra.mxu0 0
  %6126 = vmatprep.subr.bf16.mxu0 0
  %6127 = vmatpush1.bf16.xpose.msra.mxu0 0
  %6128 = vmatprep.subr.bf16.mxu0 0
  %6129 = vmatpush1.bf16.xpose.msra.mxu0 0
  %6130 = vmatprep.subr.bf16.mxu0 0
  %6131 = vmatpush1.bf16.xpose.msra.mxu0 0
  %6132 = vmatprep.subr.bf16.mxu0 0
  %6133 = vmatpush1.bf16.xpose.msra.mxu0 0
  %6134 = vmatprep.subr.bf16.mxu0 0
  %6135 = vmatpush1.bf16.xpose.msra.mxu0 0
  %6136 = vmatprep.subr.bf16.mxu0 0
  %6137 = vmatpush1.bf16.xpose.msra.mxu0 0
  %6138 = vmatprep.subr.bf16.mxu0 0
  %6139 = vmatpush1.bf16.xpose.msra.mxu0 0
  %6140 = vmatprep.mubr.bf16.mxu0 %v5475
  %6141 = vmatmul.mubr.bf16.gmra.mrb[0].mxu0 %v5474
  %v6142 = vpop.f32.mrb[0].mxu0
  %v6143 = vadd.f32 %v6103, %v6142
  %v6144 = vpop.f32.mrb[0].mxu0
  %v6145 = vpop.f32.mrb[0].mxu0
  %v6146 = vpop.f32.mrb[0].mxu0
  %6147 = vdwg.mxu0
  %v6148 = vadd.f32 %v5419, %v6143
  %v6149 = vld [vmem:[%s3] sm:$0x1]
  %v6151 = vlaneseq
  %v6152 = vshrl.u32 %v6151, 7
  %v6153 = vsub.s32 0, %v6152
  %v6154 = vrot.slane %v6149, %v6153
  %v6156 = vadd.f32 %v6148, %v6154
  %vm6157 = vcmask 64512
  %6158 = vst.msk [vmem:[%s4] sm:$0xff] %vm6157, %v6156
  // Predicated region
  $region18: #{modelnet_forward.1} parent=0 // pred_check
    _
  $region19: #{modelnet_forward.1} parent=0 // pred_check_branch
    %6160 = sbr.rel (0) target = $region21
  $region20: #{modelnet_forward.1} parent=0 // pred_region
    _
  $region21: #{modelnet_forward.1} parent=0 // pred_fallthru
    _
  // Predicated region
  $region22: #{modelnet_forward.1} parent=0 // pred_check
    _
  $region23: #{modelnet_forward.1} parent=0 // pred_check_branch
    %6162 = sbr.rel (0) target = $region25
  $region24: #{modelnet_forward.1} parent=0 // pred_region
    _
  $region25: #{modelnet_forward.1} parent=0 // pred_fallthru
    _

</llo_original>
